<compile_context>
chip_gen: v5e
topology: v5e:2x2
jax: 0.10.0
libtpu: 0.0.40
codegen_flags: <defaults>
</compile_context>

<pallas_src>
import functools

import jax
import jax.numpy as jnp
from jax import lax
from jax.experimental import pallas as pl
from jax.experimental.pallas import tpu as pltpu

COMPUTE_DTYPE = jnp.bfloat16  # MXU operand dtype; accumulation is always f32.


def _fill_im2col(patch_ref, slab, not_left, not_right, W):
    """Write the 9 shifted 3x3 taps of `slab` into patch_ref (H*W, 9*C).

    slab is the flattened image, slab[p] = x[h, w, :] with p = h*W + w.
    Column layout matches w_hwio.reshape(9*C, Cout): k = (kh*3 + kw)*C + ci,
    tap offset (dh, dw) = (kh-1, kw-1) and tap value x[h+dh, w+dw] (zero
    outside the image).  Column (+/-1) shifts are 1-row slice+concat with the
    wrapped positions zeroed by `not_left` / `not_right`; row (+/-W) shifts
    are W-row slice+concat with zero rows (tile aligned when W % 8 == 0).
    All math here is f32.
    """
    HW, C = slab.shape
    zero1 = jnp.zeros((1, C), slab.dtype)
    zeroW = jnp.zeros((W, C), slab.dtype)

    # kw taps: out[p] = slab[p + dw], zeroed at the image's left/right edges.
    taps_w = (
        jnp.where(not_left,                                            # dw = -1
                  jnp.concatenate([zero1, slab[:HW - 1]], axis=0), 0.0),
        slab,                                                          # dw =  0
        jnp.where(not_right,                                           # dw = +1
                  jnp.concatenate([slab[1:], zero1], axis=0), 0.0),
    )
    for kw, t in enumerate(taps_w):
        taps_h = (
            jnp.concatenate([zeroW, t[:HW - W]], axis=0),  # dh = -1 (kh = 0)
            t,                                             # dh =  0 (kh = 1)
            jnp.concatenate([t[W:], zeroW], axis=0),       # dh = +1 (kh = 2)
        )
        for kh, v in enumerate(taps_h):
            k = kh * 3 + kw
            patch_ref[:, k * C:(k + 1) * C] = v


def basic_block_kernel(x_ref, w1_ref, s1_ref, b1_ref, w2_ref, s2_ref, b2_ref,
                       out_ref, patch_ref, *, W):
    # x_ref   : (H*W, C)   flattened NHWC activation for one batch element (f32)
    # w*_ref  : (9*C, C)   im2col-flattened conv weights (bf16)
    # s*/b*   : (1, C)     folded BatchNorm scale / bias (f32)
    # out_ref : (H*W, C)
    # patch_ref: VMEM scratch (H*W, 9*C) f32, reused by both convs
    HW, C = x_ref.shape

    x2d = x_ref[...]                                           # identity path, f32

    # Per-row image-column index -> masks for the w-1 / w+1 taps (built once).
    w_idx = lax.broadcasted_iota(jnp.int32, (HW, 1), 0) % W
    not_left = w_idx != 0
    not_right = w_idx != (W - 1)

    # ---- conv1 as a single (H*W, 9C) x (9C, C) MXU matmul ----
    _fill_im2col(patch_ref, x2d, not_left, not_right, W)
    acc1 = jnp.dot(patch_ref[...].astype(COMPUTE_DTYPE), w1_ref[...],
                   preferred_element_type=jnp.float32)         # (H*W, C) f32

    # ---- bn1 (folded affine) + relu ----
    out1 = jnp.maximum(acc1 * s1_ref[...] + b1_ref[...], 0.0)

    # ---- conv2, same structure (intermediate stays a value) ----
    _fill_im2col(patch_ref, out1, not_left, not_right, W)
    acc2 = jnp.dot(patch_ref[...].astype(COMPUTE_DTYPE), w2_ref[...],
                   preferred_element_type=jnp.float32)

    # ---- bn2 + residual add + relu ----
    out2 = acc2 * s2_ref[...] + b2_ref[...]
    out_ref[...] = jnp.maximum(out2 + x2d, 0.0).astype(out_ref.dtype)


def basic_block_forward_nhwc(x, w1_hwio, s1, b1, w2_hwio, s2, b2):
    """x: (N, H, W, C) float32 NHWC.  Conv weights HWIO, BN scale/bias (C,)."""
    N, H, W, Cin = x.shape
    Cout = w1_hwio.shape[-1]
    assert Cin == Cout, "no downsample: residual requires inplanes == planes"
    HW = H * W

    # Flatten spatial dims outside the kernel (free layout-wise: C stays last).
    x2 = x.reshape(N, HW, Cin)

    # One-time weight repack: HWIO -> (9*Cin, Cout), cast to bf16 for the MXU.
    w1f = jnp.asarray(w1_hwio, jnp.float32).reshape(9 * Cin, Cout).astype(COMPUTE_DTYPE)
    w2f = jnp.asarray(w2_hwio, jnp.float32).reshape(9 * Cout, Cout).astype(COMPUTE_DTYPE)
    s1v = jnp.asarray(s1, jnp.float32).reshape(1, Cout)
    b1v = jnp.asarray(b1, jnp.float32).reshape(1, Cout)
    s2v = jnp.asarray(s2, jnp.float32).reshape(1, Cout)
    b2v = jnp.asarray(b2, jnp.float32).reshape(1, Cout)

    vec_spec = pl.BlockSpec((1, Cout), lambda n: (0, 0))
    cost = pl.CostEstimate(
        flops=4 * N * HW * (9 * Cin) * Cout,             # 2 convs * 2*M*K*N
        transcendentals=0,
        bytes_accessed=2 * N * HW * Cin * 4 + (w1f.size + w2f.size) * 2
        + 4 * Cout * 4,
    )

    out2 = pl.pallas_call(
        functools.partial(basic_block_kernel, W=W),
        out_shape=jax.ShapeDtypeStruct((N, HW, Cout), x.dtype),
        grid_spec=pltpu.PrefetchScalarGridSpec(
            num_scalar_prefetch=0,
            grid=(N,),
            in_specs=[
                pl.BlockSpec((None, HW, Cin), lambda n: (n, 0, 0)),
                pl.BlockSpec((9 * Cin, Cout), lambda n: (0, 0)),
                vec_spec, vec_spec,
                pl.BlockSpec((9 * Cout, Cout), lambda n: (0, 0)),
                vec_spec, vec_spec,
            ],
            out_specs=pl.BlockSpec((None, HW, Cout), lambda n: (n, 0, 0)),
            scratch_shapes=[pltpu.VMEM((HW, 9 * Cin), jnp.float32)],
        ),
        compiler_params=pltpu.CompilerParams(
            dimension_semantics=("parallel",)),   # batch is independent
        cost_estimate=cost,
    )(x2, w1f, s1v, b1v, w2f, s2v, b2v)

    return out2.reshape(N, H, W, Cout)


def basic_block_forward_nchw(x_nchw, w1_hwio, s1, b1, w2_hwio, s2, b2):
    """PyTorch-layout convenience wrapper (adds two layout transposes; prefer
    the NHWC entry point in production so activations never change layout)."""
    x = jnp.transpose(x_nchw, (0, 2, 3, 1))
    out = basic_block_forward_nhwc(x, w1_hwio, s1, b1, w2_hwio, s2, b2)
    return jnp.transpose(out, (0, 3, 1, 2))


def basic_block_ref_nhwc(x, w1, s1, b1, w2, s2, b2):
    """Pure-JAX f32 reference (lax.conv) for correctness checking."""
    dn = lax.conv_dimension_numbers(x.shape, w1.shape, ('NHWC', 'HWIO', 'NHWC'))
    o = lax.conv_general_dilated(x, w1, (1, 1), ((1, 1), (1, 1)),
                                 dimension_numbers=dn)
    o = jnp.maximum(o * s1 + b1, 0.0)
    o = lax.conv_general_dilated(o, w2, (1, 1), ((1, 1), (1, 1)),
                                 dimension_numbers=dn)
    o = jnp.maximum(o * s2 + b2 + x, 0.0)
    return o


def _fold_bn(gamma, beta, mean, var, eps=1e-5):
    scale = gamma / jnp.sqrt(var + eps)
    bias = beta - mean * scale
    return scale, bias


if __name__ == "__main__":
    key = jax.random.PRNGKey(0)
    N, C, H, W = 2, 8, 16, 16     # inplanes = planes = 8, stride = 1, no downsample
    planes = C

    ks = jax.random.split(key, 11)
    x_nchw = jax.random.normal(ks[0], (N, C, H, W), jnp.float32)   # PyTorch layout

    # conv weights: PyTorch OIHW -> HWIO (one-time setup repack)
    w1_oihw = 0.1 * jax.random.normal(ks[1], (planes, C, 3, 3), jnp.float32)
    w2_oihw = 0.1 * jax.random.normal(ks[2], (planes, planes, 3, 3), jnp.float32)
    w1 = jnp.transpose(w1_oihw, (2, 3, 1, 0))
    w2 = jnp.transpose(w2_oihw, (2, 3, 1, 0))

    # BatchNorm params (inference mode), deterministic init
    g1 = 1.0 + 0.1 * jax.random.normal(ks[3], (planes,), jnp.float32)
    be1 = 0.1 * jax.random.normal(ks[4], (planes,), jnp.float32)
    m1 = 0.1 * jax.random.normal(ks[5], (planes,), jnp.float32)
    v1 = jax.random.uniform(ks[6], (planes,), jnp.float32, 0.5, 1.5)
    g2 = 1.0 + 0.1 * jax.random.normal(ks[7], (planes,), jnp.float32)
    be2 = 0.1 * jax.random.normal(ks[8], (planes,), jnp.float32)
    m2 = 0.1 * jax.random.normal(ks[9], (planes,), jnp.float32)
    v2 = jax.random.uniform(ks[10], (planes,), jnp.float32, 0.5, 1.5)

    s1, b1 = _fold_bn(g1, be1, m1, v1)
    s2, b2 = _fold_bn(g2, be2, m2, v2)

    out_nchw = basic_block_forward_nchw(x_nchw, w1, s1, b1, w2, s2, b2)
    out_nchw = jax.block_until_ready(out_nchw)
    assert out_nchw.shape == (N, C, H, W)

    # Reference in NHWC, transposed back to NCHW for comparison.
    x_nhwc = jnp.transpose(x_nchw, (0, 2, 3, 1))
    ref_nchw = jnp.transpose(
        basic_block_ref_nhwc(x_nhwc, w1, s1, b1, w2, s2, b2), (0, 3, 1, 2))

    # Tolerance reflects bf16 MXU operands with f32 accumulation (f32 reference).
    err = jnp.max(jnp.abs(out_nchw - ref_nchw))
    assert jnp.allclose(out_nchw, ref_nchw, atol=5e-2, rtol=5e-2), \
        f"max abs err {err}"

    print("KERNEL_OK")
</pallas_src>

<mosaic_0001>
module attributes {stable_mosaic.version = 11 : i64} {
  func.func @basic_block_kernel(%arg0: i32, %arg1: memref<1x256x8xf32, #tpu.memory_space<vmem>>, %arg2: memref<72x8xbf16, #tpu.memory_space<vmem>>, %arg3: memref<1x8xf32, #tpu.memory_space<vmem>>, %arg4: memref<1x8xf32, #tpu.memory_space<vmem>>, %arg5: memref<72x8xbf16, #tpu.memory_space<vmem>>, %arg6: memref<1x8xf32, #tpu.memory_space<vmem>>, %arg7: memref<1x8xf32, #tpu.memory_space<vmem>>, %arg8: memref<1x256x8xf32, #tpu.memory_space<vmem>>, %arg9: memref<256x72xf32, #tpu.memory_space<vmem>>) attributes {dimension_semantics = [#tpu.dimension_semantics<parallel>], iteration_bounds = array<i64: 2>, scalar_prefetch = 0 : i64, scratch_operands = 1 : i64, tpu.core_type = #tpu.core_type<tc>, window_params = [{transform_indices = @transform_0, window_bounds = array<i64: 1, 256, 8>}, {pipeline_mode = #tpu.pipeline_mode<synchronous>, transform_indices = @transform_1, window_bounds = array<i64: 72, 8>}, {pipeline_mode = #tpu.pipeline_mode<synchronous>, transform_indices = @transform_2, window_bounds = array<i64: 1, 8>}, {pipeline_mode = #tpu.pipeline_mode<synchronous>, transform_indices = @transform_3, window_bounds = array<i64: 1, 8>}, {pipeline_mode = #tpu.pipeline_mode<synchronous>, transform_indices = @transform_4, window_bounds = array<i64: 72, 8>}, {pipeline_mode = #tpu.pipeline_mode<synchronous>, transform_indices = @transform_5, window_bounds = array<i64: 1, 8>}, {pipeline_mode = #tpu.pipeline_mode<synchronous>, transform_indices = @transform_6, window_bounds = array<i64: 1, 8>}, {transform_indices = @transform_7, window_bounds = array<i64: 1, 256, 8>}]} {
    %c0 = arith.constant 0 : index
    %c0_0 = arith.constant 0 : index
    %c0_1 = arith.constant 0 : index
    %0 = vector.load %arg1[%c0, %c0_0, %c0_1] : memref<1x256x8xf32, #tpu.memory_space<vmem>>, vector<1x256x8xf32>
    %1 = vector.shape_cast %0 : vector<1x256x8xf32> to vector<256x8xf32>
    %2 = tpu.iota {dimensions = array<i32: 0>} : vector<256x1xi32>
    %c16_i32 = arith.constant 16 : i32
    %c0_i32 = arith.constant 0 : i32
    %3 = arith.cmpi eq, %c16_i32, %c0_i32 : i32
    %c1_i32 = arith.constant 1 : i32
    %4 = arith.select %3, %c1_i32, %c16_i32 : i32
    %5 = vector.broadcast %4 : i32 to vector<256x1xi32>
    %6 = arith.remsi %2, %5 : vector<256x1xi32>
    %c0_i32_2 = arith.constant 0 : i32
    %7 = vector.broadcast %c0_i32_2 : i32 to vector<256x1xi32>
    %8 = arith.cmpi ne, %6, %7 : vector<256x1xi32>
    %c0_i32_3 = arith.constant 0 : i32
    %9 = vector.broadcast %c0_i32_3 : i32 to vector<256x1xi32>
    %10 = arith.cmpi slt, %6, %9 : vector<256x1xi32>
    %c0_i32_4 = arith.constant 0 : i32
    %11 = arith.cmpi slt, %4, %c0_i32_4 : i32
    %12 = vector.broadcast %11 : i1 to vector<256x1xi1>
    %13 = vector.broadcast %12 : vector<256x1xi1> to vector<256x1xi1>
    %14 = arith.xori %10, %13 : vector<256x1xi1>
    %15 = arith.andi %14, %8 : vector<256x1xi1>
    %16 = vector.broadcast %4 : i32 to vector<256x1xi32>
    %17 = arith.addi %6, %16 : vector<256x1xi32>
    %18 = arith.select %15, %17, %6 : vector<256x1xi1>, vector<256x1xi32>
    %c0_i32_5 = arith.constant 0 : i32
    %19 = vector.broadcast %c0_i32_5 : i32 to vector<256x1xi32>
    %20 = arith.cmpi ne, %18, %19 : vector<256x1xi32>
    %c15_i32 = arith.constant 15 : i32
    %21 = vector.broadcast %c15_i32 : i32 to vector<256x1xi32>
    %22 = arith.cmpi ne, %18, %21 : vector<256x1xi32>
    %cst = arith.constant 0.000000e+00 : f32
    %23 = vector.broadcast %cst : f32 to vector<1x8xf32>
    %cst_6 = arith.constant 0.000000e+00 : f32
    %24 = vector.broadcast %cst_6 : f32 to vector<16x8xf32>
    %25 = vector.extract_strided_slice %1 {offsets = [0, 0], sizes = [255, 8], strides = [1, 1]} : vector<256x8xf32> to vector<255x8xf32>
    %26 = tpu.concatenate %23, %25 in 0 : vector<1x8xf32>, vector<255x8xf32> -> vector<256x8xf32>
    %cst_7 = arith.constant 0.000000e+00 : f32
    %27 = vector.shape_cast %20 : vector<256x1xi1> to vector<256x1xi1>
    %28 = vector.broadcast %27 : vector<256x1xi1> to vector<256x8xi1>
    %29 = vector.broadcast %cst_7 : f32 to vector<256x8xf32>
    %30 = arith.select %28, %26, %29 : vector<256x8xi1>, vector<256x8xf32>
    %31 = vector.extract_strided_slice %1 {offsets = [1, 0], sizes = [255, 8], strides = [1, 1]} : vector<256x8xf32> to vector<255x8xf32>
    %32 = tpu.concatenate %31, %23 in 0 : vector<255x8xf32>, vector<1x8xf32> -> vector<256x8xf32>
    %cst_8 = arith.constant 0.000000e+00 : f32
    %33 = vector.shape_cast %22 : vector<256x1xi1> to vector<256x1xi1>
    %34 = vector.broadcast %33 : vector<256x1xi1> to vector<256x8xi1>
    %35 = vector.broadcast %cst_8 : f32 to vector<256x8xf32>
    %36 = arith.select %34, %32, %35 : vector<256x8xi1>, vector<256x8xf32>
    %37 = vector.extract_strided_slice %30 {offsets = [0, 0], sizes = [240, 8], strides = [1, 1]} : vector<256x8xf32> to vector<240x8xf32>
    %38 = tpu.concatenate %24, %37 in 0 : vector<16x8xf32>, vector<240x8xf32> -> vector<256x8xf32>
    %39 = vector.extract_strided_slice %30 {offsets = [16, 0], sizes = [240, 8], strides = [1, 1]} : vector<256x8xf32> to vector<240x8xf32>
    %40 = tpu.concatenate %39, %24 in 0 : vector<240x8xf32>, vector<16x8xf32> -> vector<256x8xf32>
    %c0_9 = arith.constant 0 : index
    %c0_10 = arith.constant 0 : index
    %41 = vector.load %arg9[%c0_9, %c0_10] : memref<256x72xf32, #tpu.memory_space<vmem>>, vector<256x8xf32>
    tpu.vector_store %arg9[%c0_9, %c0_10], %38 {strides = array<i32>} : memref<256x72xf32, #tpu.memory_space<vmem>>, vector<256x8xf32>,
    %c0_11 = arith.constant 0 : index
    %c24 = arith.constant 24 : index
    %42 = vector.load %arg9[%c0_11, %c24] : memref<256x72xf32, #tpu.memory_space<vmem>>, vector<256x8xf32>
    tpu.vector_store %arg9[%c0_11, %c24], %30 {strides = array<i32>} : memref<256x72xf32, #tpu.memory_space<vmem>>, vector<256x8xf32>,
    %c0_12 = arith.constant 0 : index
    %c48 = arith.constant 48 : index
    %43 = vector.load %arg9[%c0_12, %c48] : memref<256x72xf32, #tpu.memory_space<vmem>>, vector<256x8xf32>
    tpu.vector_store %arg9[%c0_12, %c48], %40 {strides = array<i32>} : memref<256x72xf32, #tpu.memory_space<vmem>>, vector<256x8xf32>,
    %44 = vector.extract_strided_slice %1 {offsets = [0, 0], sizes = [240, 8], strides = [1, 1]} : vector<256x8xf32> to vector<240x8xf32>
    %45 = tpu.concatenate %24, %44 in 0 : vector<16x8xf32>, vector<240x8xf32> -> vector<256x8xf32>
    %46 = vector.extract_strided_slice %1 {offsets = [16, 0], sizes = [240, 8], strides = [1, 1]} : vector<256x8xf32> to vector<240x8xf32>
    %47 = tpu.concatenate %46, %24 in 0 : vector<240x8xf32>, vector<16x8xf32> -> vector<256x8xf32>
    %c0_13 = arith.constant 0 : index
    %c8 = arith.constant 8 : index
    %48 = vector.load %arg9[%c0_13, %c8] : memref<256x72xf32, #tpu.memory_space<vmem>>, vector<256x8xf32>
    tpu.vector_store %arg9[%c0_13, %c8], %45 {strides = array<i32>} : memref<256x72xf32, #tpu.memory_space<vmem>>, vector<256x8xf32>,
    %c0_14 = arith.constant 0 : index
    %c32 = arith.constant 32 : index
    %49 = vector.load %arg9[%c0_14, %c32] : memref<256x72xf32, #tpu.memory_space<vmem>>, vector<256x8xf32>
    tpu.vector_store %arg9[%c0_14, %c32], %1 {strides = array<i32>} : memref<256x72xf32, #tpu.memory_space<vmem>>, vector<256x8xf32>,
    %c0_15 = arith.constant 0 : index
    %c56 = arith.constant 56 : index
    %50 = vector.load %arg9[%c0_15, %c56] : memref<256x72xf32, #tpu.memory_space<vmem>>, vector<256x8xf32>
    tpu.vector_store %arg9[%c0_15, %c56], %47 {strides = array<i32>} : memref<256x72xf32, #tpu.memory_space<vmem>>, vector<256x8xf32>,
    %51 = vector.extract_strided_slice %36 {offsets = [0, 0], sizes = [240, 8], strides = [1, 1]} : vector<256x8xf32> to vector<240x8xf32>
    %52 = tpu.concatenate %24, %51 in 0 : vector<16x8xf32>, vector<240x8xf32> -> vector<256x8xf32>
    %53 = vector.extract_strided_slice %36 {offsets = [16, 0], sizes = [240, 8], strides = [1, 1]} : vector<256x8xf32> to vector<240x8xf32>
    %54 = tpu.concatenate %53, %24 in 0 : vector<240x8xf32>, vector<16x8xf32> -> vector<256x8xf32>
    %c0_16 = arith.constant 0 : index
    %c16 = arith.constant 16 : index
    %55 = vector.load %arg9[%c0_16, %c16] : memref<256x72xf32, #tpu.memory_space<vmem>>, vector<256x8xf32>
    tpu.vector_store %arg9[%c0_16, %c16], %52 {strides = array<i32>} : memref<256x72xf32, #tpu.memory_space<vmem>>, vector<256x8xf32>,
    %c0_17 = arith.constant 0 : index
    %c40 = arith.constant 40 : index
    %56 = vector.load %arg9[%c0_17, %c40] : memref<256x72xf32, #tpu.memory_space<vmem>>, vector<256x8xf32>
    tpu.vector_store %arg9[%c0_17, %c40], %36 {strides = array<i32>} : memref<256x72xf32, #tpu.memory_space<vmem>>, vector<256x8xf32>,
    %c0_18 = arith.constant 0 : index
    %c64 = arith.constant 64 : index
    %57 = vector.load %arg9[%c0_18, %c64] : memref<256x72xf32, #tpu.memory_space<vmem>>, vector<256x8xf32>
    tpu.vector_store %arg9[%c0_18, %c64], %54 {strides = array<i32>} : memref<256x72xf32, #tpu.memory_space<vmem>>, vector<256x8xf32>,
    %c0_19 = arith.constant 0 : index
    %c0_20 = arith.constant 0 : index
    %58 = vector.load %arg9[%c0_19, %c0_20] : memref<256x72xf32, #tpu.memory_space<vmem>>, vector<256x72xf32>
    %59 = arith.truncf %58 : vector<256x72xf32> to vector<256x72xbf16>
    %c0_21 = arith.constant 0 : index
    %c0_22 = arith.constant 0 : index
    %60 = vector.load %arg2[%c0_21, %c0_22] : memref<72x8xbf16, #tpu.memory_space<vmem>>, vector<72x8xbf16>
    %cst_23 = arith.constant dense<0.000000e+00> : vector<256x8xf32>
    %61 = tpu.matmul %59, %60, %cst_23 {dimension_numbers = #tpu.dot_dimension_numbers<[1], [0], [0], [1], [0, 0, 1, 1], [], []>} : vector<256x72xbf16>, vector<72x8xbf16>, vector<256x8xf32> -> vector<256x8xf32>
    %c0_24 = arith.constant 0 : index
    %c0_25 = arith.constant 0 : index
    %62 = vector.load %arg3[%c0_24, %c0_25] : memref<1x8xf32, #tpu.memory_space<vmem>>, vector<1x8xf32>
    %63 = vector.broadcast %62 : vector<1x8xf32> to vector<256x8xf32>
    %64 = arith.mulf %61, %63 : vector<256x8xf32>
    %c0_26 = arith.constant 0 : index
    %c0_27 = arith.constant 0 : index
    %65 = vector.load %arg4[%c0_26, %c0_27] : memref<1x8xf32, #tpu.memory_space<vmem>>, vector<1x8xf32>
    %66 = vector.broadcast %65 : vector<1x8xf32> to vector<256x8xf32>
    %67 = arith.addf %64, %66 : vector<256x8xf32>
    %cst_28 = arith.constant 0.000000e+00 : f32
    %68 = vector.broadcast %cst_28 : f32 to vector<256x8xf32>
    %69 = arith.maximumf %67, %68 : vector<256x8xf32>
    %cst_29 = arith.constant 0.000000e+00 : f32
    %70 = vector.broadcast %cst_29 : f32 to vector<1x8xf32>
    %cst_30 = arith.constant 0.000000e+00 : f32
    %71 = vector.broadcast %cst_30 : f32 to vector<16x8xf32>
    %72 = vector.extract_strided_slice %69 {offsets = [0, 0], sizes = [255, 8], strides = [1, 1]} : vector<256x8xf32> to vector<255x8xf32>
    %73 = tpu.concatenate %70, %72 in 0 : vector<1x8xf32>, vector<255x8xf32> -> vector<256x8xf32>
    %cst_31 = arith.constant 0.000000e+00 : f32
    %74 = vector.shape_cast %20 : vector<256x1xi1> to vector<256x1xi1>
    %75 = vector.broadcast %74 : vector<256x1xi1> to vector<256x8xi1>
    %76 = vector.broadcast %cst_31 : f32 to vector<256x8xf32>
    %77 = arith.select %75, %73, %76 : vector<256x8xi1>, vector<256x8xf32>
    %78 = vector.extract_strided_slice %69 {offsets = [1, 0], sizes = [255, 8], strides = [1, 1]} : vector<256x8xf32> to vector<255x8xf32>
    %79 = tpu.concatenate %78, %70 in 0 : vector<255x8xf32>, vector<1x8xf32> -> vector<256x8xf32>
    %cst_32 = arith.constant 0.000000e+00 : f32
    %80 = vector.shape_cast %22 : vector<256x1xi1> to vector<256x1xi1>
    %81 = vector.broadcast %80 : vector<256x1xi1> to vector<256x8xi1>
    %82 = vector.broadcast %cst_32 : f32 to vector<256x8xf32>
    %83 = arith.select %81, %79, %82 : vector<256x8xi1>, vector<256x8xf32>
    %84 = vector.extract_strided_slice %77 {offsets = [0, 0], sizes = [240, 8], strides = [1, 1]} : vector<256x8xf32> to vector<240x8xf32>
    %85 = tpu.concatenate %71, %84 in 0 : vector<16x8xf32>, vector<240x8xf32> -> vector<256x8xf32>
    %86 = vector.extract_strided_slice %77 {offsets = [16, 0], sizes = [240, 8], strides = [1, 1]} : vector<256x8xf32> to vector<240x8xf32>
    %87 = tpu.concatenate %86, %71 in 0 : vector<240x8xf32>, vector<16x8xf32> -> vector<256x8xf32>
    %c0_33 = arith.constant 0 : index
    %c0_34 = arith.constant 0 : index
    %88 = vector.load %arg9[%c0_33, %c0_34] : memref<256x72xf32, #tpu.memory_space<vmem>>, vector<256x8xf32>
    tpu.vector_store %arg9[%c0_33, %c0_34], %85 {strides = array<i32>} : memref<256x72xf32, #tpu.memory_space<vmem>>, vector<256x8xf32>,
    %c0_35 = arith.constant 0 : index
    %c24_36 = arith.constant 24 : index
    %89 = vector.load %arg9[%c0_35, %c24_36] : memref<256x72xf32, #tpu.memory_space<vmem>>, vector<256x8xf32>
    tpu.vector_store %arg9[%c0_35, %c24_36], %77 {strides = array<i32>} : memref<256x72xf32, #tpu.memory_space<vmem>>, vector<256x8xf32>,
    %c0_37 = arith.constant 0 : index
    %c48_38 = arith.constant 48 : index
    %90 = vector.load %arg9[%c0_37, %c48_38] : memref<256x72xf32, #tpu.memory_space<vmem>>, vector<256x8xf32>
    tpu.vector_store %arg9[%c0_37, %c48_38], %87 {strides = array<i32>} : memref<256x72xf32, #tpu.memory_space<vmem>>, vector<256x8xf32>,
    %91 = vector.extract_strided_slice %69 {offsets = [0, 0], sizes = [240, 8], strides = [1, 1]} : vector<256x8xf32> to vector<240x8xf32>
    %92 = tpu.concatenate %71, %91 in 0 : vector<16x8xf32>, vector<240x8xf32> -> vector<256x8xf32>
    %93 = vector.extract_strided_slice %69 {offsets = [16, 0], sizes = [240, 8], strides = [1, 1]} : vector<256x8xf32> to vector<240x8xf32>
    %94 = tpu.concatenate %93, %71 in 0 : vector<240x8xf32>, vector<16x8xf32> -> vector<256x8xf32>
    %c0_39 = arith.constant 0 : index
    %c8_40 = arith.constant 8 : index
    %95 = vector.load %arg9[%c0_39, %c8_40] : memref<256x72xf32, #tpu.memory_space<vmem>>, vector<256x8xf32>
    tpu.vector_store %arg9[%c0_39, %c8_40], %92 {strides = array<i32>} : memref<256x72xf32, #tpu.memory_space<vmem>>, vector<256x8xf32>,
    %c0_41 = arith.constant 0 : index
    %c32_42 = arith.constant 32 : index
    %96 = vector.load %arg9[%c0_41, %c32_42] : memref<256x72xf32, #tpu.memory_space<vmem>>, vector<256x8xf32>
    tpu.vector_store %arg9[%c0_41, %c32_42], %69 {strides = array<i32>} : memref<256x72xf32, #tpu.memory_space<vmem>>, vector<256x8xf32>,
    %c0_43 = arith.constant 0 : index
    %c56_44 = arith.constant 56 : index
    %97 = vector.load %arg9[%c0_43, %c56_44] : memref<256x72xf32, #tpu.memory_space<vmem>>, vector<256x8xf32>
    tpu.vector_store %arg9[%c0_43, %c56_44], %94 {strides = array<i32>} : memref<256x72xf32, #tpu.memory_space<vmem>>, vector<256x8xf32>,
    %98 = vector.extract_strided_slice %83 {offsets = [0, 0], sizes = [240, 8], strides = [1, 1]} : vector<256x8xf32> to vector<240x8xf32>
    %99 = tpu.concatenate %71, %98 in 0 : vector<16x8xf32>, vector<240x8xf32> -> vector<256x8xf32>
    %100 = vector.extract_strided_slice %83 {offsets = [16, 0], sizes = [240, 8], strides = [1, 1]} : vector<256x8xf32> to vector<240x8xf32>
    %101 = tpu.concatenate %100, %71 in 0 : vector<240x8xf32>, vector<16x8xf32> -> vector<256x8xf32>
    %c0_45 = arith.constant 0 : index
    %c16_46 = arith.constant 16 : index
    %102 = vector.load %arg9[%c0_45, %c16_46] : memref<256x72xf32, #tpu.memory_space<vmem>>, vector<256x8xf32>
    tpu.vector_store %arg9[%c0_45, %c16_46], %99 {strides = array<i32>} : memref<256x72xf32, #tpu.memory_space<vmem>>, vector<256x8xf32>,
    %c0_47 = arith.constant 0 : index
    %c40_48 = arith.constant 40 : index
    %103 = vector.load %arg9[%c0_47, %c40_48] : memref<256x72xf32, #tpu.memory_space<vmem>>, vector<256x8xf32>
    tpu.vector_store %arg9[%c0_47, %c40_48], %83 {strides = array<i32>} : memref<256x72xf32, #tpu.memory_space<vmem>>, vector<256x8xf32>,
    %c0_49 = arith.constant 0 : index
    %c64_50 = arith.constant 64 : index
    %104 = vector.load %arg9[%c0_49, %c64_50] : memref<256x72xf32, #tpu.memory_space<vmem>>, vector<256x8xf32>
    tpu.vector_store %arg9[%c0_49, %c64_50], %101 {strides = array<i32>} : memref<256x72xf32, #tpu.memory_space<vmem>>, vector<256x8xf32>,
    %c0_51 = arith.constant 0 : index
    %c0_52 = arith.constant 0 : index
    %105 = vector.load %arg9[%c0_51, %c0_52] : memref<256x72xf32, #tpu.memory_space<vmem>>, vector<256x72xf32>
    %106 = arith.truncf %105 : vector<256x72xf32> to vector<256x72xbf16>
    %c0_53 = arith.constant 0 : index
    %c0_54 = arith.constant 0 : index
    %107 = vector.load %arg5[%c0_53, %c0_54] : memref<72x8xbf16, #tpu.memory_space<vmem>>, vector<72x8xbf16>
    %cst_55 = arith.constant dense<0.000000e+00> : vector<256x8xf32>
    %108 = tpu.matmul %106, %107, %cst_55 {dimension_numbers = #tpu.dot_dimension_numbers<[1], [0], [0], [1], [0, 0, 1, 1], [], []>} : vector<256x72xbf16>, vector<72x8xbf16>, vector<256x8xf32> -> vector<256x8xf32>
    %c0_56 = arith.constant 0 : index
    %c0_57 = arith.constant 0 : index
    %109 = vector.load %arg6[%c0_56, %c0_57] : memref<1x8xf32, #tpu.memory_space<vmem>>, vector<1x8xf32>
    %110 = vector.broadcast %109 : vector<1x8xf32> to vector<256x8xf32>
    %111 = arith.mulf %108, %110 : vector<256x8xf32>
    %c0_58 = arith.constant 0 : index
    %c0_59 = arith.constant 0 : index
    %112 = vector.load %arg7[%c0_58, %c0_59] : memref<1x8xf32, #tpu.memory_space<vmem>>, vector<1x8xf32>
    %113 = vector.broadcast %112 : vector<1x8xf32> to vector<256x8xf32>
    %114 = arith.addf %111, %113 : vector<256x8xf32>
    %115 = arith.addf %114, %1 : vector<256x8xf32>
    %cst_60 = arith.constant 0.000000e+00 : f32
    %116 = vector.broadcast %cst_60 : f32 to vector<256x8xf32>
    %117 = arith.maximumf %115, %116 : vector<256x8xf32>
    %c0_61 = arith.constant 0 : index
    %c0_62 = arith.constant 0 : index
    %c0_63 = arith.constant 0 : index
    %118 = vector.load %arg8[%c0_61, %c0_62, %c0_63] : memref<1x256x8xf32, #tpu.memory_space<vmem>>, vector<1x256x8xf32>
    %119 = vector.shape_cast %118 : vector<1x256x8xf32> to vector<256x8xf32>
    %120 = vector.shape_cast %117 : vector<256x8xf32> to vector<1x256x8xf32>
    tpu.vector_store %arg8[%c0_61, %c0_62, %c0_63], %120 {strides = array<i32>} : memref<1x256x8xf32, #tpu.memory_space<vmem>>, vector<1x256x8xf32>,
    return
  }
  func.func @transform_0(%arg0: i32) -> (i32, i32, i32) {
    %c0_i32 = arith.constant 0 : i32
    %c0_i32_0 = arith.constant 0 : i32
    %c0_i32_1 = arith.constant 0 : i32
    return %arg0, %c0_i32, %c0_i32_0 : i32, i32, i32
  }
  func.func @transform_1(%arg0: i32) -> (i32, i32) {
    %c0_i32 = arith.constant 0 : i32
    %c0_i32_0 = arith.constant 0 : i32
    %c0_i32_1 = arith.constant 0 : i32
    return %c0_i32, %c0_i32_0 : i32, i32
  }
  func.func @transform_2(%arg0: i32) -> (i32, i32) {
    %c0_i32 = arith.constant 0 : i32
    %c0_i32_0 = arith.constant 0 : i32
    %c0_i32_1 = arith.constant 0 : i32
    return %c0_i32, %c0_i32_0 : i32, i32
  }
  func.func @transform_3(%arg0: i32) -> (i32, i32) {
    %c0_i32 = arith.constant 0 : i32
    %c0_i32_0 = arith.constant 0 : i32
    %c0_i32_1 = arith.constant 0 : i32
    return %c0_i32, %c0_i32_0 : i32, i32
  }
  func.func @transform_4(%arg0: i32) -> (i32, i32) {
    %c0_i32 = arith.constant 0 : i32
    %c0_i32_0 = arith.constant 0 : i32
    %c0_i32_1 = arith.constant 0 : i32
    return %c0_i32, %c0_i32_0 : i32, i32
  }
  func.func @transform_5(%arg0: i32) -> (i32, i32) {
    %c0_i32 = arith.constant 0 : i32
    %c0_i32_0 = arith.constant 0 : i32
    %c0_i32_1 = arith.constant 0 : i32
    return %c0_i32, %c0_i32_0 : i32, i32
  }
  func.func @transform_6(%arg0: i32) -> (i32, i32) {
    %c0_i32 = arith.constant 0 : i32
    %c0_i32_0 = arith.constant 0 : i32
    %c0_i32_1 = arith.constant 0 : i32
    return %c0_i32, %c0_i32_0 : i32, i32
  }
  func.func @transform_7(%arg0: i32) -> (i32, i32, i32) {
    %c0_i32 = arith.constant 0 : i32
    %c0_i32_0 = arith.constant 0 : i32
    %c0_i32_1 = arith.constant 0 : i32
    return %arg0, %c0_i32, %c0_i32_0 : i32, i32, i32
  }
}

</mosaic_0001>

<llo_original>
// kernel: tpu_custom_call.1
$region0: #{tpu_custom_call.1}
  #allocation0 [shape = 'u32[]', space=smem, size = 0x4, offset = 0x4, fixed_abs, tag = 'smem constant byte address 0x4 - core index']
  #allocation1 [shape = 'u32[72,128]{1,0:T(1,128)}', space=vmem, size = 0x9000, scoped, tag = 'internal scratch']
  #allocation2 [shape = 'f32[256,72]{1,0:T(8,128)}', space=vmem, size = 0x20000, scoped, tag = 'scratch operand']
  %s0 = inlined_call_operand.vmem [shape: f32[2,256,8], index: 0, kind: input, shape index: {}]
  %s1 = inlined_call_operand.vmem [shape: bf16[72,8], index: 1, kind: input, shape index: {}]
  %s2 = inlined_call_operand.vmem [shape: f32[1,8], index: 2, kind: input, shape index: {}]
  %s3 = inlined_call_operand.vmem [shape: f32[1,8], index: 3, kind: input, shape index: {}]
  %s4 = inlined_call_operand.vmem [shape: bf16[72,8], index: 4, kind: input, shape index: {}]
  %s5 = inlined_call_operand.vmem [shape: f32[1,8], index: 5, kind: input, shape index: {}]
  %s6 = inlined_call_operand.vmem [shape: f32[1,8], index: 6, kind: input, shape index: {}]
  %s7 = inlined_call_operand.vmem [shape: f32[2,256,8], index: 7, kind: output, shape index: {}]
  %s8 = sld [smem:[#allocation0]]
  $region61: #{tpu_custom_call.1} parent=0
    _
  %s10 = ssub.s32 1, %s8
  %s11 = scalar_select 0, %s10, %s8
  loop: start=0, step=1, limit=4
  $region2: #{tpu_custom_call.1} parent=0 // loop_pre_header
    _
  $region3: #{tpu_custom_call.1} parent=0 // loop_header
    %s13 = sphi 0, %s17
    %p14 = scmp.ge.s32.totalorder %s13, 4
    %s23 = sphi 0, %s25
    %s26 = sphi 0, %s23
    %s27 = sphi 0, %s26
    %s43 = sphi 0, %s27
    %s47 = sphi 0, %s47
    %s49 = sphi 0, %s47
    %s50 = sphi 0, %s49
    %s64 = sphi 0, %s50
    %s68 = sphi 0, %s68
    %s70 = sphi 0, %s68
    %s71 = sphi 0, %s70
    %s85 = sphi 0, %s71
    %s89 = sphi 0, %s89
    %s91 = sphi 0, %s89
    %s92 = sphi 0, %s91
    %s106 = sphi 0, %s92
    %s110 = sphi 0, %s110
    %s112 = sphi 0, %s110
    %s113 = sphi 0, %s112
    %s127 = sphi 0, %s113
    %s131 = sphi 0, %s131
    %s133 = sphi 0, %s131
    %s134 = sphi 0, %s133
    %s148 = sphi 0, %s134
    %s152 = sphi 0, %s152
    %s154 = sphi 0, %s152
    %s155 = sphi 0, %s154
    %s169 = sphi 0, %s155
    %s175 = sphi 0, %s177
    %s178 = sphi 0, %s175
    %s179 = sphi 0, %s178
    %s195 = sphi 0, %s179
  $region4: #{tpu_custom_call.1} parent=0 // loop_header_branch
    %16 = sbr.rel (%p14) target = $region8
  $region5: #{tpu_custom_call.1} parent=0 // loop_body
    %s18 = ssub.s32 %s13, 1
    %s19 = ssub.s32 %s13, 2
    %s20 = sadd.s32 %s13, 1
    %s21 = ssub.s32 %s13, %s20
    %p22 = scmp.eq.s32.totalorder %s21, 0
    %s24 = sadd.s32 %s23, 1
    %s25 = scalar_select %p22, %s23, %s24
    %p28 = pneg %p22
    %p29 = scmp.eq.s32.totalorder %s13, 1
    %p30 = por %p28, %p29
    %p31 = scmp.ne.s32.totalorder %s23, %s26
    %p32 = scmp.eq.s32.totalorder %s13, 0
    %p33 = por %p31, %p32
    %p34 = scmp.ne.s32.totalorder %s23, %s26
    %p35 = scmp.eq.s32.totalorder %s18, 1
    %p36 = por %p34, %p35
    %p37 = scmp.ne.s32.totalorder %s26, %s27
    %p38 = scmp.eq.s32.totalorder %s18, 0
    %p39 = por %p37, %p38
    %p40 = scmp.ne.s32.totalorder %s26, %s27
    %p41 = scmp.eq.s32.totalorder %s19, 1
    %p42 = por %p40, %p41
    %p44 = scmp.ne.s32.totalorder %s27, %s43
    %p45 = scmp.eq.s32.totalorder %s19, 0
    %p46 = por %p44, %p45
    %s48 = sadd.s32 %s47, 1
    %p51 = scmp.eq.s32.totalorder %s13, 1
    %p52 = scmp.ne.s32.totalorder %s47, %s49
    %p53 = scmp.eq.s32.totalorder %s13, 0
    %p54 = por %p52, %p53
    %p55 = scmp.ne.s32.totalorder %s47, %s49
    %p56 = scmp.eq.s32.totalorder %s18, 1
    %p57 = por %p55, %p56
    %p58 = scmp.ne.s32.totalorder %s49, %s50
    %p59 = scmp.eq.s32.totalorder %s18, 0
    %p60 = por %p58, %p59
    %p61 = scmp.ne.s32.totalorder %s49, %s50
    %p62 = scmp.eq.s32.totalorder %s19, 1
    %p63 = por %p61, %p62
    %p65 = scmp.ne.s32.totalorder %s50, %s64
    %p66 = scmp.eq.s32.totalorder %s19, 0
    %p67 = por %p65, %p66
    %s69 = sadd.s32 %s68, 1
    %p72 = scmp.eq.s32.totalorder %s13, 1
    %p73 = scmp.ne.s32.totalorder %s68, %s70
    %p74 = scmp.eq.s32.totalorder %s13, 0
    %p75 = por %p73, %p74
    %p76 = scmp.ne.s32.totalorder %s68, %s70
    %p77 = scmp.eq.s32.totalorder %s18, 1
    %p78 = por %p76, %p77
    %p79 = scmp.ne.s32.totalorder %s70, %s71
    %p80 = scmp.eq.s32.totalorder %s18, 0
    %p81 = por %p79, %p80
    %p82 = scmp.ne.s32.totalorder %s70, %s71
    %p83 = scmp.eq.s32.totalorder %s19, 1
    %p84 = por %p82, %p83
    %p86 = scmp.ne.s32.totalorder %s71, %s85
    %p87 = scmp.eq.s32.totalorder %s19, 0
    %p88 = por %p86, %p87
    %s90 = sadd.s32 %s89, 1
    %p93 = scmp.eq.s32.totalorder %s13, 1
    %p94 = scmp.ne.s32.totalorder %s89, %s91
    %p95 = scmp.eq.s32.totalorder %s13, 0
    %p96 = por %p94, %p95
    %p97 = scmp.ne.s32.totalorder %s89, %s91
    %p98 = scmp.eq.s32.totalorder %s18, 1
    %p99 = por %p97, %p98
    %p100 = scmp.ne.s32.totalorder %s91, %s92
    %p101 = scmp.eq.s32.totalorder %s18, 0
    %p102 = por %p100, %p101
    %p103 = scmp.ne.s32.totalorder %s91, %s92
    %p104 = scmp.eq.s32.totalorder %s19, 1
    %p105 = por %p103, %p104
    %p107 = scmp.ne.s32.totalorder %s92, %s106
    %p108 = scmp.eq.s32.totalorder %s19, 0
    %p109 = por %p107, %p108
    %s111 = sadd.s32 %s110, 1
    %p114 = scmp.eq.s32.totalorder %s13, 1
    %p115 = scmp.ne.s32.totalorder %s110, %s112
    %p116 = scmp.eq.s32.totalorder %s13, 0
    %p117 = por %p115, %p116
    %p118 = scmp.ne.s32.totalorder %s110, %s112
    %p119 = scmp.eq.s32.totalorder %s18, 1
    %p120 = por %p118, %p119
    %p121 = scmp.ne.s32.totalorder %s112, %s113
    %p122 = scmp.eq.s32.totalorder %s18, 0
    %p123 = por %p121, %p122
    %p124 = scmp.ne.s32.totalorder %s112, %s113
    %p125 = scmp.eq.s32.totalorder %s19, 1
    %p126 = por %p124, %p125
    %p128 = scmp.ne.s32.totalorder %s113, %s127
    %p129 = scmp.eq.s32.totalorder %s19, 0
    %p130 = por %p128, %p129
    %s132 = sadd.s32 %s131, 1
    %p135 = scmp.eq.s32.totalorder %s13, 1
    %p136 = scmp.ne.s32.totalorder %s131, %s133
    %p137 = scmp.eq.s32.totalorder %s13, 0
    %p138 = por %p136, %p137
    %p139 = scmp.ne.s32.totalorder %s131, %s133
    %p140 = scmp.eq.s32.totalorder %s18, 1
    %p141 = por %p139, %p140
    %p142 = scmp.ne.s32.totalorder %s133, %s134
    %p143 = scmp.eq.s32.totalorder %s18, 0
    %p144 = por %p142, %p143
    %p145 = scmp.ne.s32.totalorder %s133, %s134
    %p146 = scmp.eq.s32.totalorder %s19, 1
    %p147 = por %p145, %p146
    %p149 = scmp.ne.s32.totalorder %s134, %s148
    %p150 = scmp.eq.s32.totalorder %s19, 0
    %p151 = por %p149, %p150
    %s153 = sadd.s32 %s152, 1
    %p156 = scmp.eq.s32.totalorder %s13, 1
    %p157 = scmp.ne.s32.totalorder %s152, %s154
    %p158 = scmp.eq.s32.totalorder %s13, 0
    %p159 = por %p157, %p158
    %p160 = scmp.ne.s32.totalorder %s152, %s154
    %p161 = scmp.eq.s32.totalorder %s18, 1
    %p162 = por %p160, %p161
    %p163 = scmp.ne.s32.totalorder %s154, %s155
    %p164 = scmp.eq.s32.totalorder %s18, 0
    %p165 = por %p163, %p164
    %p166 = scmp.ne.s32.totalorder %s154, %s155
    %p167 = scmp.eq.s32.totalorder %s19, 1
    %p168 = por %p166, %p167
    %p170 = scmp.ne.s32.totalorder %s155, %s169
    %p171 = scmp.eq.s32.totalorder %s19, 0
    %p172 = por %p170, %p171
    %s173 = ssub.s32 %s13, %s20
    %p174 = scmp.eq.s32.totalorder %s173, 0
    %s176 = sadd.s32 %s175, 1
    %s177 = scalar_select %p174, %s175, %s176
    %p180 = pneg %p174
    %p181 = scmp.eq.s32.totalorder %s13, 1
    %p182 = por %p180, %p181
    %p183 = scmp.ne.s32.totalorder %s175, %s178
    %p184 = scmp.eq.s32.totalorder %s13, 0
    %p185 = por %p183, %p184
    %p186 = scmp.ne.s32.totalorder %s175, %s178
    %p187 = scmp.eq.s32.totalorder %s18, 1
    %p188 = por %p186, %p187
    %p189 = scmp.ne.s32.totalorder %s178, %s179
    %p190 = scmp.eq.s32.totalorder %s18, 0
    %p191 = por %p189, %p190
    %p192 = scmp.ne.s32.totalorder %s178, %s179
    %p193 = scmp.eq.s32.totalorder %s19, 1
    %p194 = por %p192, %p193
    %p196 = scmp.ne.s32.totalorder %s179, %s195
    %p197 = scmp.eq.s32.totalorder %s19, 0
    %p198 = por %p196, %p197
    %p199 = scmp.le.s32.totalorder 1, %s13
    %p200 = scmp.lt.s32.totalorder %s13, 3
    %p201 = pnand %p199, %p200
    %p202 = pneg %p201
    // Predicated region
    $region9: #{tpu_custom_call.1} parent=5 // pred_check
      _
    $region10: #{tpu_custom_call.1} parent=5 // pred_check_branch
      %204 = sbr.rel (%p201) target = $region12
    $region11: #{tpu_custom_call.1} parent=5 // pred_region
      %s205 = ssub.s32 %s13, 1
      // Predicated region
      $region13: #{tpu_custom_call.1} parent=11 // pred_check
        %p206 = pneg %p60
      $region14: #{tpu_custom_call.1} parent=11 // pred_check_branch
        %208 = sbr.rel (%p206) target = $region16
      $region15: #{tpu_custom_call.1} parent=11 // pred_region
        _
      $region16: #{tpu_custom_call.1} parent=11 // pred_fallthru
        _
      // Predicated region
      $region17: #{tpu_custom_call.1} parent=11 // pred_check
        %p209 = pneg %p81
      $region18: #{tpu_custom_call.1} parent=11 // pred_check_branch
        %211 = sbr.rel (%p209) target = $region20
      $region19: #{tpu_custom_call.1} parent=11 // pred_region
        _
      $region20: #{tpu_custom_call.1} parent=11 // pred_fallthru
        _
      // Predicated region
      $region21: #{tpu_custom_call.1} parent=11 // pred_check
        %p212 = pneg %p102
      $region22: #{tpu_custom_call.1} parent=11 // pred_check_branch
        %214 = sbr.rel (%p212) target = $region24
      $region23: #{tpu_custom_call.1} parent=11 // pred_region
        _
      $region24: #{tpu_custom_call.1} parent=11 // pred_fallthru
        _
      // Predicated region
      $region25: #{tpu_custom_call.1} parent=11 // pred_check
        %p215 = pneg %p123
      $region26: #{tpu_custom_call.1} parent=11 // pred_check_branch
        %217 = sbr.rel (%p215) target = $region28
      $region27: #{tpu_custom_call.1} parent=11 // pred_region
        _
      $region28: #{tpu_custom_call.1} parent=11 // pred_fallthru
        _
      // Predicated region
      $region29: #{tpu_custom_call.1} parent=11 // pred_check
        %p218 = pneg %p144
      $region30: #{tpu_custom_call.1} parent=11 // pred_check_branch
        %220 = sbr.rel (%p218) target = $region32
      $region31: #{tpu_custom_call.1} parent=11 // pred_region
        _
      $region32: #{tpu_custom_call.1} parent=11 // pred_fallthru
        _
      // Predicated region
      $region33: #{tpu_custom_call.1} parent=11 // pred_check
        %p221 = pneg %p165
      $region34: #{tpu_custom_call.1} parent=11 // pred_check_branch
        %223 = sbr.rel (%p221) target = $region36
      $region35: #{tpu_custom_call.1} parent=11 // pred_region
        _
      $region36: #{tpu_custom_call.1} parent=11 // pred_fallthru
        _
    $region12: #{tpu_custom_call.1} parent=5 // pred_fallthru
      _
    %p224 = scmp.lt.s32.totalorder %s13, 2
    // Predicated region
    $region37: #{tpu_custom_call.1} parent=5 // pred_check
      %p225 = pneg %p224
    $region38: #{tpu_custom_call.1} parent=5 // pred_check_branch
      %227 = sbr.rel (%p225) target = $region40
    $region39: #{tpu_custom_call.1} parent=5 // pred_region
      // Predicated region
      $region41: #{tpu_custom_call.1} parent=39 // pred_check
        %p228 = pneg %p33
      $region42: #{tpu_custom_call.1} parent=39 // pred_check_branch
        %230 = sbr.rel (%p228) target = $region44
      $region43: #{tpu_custom_call.1} parent=39 // pred_region
        %p231 = scmp.lt.s32.totalorder %s13, 1
        %s232 = scalar_select %p231, %s13, 1
        %s233 = smul.addr %s232, 32
        %s234 = smul.addr %s233, 8
        %s235 = scalar_lea.vmem %s0, %s234
      $region44: #{tpu_custom_call.1} parent=39 // pred_fallthru
        _
    $region40: #{tpu_custom_call.1} parent=5 // pred_fallthru
      _
    %p236 = scmp.le.s32.totalorder 1, %s13
    %p237 = scmp.lt.s32.totalorder %s13, 3
    %p238 = pnand %p236, %p237
    %p239 = pneg %p238
    // Predicated region
    $region45: #{tpu_custom_call.1} parent=5 // pred_check
      _
    $region46: #{tpu_custom_call.1} parent=5 // pred_check_branch
      %241 = sbr.rel (%p238) target = $region48
    $region47: #{tpu_custom_call.1} parent=5 // pred_region
      %s242 = ssub.s32 %s13, 1
      %p243 = scmp.lt.s32.totalorder %s18, 1
      %s244 = scalar_select %p243, %s18, 1
      %s245 = smul.addr %s244, 32
      %s246 = smul.addr %s245, 8
      %s247 = scalar_lea.vmem %s0, %s246
      %p248 = pneg %p39
      %p249 = pneg %p36
      %p250 = pneg %p60
      %p251 = pneg %p57
      %p252 = pneg %p81
      %p253 = pneg %p78
      %p254 = pneg %p102
      %p255 = pneg %p99
      %p256 = pneg %p123
      %p257 = pneg %p120
      %p258 = pneg %p144
      %p259 = pneg %p141
      %p260 = pneg %p165
      %p261 = pneg %p162
      %p262 = pneg %p191
      %p263 = pneg %p188
      %p264 = scmp.lt.s32.totalorder %s18, 1
      %s265 = scalar_select %p264, %s18, 1
      %s266 = smul.addr %s265, 32
      %s267 = smul.addr %s266, 8
      %s268 = scalar_lea.vmem %s7, %s267
      %p269 = scmp.lt.s32.totalorder %s18, 1
      %s270 = scalar_select %p269, %s18, 1
      %s271 = smul.addr %s270, 32
      %s272 = smul.addr %s271, 8
      %s273 = scalar_lea.vmem %s0, %s272
      %p274 = scmp.lt.s32.totalorder %s18, 1
      %s275 = scalar_select %p274, %s18, 1
      %s276 = smul.addr %s275, 32
      %s277 = smul.addr %s276, 8
      %s278 = scalar_lea.vmem %s7, %s277
      %v280 = vld [vmem:[%s273] sm:$0xff]
      %v281 = vld [vmem:[%s273 + $0x8] sm:$0xff]
      %v282 = vld [vmem:[%s273 + $0x10] sm:$0xff]
      %v283 = vld [vmem:[%s273 + $0x18] sm:$0xff]
      %v284 = vld [vmem:[%s273 + $0x20] sm:$0xff]
      %v285 = vld [vmem:[%s273 + $0x28] sm:$0xff]
      %v286 = vld [vmem:[%s273 + $0x30] sm:$0xff]
      %v287 = vld [vmem:[%s273 + $0x38] sm:$0xff]
      %v288 = vld [vmem:[%s273 + $0x40] sm:$0xff]
      %v289 = vld [vmem:[%s273 + $0x48] sm:$0xff]
      %v290 = vld [vmem:[%s273 + $0x50] sm:$0xff]
      %v291 = vld [vmem:[%s273 + $0x58] sm:$0xff]
      %v292 = vld [vmem:[%s273 + $0x60] sm:$0xff]
      %v293 = vld [vmem:[%s273 + $0x68] sm:$0xff]
      %v294 = vld [vmem:[%s273 + $0x70] sm:$0xff]
      %v295 = vld [vmem:[%s273 + $0x78] sm:$0xff]
      %v296 = vld [vmem:[%s273 + $0x80] sm:$0xff]
      %v297 = vld [vmem:[%s273 + $0x88] sm:$0xff]
      %v298 = vld [vmem:[%s273 + $0x90] sm:$0xff]
      %v299 = vld [vmem:[%s273 + $0x98] sm:$0xff]
      %v300 = vld [vmem:[%s273 + $0xa0] sm:$0xff]
      %v301 = vld [vmem:[%s273 + $0xa8] sm:$0xff]
      %v302 = vld [vmem:[%s273 + $0xb0] sm:$0xff]
      %v303 = vld [vmem:[%s273 + $0xb8] sm:$0xff]
      %v304 = vld [vmem:[%s273 + $0xc0] sm:$0xff]
      %v305 = vld [vmem:[%s273 + $0xc8] sm:$0xff]
      %v306 = vld [vmem:[%s273 + $0xd0] sm:$0xff]
      %v307 = vld [vmem:[%s273 + $0xd8] sm:$0xff]
      %v308 = vld [vmem:[%s273 + $0xe0] sm:$0xff]
      %v309 = vld [vmem:[%s273 + $0xe8] sm:$0xff]
      %v310 = vld [vmem:[%s273 + $0xf0] sm:$0xff]
      %v311 = vld [vmem:[%s273 + $0xf8] sm:$0xff]
      %v312 = vlaneseq
      %v313 = vshrl.u32 %v312, 7
      %v314 = vadd.s32 %v313, 8
      %v315 = vadd.s32 %v313, 16
      %v316 = vadd.s32 %v313, 24
      %v317 = vadd.s32 %v313, 32
      %v318 = vadd.s32 %v313, 40
      %v319 = vadd.s32 %v313, 48
      %v320 = vadd.s32 %v313, 56
      %v321 = vadd.s32 %v313, 64
      %v322 = vadd.s32 %v313, 72
      %v323 = vadd.s32 %v313, 80
      %v324 = vadd.s32 %v313, 88
      %v325 = vadd.s32 %v313, 96
      %v326 = vadd.s32 %v313, 104
      %v327 = vadd.s32 %v313, 112
      %v328 = vadd.s32 %v313, 120
      %v329 = vadd.s32 %v313, 128
      %v330 = vadd.s32 %v313, 136
      %v331 = vadd.s32 %v313, 144
      %v332 = vadd.s32 %v313, 152
      %v333 = vadd.s32 %v313, 160
      %v334 = vadd.s32 %v313, 168
      %v335 = vadd.s32 %v313, 176
      %v336 = vadd.s32 %v313, 184
      %v337 = vadd.s32 %v313, 192
      %v338 = vadd.s32 %v313, 200
      %v339 = vadd.s32 %v313, 208
      %v340 = vadd.s32 %v313, 216
      %v341 = vadd.s32 %v313, 224
      %v342 = vadd.s32 %v313, 232
      %v343 = vadd.s32 %v313, 240
      %v344 = vadd.s32 %v313, 248
      %vm345 = vcmp.lt.s32.totalorder %v313, 0
      %v346 = vsub.s32 0, %v313
      %v347 = vsel %vm345, %v346, %v313
      %v348 = vshrl.u32 %v347, 4
      %v349 = vand.u32 %v347, 15
      %v350 = vsub.s32 0, %v349
      %v351 = vsel %vm345, %v350, %v349
      %vm352 = vcmp.lt.s32.totalorder %v314, 0
      %v353 = vsub.s32 0, %v314
      %v354 = vsel %vm352, %v353, %v314
      %v355 = vshrl.u32 %v354, 4
      %v356 = vand.u32 %v354, 15
      %v357 = vsub.s32 0, %v356
      %v358 = vsel %vm352, %v357, %v356
      %vm359 = vcmp.lt.s32.totalorder %v315, 0
      %v360 = vsub.s32 0, %v315
      %v361 = vsel %vm359, %v360, %v315
      %v362 = vshrl.u32 %v361, 4
      %v363 = vand.u32 %v361, 15
      %v364 = vsub.s32 0, %v363
      %v365 = vsel %vm359, %v364, %v363
      %vm366 = vcmp.lt.s32.totalorder %v316, 0
      %v367 = vsub.s32 0, %v316
      %v368 = vsel %vm366, %v367, %v316
      %v369 = vshrl.u32 %v368, 4
      %v370 = vand.u32 %v368, 15
      %v371 = vsub.s32 0, %v370
      %v372 = vsel %vm366, %v371, %v370
      %vm373 = vcmp.lt.s32.totalorder %v317, 0
      %v374 = vsub.s32 0, %v317
      %v375 = vsel %vm373, %v374, %v317
      %v376 = vshrl.u32 %v375, 4
      %v377 = vand.u32 %v375, 15
      %v378 = vsub.s32 0, %v377
      %v379 = vsel %vm373, %v378, %v377
      %vm380 = vcmp.lt.s32.totalorder %v318, 0
      %v381 = vsub.s32 0, %v318
      %v382 = vsel %vm380, %v381, %v318
      %v383 = vshrl.u32 %v382, 4
      %v384 = vand.u32 %v382, 15
      %v385 = vsub.s32 0, %v384
      %v386 = vsel %vm380, %v385, %v384
      %vm387 = vcmp.lt.s32.totalorder %v319, 0
      %v388 = vsub.s32 0, %v319
      %v389 = vsel %vm387, %v388, %v319
      %v390 = vshrl.u32 %v389, 4
      %v391 = vand.u32 %v389, 15
      %v392 = vsub.s32 0, %v391
      %v393 = vsel %vm387, %v392, %v391
      %vm394 = vcmp.lt.s32.totalorder %v320, 0
      %v395 = vsub.s32 0, %v320
      %v396 = vsel %vm394, %v395, %v320
      %v397 = vshrl.u32 %v396, 4
      %v398 = vand.u32 %v396, 15
      %v399 = vsub.s32 0, %v398
      %v400 = vsel %vm394, %v399, %v398
      %vm401 = vcmp.lt.s32.totalorder %v321, 0
      %v402 = vsub.s32 0, %v321
      %v403 = vsel %vm401, %v402, %v321
      %v404 = vshrl.u32 %v403, 4
      %v405 = vand.u32 %v403, 15
      %v406 = vsub.s32 0, %v405
      %v407 = vsel %vm401, %v406, %v405
      %vm408 = vcmp.lt.s32.totalorder %v322, 0
      %v409 = vsub.s32 0, %v322
      %v410 = vsel %vm408, %v409, %v322
      %v411 = vshrl.u32 %v410, 4
      %v412 = vand.u32 %v410, 15
      %v413 = vsub.s32 0, %v412
      %v414 = vsel %vm408, %v413, %v412
      %vm415 = vcmp.lt.s32.totalorder %v323, 0
      %v416 = vsub.s32 0, %v323
      %v417 = vsel %vm415, %v416, %v323
      %v418 = vshrl.u32 %v417, 4
      %v419 = vand.u32 %v417, 15
      %v420 = vsub.s32 0, %v419
      %v421 = vsel %vm415, %v420, %v419
      %vm422 = vcmp.lt.s32.totalorder %v324, 0
      %v423 = vsub.s32 0, %v324
      %v424 = vsel %vm422, %v423, %v324
      %v425 = vshrl.u32 %v424, 4
      %v426 = vand.u32 %v424, 15
      %v427 = vsub.s32 0, %v426
      %v428 = vsel %vm422, %v427, %v426
      %vm429 = vcmp.lt.s32.totalorder %v325, 0
      %v430 = vsub.s32 0, %v325
      %v431 = vsel %vm429, %v430, %v325
      %v432 = vshrl.u32 %v431, 4
      %v433 = vand.u32 %v431, 15
      %v434 = vsub.s32 0, %v433
      %v435 = vsel %vm429, %v434, %v433
      %vm436 = vcmp.lt.s32.totalorder %v326, 0
      %v437 = vsub.s32 0, %v326
      %v438 = vsel %vm436, %v437, %v326
      %v439 = vshrl.u32 %v438, 4
      %v440 = vand.u32 %v438, 15
      %v441 = vsub.s32 0, %v440
      %v442 = vsel %vm436, %v441, %v440
      %vm443 = vcmp.lt.s32.totalorder %v327, 0
      %v444 = vsub.s32 0, %v327
      %v445 = vsel %vm443, %v444, %v327
      %v446 = vshrl.u32 %v445, 4
      %v447 = vand.u32 %v445, 15
      %v448 = vsub.s32 0, %v447
      %v449 = vsel %vm443, %v448, %v447
      %vm450 = vcmp.lt.s32.totalorder %v328, 0
      %v451 = vsub.s32 0, %v328
      %v452 = vsel %vm450, %v451, %v328
      %v453 = vshrl.u32 %v452, 4
      %v454 = vand.u32 %v452, 15
      %v455 = vsub.s32 0, %v454
      %v456 = vsel %vm450, %v455, %v454
      %vm457 = vcmp.lt.s32.totalorder %v329, 0
      %v458 = vsub.s32 0, %v329
      %v459 = vsel %vm457, %v458, %v329
      %v460 = vshrl.u32 %v459, 4
      %v461 = vand.u32 %v459, 15
      %v462 = vsub.s32 0, %v461
      %v463 = vsel %vm457, %v462, %v461
      %vm464 = vcmp.lt.s32.totalorder %v330, 0
      %v465 = vsub.s32 0, %v330
      %v466 = vsel %vm464, %v465, %v330
      %v467 = vshrl.u32 %v466, 4
      %v468 = vand.u32 %v466, 15
      %v469 = vsub.s32 0, %v468
      %v470 = vsel %vm464, %v469, %v468
      %vm471 = vcmp.lt.s32.totalorder %v331, 0
      %v472 = vsub.s32 0, %v331
      %v473 = vsel %vm471, %v472, %v331
      %v474 = vshrl.u32 %v473, 4
      %v475 = vand.u32 %v473, 15
      %v476 = vsub.s32 0, %v475
      %v477 = vsel %vm471, %v476, %v475
      %vm478 = vcmp.lt.s32.totalorder %v332, 0
      %v479 = vsub.s32 0, %v332
      %v480 = vsel %vm478, %v479, %v332
      %v481 = vshrl.u32 %v480, 4
      %v482 = vand.u32 %v480, 15
      %v483 = vsub.s32 0, %v482
      %v484 = vsel %vm478, %v483, %v482
      %vm485 = vcmp.lt.s32.totalorder %v333, 0
      %v486 = vsub.s32 0, %v333
      %v487 = vsel %vm485, %v486, %v333
      %v488 = vshrl.u32 %v487, 4
      %v489 = vand.u32 %v487, 15
      %v490 = vsub.s32 0, %v489
      %v491 = vsel %vm485, %v490, %v489
      %vm492 = vcmp.lt.s32.totalorder %v334, 0
      %v493 = vsub.s32 0, %v334
      %v494 = vsel %vm492, %v493, %v334
      %v495 = vshrl.u32 %v494, 4
      %v496 = vand.u32 %v494, 15
      %v497 = vsub.s32 0, %v496
      %v498 = vsel %vm492, %v497, %v496
      %vm499 = vcmp.lt.s32.totalorder %v335, 0
      %v500 = vsub.s32 0, %v335
      %v501 = vsel %vm499, %v500, %v335
      %v502 = vshrl.u32 %v501, 4
      %v503 = vand.u32 %v501, 15
      %v504 = vsub.s32 0, %v503
      %v505 = vsel %vm499, %v504, %v503
      %vm506 = vcmp.lt.s32.totalorder %v336, 0
      %v507 = vsub.s32 0, %v336
      %v508 = vsel %vm506, %v507, %v336
      %v509 = vshrl.u32 %v508, 4
      %v510 = vand.u32 %v508, 15
      %v511 = vsub.s32 0, %v510
      %v512 = vsel %vm506, %v511, %v510
      %vm513 = vcmp.lt.s32.totalorder %v337, 0
      %v514 = vsub.s32 0, %v337
      %v515 = vsel %vm513, %v514, %v337
      %v516 = vshrl.u32 %v515, 4
      %v517 = vand.u32 %v515, 15
      %v518 = vsub.s32 0, %v517
      %v519 = vsel %vm513, %v518, %v517
      %vm520 = vcmp.lt.s32.totalorder %v338, 0
      %v521 = vsub.s32 0, %v338
      %v522 = vsel %vm520, %v521, %v338
      %v523 = vshrl.u32 %v522, 4
      %v524 = vand.u32 %v522, 15
      %v525 = vsub.s32 0, %v524
      %v526 = vsel %vm520, %v525, %v524
      %vm527 = vcmp.lt.s32.totalorder %v339, 0
      %v528 = vsub.s32 0, %v339
      %v529 = vsel %vm527, %v528, %v339
      %v530 = vshrl.u32 %v529, 4
      %v531 = vand.u32 %v529, 15
      %v532 = vsub.s32 0, %v531
      %v533 = vsel %vm527, %v532, %v531
      %vm534 = vcmp.lt.s32.totalorder %v340, 0
      %v535 = vsub.s32 0, %v340
      %v536 = vsel %vm534, %v535, %v340
      %v537 = vshrl.u32 %v536, 4
      %v538 = vand.u32 %v536, 15
      %v539 = vsub.s32 0, %v538
      %v540 = vsel %vm534, %v539, %v538
      %vm541 = vcmp.lt.s32.totalorder %v341, 0
      %v542 = vsub.s32 0, %v341
      %v543 = vsel %vm541, %v542, %v341
      %v544 = vshrl.u32 %v543, 4
      %v545 = vand.u32 %v543, 15
      %v546 = vsub.s32 0, %v545
      %v547 = vsel %vm541, %v546, %v545
      %vm548 = vcmp.lt.s32.totalorder %v342, 0
      %v549 = vsub.s32 0, %v342
      %v550 = vsel %vm548, %v549, %v342
      %v551 = vshrl.u32 %v550, 4
      %v552 = vand.u32 %v550, 15
      %v553 = vsub.s32 0, %v552
      %v554 = vsel %vm548, %v553, %v552
      %vm555 = vcmp.lt.s32.totalorder %v343, 0
      %v556 = vsub.s32 0, %v343
      %v557 = vsel %vm555, %v556, %v343
      %v558 = vshrl.u32 %v557, 4
      %v559 = vand.u32 %v557, 15
      %v560 = vsub.s32 0, %v559
      %v561 = vsel %vm555, %v560, %v559
      %vm562 = vcmp.lt.s32.totalorder %v344, 0
      %v563 = vsub.s32 0, %v344
      %v564 = vsel %vm562, %v563, %v344
      %v565 = vshrl.u32 %v564, 4
      %v566 = vand.u32 %v564, 15
      %v567 = vsub.s32 0, %v566
      %v568 = vsel %vm562, %v567, %v566
      %vm569 = vcmp.ne.s32.totalorder %v351, 0
      %vm570 = vcmp.ne.s32.totalorder %v358, 0
      %vm571 = vcmp.ne.s32.totalorder %v365, 0
      %vm572 = vcmp.ne.s32.totalorder %v372, 0
      %vm573 = vcmp.ne.s32.totalorder %v379, 0
      %vm574 = vcmp.ne.s32.totalorder %v386, 0
      %vm575 = vcmp.ne.s32.totalorder %v393, 0
      %vm576 = vcmp.ne.s32.totalorder %v400, 0
      %vm577 = vcmp.ne.s32.totalorder %v407, 0
      %vm578 = vcmp.ne.s32.totalorder %v414, 0
      %vm579 = vcmp.ne.s32.totalorder %v421, 0
      %vm580 = vcmp.ne.s32.totalorder %v428, 0
      %vm581 = vcmp.ne.s32.totalorder %v435, 0
      %vm582 = vcmp.ne.s32.totalorder %v442, 0
      %vm583 = vcmp.ne.s32.totalorder %v449, 0
      %vm584 = vcmp.ne.s32.totalorder %v456, 0
      %vm585 = vcmp.ne.s32.totalorder %v463, 0
      %vm586 = vcmp.ne.s32.totalorder %v470, 0
      %vm587 = vcmp.ne.s32.totalorder %v477, 0
      %vm588 = vcmp.ne.s32.totalorder %v484, 0
      %vm589 = vcmp.ne.s32.totalorder %v491, 0
      %vm590 = vcmp.ne.s32.totalorder %v498, 0
      %vm591 = vcmp.ne.s32.totalorder %v505, 0
      %vm592 = vcmp.ne.s32.totalorder %v512, 0
      %vm593 = vcmp.ne.s32.totalorder %v519, 0
      %vm594 = vcmp.ne.s32.totalorder %v526, 0
      %vm595 = vcmp.ne.s32.totalorder %v533, 0
      %vm596 = vcmp.ne.s32.totalorder %v540, 0
      %vm597 = vcmp.ne.s32.totalorder %v547, 0
      %vm598 = vcmp.ne.s32.totalorder %v554, 0
      %vm599 = vcmp.ne.s32.totalorder %v561, 0
      %vm600 = vcmp.ne.s32.totalorder %v568, 0
      %vm601 = vcmp.lt.s32.totalorder %v351, 0
      %vm602 = vcmp.lt.s32.totalorder %v358, 0
      %vm603 = vcmp.lt.s32.totalorder %v365, 0
      %vm604 = vcmp.lt.s32.totalorder %v372, 0
      %vm605 = vcmp.lt.s32.totalorder %v379, 0
      %vm606 = vcmp.lt.s32.totalorder %v386, 0
      %vm607 = vcmp.lt.s32.totalorder %v393, 0
      %vm608 = vcmp.lt.s32.totalorder %v400, 0
      %vm609 = vcmp.lt.s32.totalorder %v407, 0
      %vm610 = vcmp.lt.s32.totalorder %v414, 0
      %vm611 = vcmp.lt.s32.totalorder %v421, 0
      %vm612 = vcmp.lt.s32.totalorder %v428, 0
      %vm613 = vcmp.lt.s32.totalorder %v435, 0
      %vm614 = vcmp.lt.s32.totalorder %v442, 0
      %vm615 = vcmp.lt.s32.totalorder %v449, 0
      %vm616 = vcmp.lt.s32.totalorder %v456, 0
      %vm617 = vcmp.lt.s32.totalorder %v463, 0
      %vm618 = vcmp.lt.s32.totalorder %v470, 0
      %vm619 = vcmp.lt.s32.totalorder %v477, 0
      %vm620 = vcmp.lt.s32.totalorder %v484, 0
      %vm621 = vcmp.lt.s32.totalorder %v491, 0
      %vm622 = vcmp.lt.s32.totalorder %v498, 0
      %vm623 = vcmp.lt.s32.totalorder %v505, 0
      %vm624 = vcmp.lt.s32.totalorder %v512, 0
      %vm625 = vcmp.lt.s32.totalorder %v519, 0
      %vm626 = vcmp.lt.s32.totalorder %v526, 0
      %vm627 = vcmp.lt.s32.totalorder %v533, 0
      %vm628 = vcmp.lt.s32.totalorder %v540, 0
      %vm629 = vcmp.lt.s32.totalorder %v547, 0
      %vm630 = vcmp.lt.s32.totalorder %v554, 0
      %vm631 = vcmp.lt.s32.totalorder %v561, 0
      %vm632 = vcmp.lt.s32.totalorder %v568, 0
      %vm633 = vmand %vm601, %vm569
      %vm634 = vmand %vm602, %vm570
      %vm635 = vmand %vm603, %vm571
      %vm636 = vmand %vm604, %vm572
      %vm637 = vmand %vm605, %vm573
      %vm638 = vmand %vm606, %vm574
      %vm639 = vmand %vm607, %vm575
      %vm640 = vmand %vm608, %vm576
      %vm641 = vmand %vm609, %vm577
      %vm642 = vmand %vm610, %vm578
      %vm643 = vmand %vm611, %vm579
      %vm644 = vmand %vm612, %vm580
      %vm645 = vmand %vm613, %vm581
      %vm646 = vmand %vm614, %vm582
      %vm647 = vmand %vm615, %vm583
      %vm648 = vmand %vm616, %vm584
      %vm649 = vmand %vm617, %vm585
      %vm650 = vmand %vm618, %vm586
      %vm651 = vmand %vm619, %vm587
      %vm652 = vmand %vm620, %vm588
      %vm653 = vmand %vm621, %vm589
      %vm654 = vmand %vm622, %vm590
      %vm655 = vmand %vm623, %vm591
      %vm656 = vmand %vm624, %vm592
      %vm657 = vmand %vm625, %vm593
      %vm658 = vmand %vm626, %vm594
      %vm659 = vmand %vm627, %vm595
      %vm660 = vmand %vm628, %vm596
      %vm661 = vmand %vm629, %vm597
      %vm662 = vmand %vm630, %vm598
      %vm663 = vmand %vm631, %vm599
      %vm664 = vmand %vm632, %vm600
      %v665 = vadd.s32 %v351, 16
      %v666 = vadd.s32 %v358, 16
      %v667 = vadd.s32 %v365, 16
      %v668 = vadd.s32 %v372, 16
      %v669 = vadd.s32 %v379, 16
      %v670 = vadd.s32 %v386, 16
      %v671 = vadd.s32 %v393, 16
      %v672 = vadd.s32 %v400, 16
      %v673 = vadd.s32 %v407, 16
      %v674 = vadd.s32 %v414, 16
      %v675 = vadd.s32 %v421, 16
      %v676 = vadd.s32 %v428, 16
      %v677 = vadd.s32 %v435, 16
      %v678 = vadd.s32 %v442, 16
      %v679 = vadd.s32 %v449, 16
      %v680 = vadd.s32 %v456, 16
      %v681 = vadd.s32 %v463, 16
      %v682 = vadd.s32 %v470, 16
      %v683 = vadd.s32 %v477, 16
      %v684 = vadd.s32 %v484, 16
      %v685 = vadd.s32 %v491, 16
      %v686 = vadd.s32 %v498, 16
      %v687 = vadd.s32 %v505, 16
      %v688 = vadd.s32 %v512, 16
      %v689 = vadd.s32 %v519, 16
      %v690 = vadd.s32 %v526, 16
      %v691 = vadd.s32 %v533, 16
      %v692 = vadd.s32 %v540, 16
      %v693 = vadd.s32 %v547, 16
      %v694 = vadd.s32 %v554, 16
      %v695 = vadd.s32 %v561, 16
      %v696 = vadd.s32 %v568, 16
      %v697 = vsel %vm633, %v665, %v351
      %v698 = vsel %vm634, %v666, %v358
      %v699 = vsel %vm635, %v667, %v365
      %v700 = vsel %vm636, %v668, %v372
      %v701 = vsel %vm637, %v669, %v379
      %v702 = vsel %vm638, %v670, %v386
      %v703 = vsel %vm639, %v671, %v393
      %v704 = vsel %vm640, %v672, %v400
      %v705 = vsel %vm641, %v673, %v407
      %v706 = vsel %vm642, %v674, %v414
      %v707 = vsel %vm643, %v675, %v421
      %v708 = vsel %vm644, %v676, %v428
      %v709 = vsel %vm645, %v677, %v435
      %v710 = vsel %vm646, %v678, %v442
      %v711 = vsel %vm647, %v679, %v449
      %v712 = vsel %vm648, %v680, %v456
      %v713 = vsel %vm649, %v681, %v463
      %v714 = vsel %vm650, %v682, %v470
      %v715 = vsel %vm651, %v683, %v477
      %v716 = vsel %vm652, %v684, %v484
      %v717 = vsel %vm653, %v685, %v491
      %v718 = vsel %vm654, %v686, %v498
      %v719 = vsel %vm655, %v687, %v505
      %v720 = vsel %vm656, %v688, %v512
      %v721 = vsel %vm657, %v689, %v519
      %v722 = vsel %vm658, %v690, %v526
      %v723 = vsel %vm659, %v691, %v533
      %v724 = vsel %vm660, %v692, %v540
      %v725 = vsel %vm661, %v693, %v547
      %v726 = vsel %vm662, %v694, %v554
      %v727 = vsel %vm663, %v695, %v561
      %v728 = vsel %vm664, %v696, %v568
      %vm729 = vcmp.ne.s32.totalorder %v697, 0
      %vm730 = vcmp.ne.s32.totalorder %v698, 0
      %vm731 = vcmp.ne.s32.totalorder %v699, 0
      %vm732 = vcmp.ne.s32.totalorder %v700, 0
      %vm733 = vcmp.ne.s32.totalorder %v701, 0
      %vm734 = vcmp.ne.s32.totalorder %v702, 0
      %vm735 = vcmp.ne.s32.totalorder %v703, 0
      %vm736 = vcmp.ne.s32.totalorder %v704, 0
      %vm737 = vcmp.ne.s32.totalorder %v705, 0
      %vm738 = vcmp.ne.s32.totalorder %v706, 0
      %vm739 = vcmp.ne.s32.totalorder %v707, 0
      %vm740 = vcmp.ne.s32.totalorder %v708, 0
      %vm741 = vcmp.ne.s32.totalorder %v709, 0
      %vm742 = vcmp.ne.s32.totalorder %v710, 0
      %vm743 = vcmp.ne.s32.totalorder %v711, 0
      %vm744 = vcmp.ne.s32.totalorder %v712, 0
      %vm745 = vcmp.ne.s32.totalorder %v713, 0
      %vm746 = vcmp.ne.s32.totalorder %v714, 0
      %vm747 = vcmp.ne.s32.totalorder %v715, 0
      %vm748 = vcmp.ne.s32.totalorder %v716, 0
      %vm749 = vcmp.ne.s32.totalorder %v717, 0
      %vm750 = vcmp.ne.s32.totalorder %v718, 0
      %vm751 = vcmp.ne.s32.totalorder %v719, 0
      %vm752 = vcmp.ne.s32.totalorder %v720, 0
      %vm753 = vcmp.ne.s32.totalorder %v721, 0
      %vm754 = vcmp.ne.s32.totalorder %v722, 0
      %vm755 = vcmp.ne.s32.totalorder %v723, 0
      %vm756 = vcmp.ne.s32.totalorder %v724, 0
      %vm757 = vcmp.ne.s32.totalorder %v725, 0
      %vm758 = vcmp.ne.s32.totalorder %v726, 0
      %vm759 = vcmp.ne.s32.totalorder %v727, 0
      %vm760 = vcmp.ne.s32.totalorder %v728, 0
      %vm761 = vcmp.ne.s32.totalorder %v697, 15
      %vm762 = vcmp.ne.s32.totalorder %v698, 15
      %vm763 = vcmp.ne.s32.totalorder %v699, 15
      %vm764 = vcmp.ne.s32.totalorder %v700, 15
      %vm765 = vcmp.ne.s32.totalorder %v701, 15
      %vm766 = vcmp.ne.s32.totalorder %v702, 15
      %vm767 = vcmp.ne.s32.totalorder %v703, 15
      %vm768 = vcmp.ne.s32.totalorder %v704, 15
      %vm769 = vcmp.ne.s32.totalorder %v705, 15
      %vm770 = vcmp.ne.s32.totalorder %v706, 15
      %vm771 = vcmp.ne.s32.totalorder %v707, 15
      %vm772 = vcmp.ne.s32.totalorder %v708, 15
      %vm773 = vcmp.ne.s32.totalorder %v709, 15
      %vm774 = vcmp.ne.s32.totalorder %v710, 15
      %vm775 = vcmp.ne.s32.totalorder %v711, 15
      %vm776 = vcmp.ne.s32.totalorder %v712, 15
      %vm777 = vcmp.ne.s32.totalorder %v713, 15
      %vm778 = vcmp.ne.s32.totalorder %v714, 15
      %vm779 = vcmp.ne.s32.totalorder %v715, 15
      %vm780 = vcmp.ne.s32.totalorder %v716, 15
      %vm781 = vcmp.ne.s32.totalorder %v717, 15
      %vm782 = vcmp.ne.s32.totalorder %v718, 15
      %vm783 = vcmp.ne.s32.totalorder %v719, 15
      %vm784 = vcmp.ne.s32.totalorder %v720, 15
      %vm785 = vcmp.ne.s32.totalorder %v721, 15
      %vm786 = vcmp.ne.s32.totalorder %v722, 15
      %vm787 = vcmp.ne.s32.totalorder %v723, 15
      %vm788 = vcmp.ne.s32.totalorder %v724, 15
      %vm789 = vcmp.ne.s32.totalorder %v725, 15
      %vm790 = vcmp.ne.s32.totalorder %v726, 15
      %vm791 = vcmp.ne.s32.totalorder %v727, 15
      %vm792 = vcmp.ne.s32.totalorder %v728, 15
      %vm825 = vcmask 1040384
      %v826 = vrot.slane %v280, 7
      %v827 = vrot.slane %v281, 7
      %v828 = vsel %vm825, %v826, %v827
      %v829 = vrot.slane %v282, 7
      %v830 = vsel %vm825, %v827, %v829
      %v831 = vrot.slane %v283, 7
      %v832 = vsel %vm825, %v829, %v831
      %v833 = vrot.slane %v284, 7
      %v834 = vsel %vm825, %v831, %v833
      %v835 = vrot.slane %v285, 7
      %v836 = vsel %vm825, %v833, %v835
      %v837 = vrot.slane %v286, 7
      %v838 = vsel %vm825, %v835, %v837
      %v839 = vrot.slane %v287, 7
      %v840 = vsel %vm825, %v837, %v839
      %v841 = vrot.slane %v288, 7
      %v842 = vsel %vm825, %v839, %v841
      %v843 = vrot.slane %v289, 7
      %v844 = vsel %vm825, %v841, %v843
      %v845 = vrot.slane %v290, 7
      %v846 = vsel %vm825, %v843, %v845
      %v847 = vrot.slane %v291, 7
      %v848 = vsel %vm825, %v845, %v847
      %v849 = vrot.slane %v292, 7
      %v850 = vsel %vm825, %v847, %v849
      %v851 = vrot.slane %v293, 7
      %v852 = vsel %vm825, %v849, %v851
      %v853 = vrot.slane %v294, 7
      %v854 = vsel %vm825, %v851, %v853
      %v855 = vrot.slane %v295, 7
      %v856 = vsel %vm825, %v853, %v855
      %v857 = vrot.slane %v296, 7
      %v858 = vsel %vm825, %v855, %v857
      %v859 = vrot.slane %v297, 7
      %v860 = vsel %vm825, %v857, %v859
      %v861 = vrot.slane %v298, 7
      %v862 = vsel %vm825, %v859, %v861
      %v863 = vrot.slane %v299, 7
      %v864 = vsel %vm825, %v861, %v863
      %v865 = vrot.slane %v300, 7
      %v866 = vsel %vm825, %v863, %v865
      %v867 = vrot.slane %v301, 7
      %v868 = vsel %vm825, %v865, %v867
      %v869 = vrot.slane %v302, 7
      %v870 = vsel %vm825, %v867, %v869
      %v871 = vrot.slane %v303, 7
      %v872 = vsel %vm825, %v869, %v871
      %v873 = vrot.slane %v304, 7
      %v874 = vsel %vm825, %v871, %v873
      %v875 = vrot.slane %v305, 7
      %v876 = vsel %vm825, %v873, %v875
      %v877 = vrot.slane %v306, 7
      %v878 = vsel %vm825, %v875, %v877
      %v879 = vrot.slane %v307, 7
      %v880 = vsel %vm825, %v877, %v879
      %v881 = vrot.slane %v308, 7
      %v882 = vsel %vm825, %v879, %v881
      %v883 = vrot.slane %v309, 7
      %v884 = vsel %vm825, %v881, %v883
      %v885 = vrot.slane %v310, 7
      %v886 = vsel %vm825, %v883, %v885
      %v887 = vrot.slane %v311, 7
      %v888 = vsel %vm825, %v885, %v887
      %v921 = vsel %vm825, 0.0, %v826
      %v922 = vsel %vm729, 1, 0
      %v923 = vsel %vm730, 1, 0
      %v924 = vsel %vm731, 1, 0
      %v925 = vsel %vm732, 1, 0
      %v926 = vsel %vm733, 1, 0
      %v927 = vsel %vm734, 1, 0
      %v928 = vsel %vm735, 1, 0
      %v929 = vsel %vm736, 1, 0
      %v930 = vsel %vm737, 1, 0
      %v931 = vsel %vm738, 1, 0
      %v932 = vsel %vm739, 1, 0
      %v933 = vsel %vm740, 1, 0
      %v934 = vsel %vm741, 1, 0
      %v935 = vsel %vm742, 1, 0
      %v936 = vsel %vm743, 1, 0
      %v937 = vsel %vm744, 1, 0
      %v938 = vsel %vm745, 1, 0
      %v939 = vsel %vm746, 1, 0
      %v940 = vsel %vm747, 1, 0
      %v941 = vsel %vm748, 1, 0
      %v942 = vsel %vm749, 1, 0
      %v943 = vsel %vm750, 1, 0
      %v944 = vsel %vm751, 1, 0
      %v945 = vsel %vm752, 1, 0
      %v946 = vsel %vm753, 1, 0
      %v947 = vsel %vm754, 1, 0
      %v948 = vsel %vm755, 1, 0
      %v949 = vsel %vm756, 1, 0
      %v950 = vsel %vm757, 1, 0
      %v951 = vsel %vm758, 1, 0
      %v952 = vsel %vm759, 1, 0
      %v953 = vsel %vm760, 1, 0
      %vm954 = vcmp.eq.s32.totalorder %v922, 1
      %vm955 = vcmp.eq.s32.totalorder %v923, 1
      %vm956 = vcmp.eq.s32.totalorder %v924, 1
      %vm957 = vcmp.eq.s32.totalorder %v925, 1
      %vm958 = vcmp.eq.s32.totalorder %v926, 1
      %vm959 = vcmp.eq.s32.totalorder %v927, 1
      %vm960 = vcmp.eq.s32.totalorder %v928, 1
      %vm961 = vcmp.eq.s32.totalorder %v929, 1
      %vm962 = vcmp.eq.s32.totalorder %v930, 1
      %vm963 = vcmp.eq.s32.totalorder %v931, 1
      %vm964 = vcmp.eq.s32.totalorder %v932, 1
      %vm965 = vcmp.eq.s32.totalorder %v933, 1
      %vm966 = vcmp.eq.s32.totalorder %v934, 1
      %vm967 = vcmp.eq.s32.totalorder %v935, 1
      %vm968 = vcmp.eq.s32.totalorder %v936, 1
      %vm969 = vcmp.eq.s32.totalorder %v937, 1
      %vm970 = vcmp.eq.s32.totalorder %v938, 1
      %vm971 = vcmp.eq.s32.totalorder %v939, 1
      %vm972 = vcmp.eq.s32.totalorder %v940, 1
      %vm973 = vcmp.eq.s32.totalorder %v941, 1
      %vm974 = vcmp.eq.s32.totalorder %v942, 1
      %vm975 = vcmp.eq.s32.totalorder %v943, 1
      %vm976 = vcmp.eq.s32.totalorder %v944, 1
      %vm977 = vcmp.eq.s32.totalorder %v945, 1
      %vm978 = vcmp.eq.s32.totalorder %v946, 1
      %vm979 = vcmp.eq.s32.totalorder %v947, 1
      %vm980 = vcmp.eq.s32.totalorder %v948, 1
      %vm981 = vcmp.eq.s32.totalorder %v949, 1
      %vm982 = vcmp.eq.s32.totalorder %v950, 1
      %vm983 = vcmp.eq.s32.totalorder %v951, 1
      %vm984 = vcmp.eq.s32.totalorder %v952, 1
      %vm985 = vcmp.eq.s32.totalorder %v953, 1
      %v986 = vsel %vm954, %v921, 0.0
      %v987 = vsel %vm955, %v828, 0.0
      %v988 = vsel %vm956, %v830, 0.0
      %v989 = vsel %vm957, %v832, 0.0
      %v990 = vsel %vm958, %v834, 0.0
      %v991 = vsel %vm959, %v836, 0.0
      %v992 = vsel %vm960, %v838, 0.0
      %v993 = vsel %vm961, %v840, 0.0
      %v994 = vsel %vm962, %v842, 0.0
      %v995 = vsel %vm963, %v844, 0.0
      %v996 = vsel %vm964, %v846, 0.0
      %v997 = vsel %vm965, %v848, 0.0
      %v998 = vsel %vm966, %v850, 0.0
      %v999 = vsel %vm967, %v852, 0.0
      %v1000 = vsel %vm968, %v854, 0.0
      %v1001 = vsel %vm969, %v856, 0.0
      %v1002 = vsel %vm970, %v858, 0.0
      %v1003 = vsel %vm971, %v860, 0.0
      %v1004 = vsel %vm972, %v862, 0.0
      %v1005 = vsel %vm973, %v864, 0.0
      %v1006 = vsel %vm974, %v866, 0.0
      %v1007 = vsel %vm975, %v868, 0.0
      %v1008 = vsel %vm976, %v870, 0.0
      %v1009 = vsel %vm977, %v872, 0.0
      %v1010 = vsel %vm978, %v874, 0.0
      %v1011 = vsel %vm979, %v876, 0.0
      %v1012 = vsel %vm980, %v878, 0.0
      %v1013 = vsel %vm981, %v880, 0.0
      %v1014 = vsel %vm982, %v882, 0.0
      %v1015 = vsel %vm983, %v884, 0.0
      %v1016 = vsel %vm984, %v886, 0.0
      %v1017 = vsel %vm985, %v888, 0.0
      %vm1018 = vcmask 1046528
      %v1019 = vrot.slane %v280, 1
      %v1020 = vrot.slane %v281, 1
      %v1021 = vsel %vm1018, %v1019, %v1020
      %v1022 = vrot.slane %v282, 1
      %v1023 = vsel %vm1018, %v1020, %v1022
      %v1024 = vrot.slane %v283, 1
      %v1025 = vsel %vm1018, %v1022, %v1024
      %v1026 = vrot.slane %v284, 1
      %v1027 = vsel %vm1018, %v1024, %v1026
      %v1028 = vrot.slane %v285, 1
      %v1029 = vsel %vm1018, %v1026, %v1028
      %v1030 = vrot.slane %v286, 1
      %v1031 = vsel %vm1018, %v1028, %v1030
      %v1032 = vrot.slane %v287, 1
      %v1033 = vsel %vm1018, %v1030, %v1032
      %v1034 = vrot.slane %v288, 1
      %v1035 = vsel %vm1018, %v1032, %v1034
      %v1036 = vrot.slane %v289, 1
      %v1037 = vsel %vm1018, %v1034, %v1036
      %v1038 = vrot.slane %v290, 1
      %v1039 = vsel %vm1018, %v1036, %v1038
      %v1040 = vrot.slane %v291, 1
      %v1041 = vsel %vm1018, %v1038, %v1040
      %v1042 = vrot.slane %v292, 1
      %v1043 = vsel %vm1018, %v1040, %v1042
      %v1044 = vrot.slane %v293, 1
      %v1045 = vsel %vm1018, %v1042, %v1044
      %v1046 = vrot.slane %v294, 1
      %v1047 = vsel %vm1018, %v1044, %v1046
      %v1048 = vrot.slane %v295, 1
      %v1049 = vsel %vm1018, %v1046, %v1048
      %v1050 = vrot.slane %v296, 1
      %v1051 = vsel %vm1018, %v1048, %v1050
      %v1052 = vrot.slane %v297, 1
      %v1053 = vsel %vm1018, %v1050, %v1052
      %v1054 = vrot.slane %v298, 1
      %v1055 = vsel %vm1018, %v1052, %v1054
      %v1056 = vrot.slane %v299, 1
      %v1057 = vsel %vm1018, %v1054, %v1056
      %v1058 = vrot.slane %v300, 1
      %v1059 = vsel %vm1018, %v1056, %v1058
      %v1060 = vrot.slane %v301, 1
      %v1061 = vsel %vm1018, %v1058, %v1060
      %v1062 = vrot.slane %v302, 1
      %v1063 = vsel %vm1018, %v1060, %v1062
      %v1064 = vrot.slane %v303, 1
      %v1065 = vsel %vm1018, %v1062, %v1064
      %v1066 = vrot.slane %v304, 1
      %v1067 = vsel %vm1018, %v1064, %v1066
      %v1068 = vrot.slane %v305, 1
      %v1069 = vsel %vm1018, %v1066, %v1068
      %v1070 = vrot.slane %v306, 1
      %v1071 = vsel %vm1018, %v1068, %v1070
      %v1072 = vrot.slane %v307, 1
      %v1073 = vsel %vm1018, %v1070, %v1072
      %v1074 = vrot.slane %v308, 1
      %v1075 = vsel %vm1018, %v1072, %v1074
      %v1076 = vrot.slane %v309, 1
      %v1077 = vsel %vm1018, %v1074, %v1076
      %v1078 = vrot.slane %v310, 1
      %v1079 = vsel %vm1018, %v1076, %v1078
      %v1080 = vrot.slane %v311, 1
      %v1081 = vsel %vm1018, %v1078, %v1080
      %v1114 = vsel %vm1018, %v1080, 0.0
      %v1115 = vsel %vm761, 1, 0
      %v1116 = vsel %vm762, 1, 0
      %v1117 = vsel %vm763, 1, 0
      %v1118 = vsel %vm764, 1, 0
      %v1119 = vsel %vm765, 1, 0
      %v1120 = vsel %vm766, 1, 0
      %v1121 = vsel %vm767, 1, 0
      %v1122 = vsel %vm768, 1, 0
      %v1123 = vsel %vm769, 1, 0
      %v1124 = vsel %vm770, 1, 0
      %v1125 = vsel %vm771, 1, 0
      %v1126 = vsel %vm772, 1, 0
      %v1127 = vsel %vm773, 1, 0
      %v1128 = vsel %vm774, 1, 0
      %v1129 = vsel %vm775, 1, 0
      %v1130 = vsel %vm776, 1, 0
      %v1131 = vsel %vm777, 1, 0
      %v1132 = vsel %vm778, 1, 0
      %v1133 = vsel %vm779, 1, 0
      %v1134 = vsel %vm780, 1, 0
      %v1135 = vsel %vm781, 1, 0
      %v1136 = vsel %vm782, 1, 0
      %v1137 = vsel %vm783, 1, 0
      %v1138 = vsel %vm784, 1, 0
      %v1139 = vsel %vm785, 1, 0
      %v1140 = vsel %vm786, 1, 0
      %v1141 = vsel %vm787, 1, 0
      %v1142 = vsel %vm788, 1, 0
      %v1143 = vsel %vm789, 1, 0
      %v1144 = vsel %vm790, 1, 0
      %v1145 = vsel %vm791, 1, 0
      %v1146 = vsel %vm792, 1, 0
      %vm1147 = vcmp.eq.s32.totalorder %v1115, 1
      %vm1148 = vcmp.eq.s32.totalorder %v1116, 1
      %vm1149 = vcmp.eq.s32.totalorder %v1117, 1
      %vm1150 = vcmp.eq.s32.totalorder %v1118, 1
      %vm1151 = vcmp.eq.s32.totalorder %v1119, 1
      %vm1152 = vcmp.eq.s32.totalorder %v1120, 1
      %vm1153 = vcmp.eq.s32.totalorder %v1121, 1
      %vm1154 = vcmp.eq.s32.totalorder %v1122, 1
      %vm1155 = vcmp.eq.s32.totalorder %v1123, 1
      %vm1156 = vcmp.eq.s32.totalorder %v1124, 1
      %vm1157 = vcmp.eq.s32.totalorder %v1125, 1
      %vm1158 = vcmp.eq.s32.totalorder %v1126, 1
      %vm1159 = vcmp.eq.s32.totalorder %v1127, 1
      %vm1160 = vcmp.eq.s32.totalorder %v1128, 1
      %vm1161 = vcmp.eq.s32.totalorder %v1129, 1
      %vm1162 = vcmp.eq.s32.totalorder %v1130, 1
      %vm1163 = vcmp.eq.s32.totalorder %v1131, 1
      %vm1164 = vcmp.eq.s32.totalorder %v1132, 1
      %vm1165 = vcmp.eq.s32.totalorder %v1133, 1
      %vm1166 = vcmp.eq.s32.totalorder %v1134, 1
      %vm1167 = vcmp.eq.s32.totalorder %v1135, 1
      %vm1168 = vcmp.eq.s32.totalorder %v1136, 1
      %vm1169 = vcmp.eq.s32.totalorder %v1137, 1
      %vm1170 = vcmp.eq.s32.totalorder %v1138, 1
      %vm1171 = vcmp.eq.s32.totalorder %v1139, 1
      %vm1172 = vcmp.eq.s32.totalorder %v1140, 1
      %vm1173 = vcmp.eq.s32.totalorder %v1141, 1
      %vm1174 = vcmp.eq.s32.totalorder %v1142, 1
      %vm1175 = vcmp.eq.s32.totalorder %v1143, 1
      %vm1176 = vcmp.eq.s32.totalorder %v1144, 1
      %vm1177 = vcmp.eq.s32.totalorder %v1145, 1
      %vm1178 = vcmp.eq.s32.totalorder %v1146, 1
      %v1179 = vsel %vm1147, %v1021, 0.0
      %v1180 = vsel %vm1148, %v1023, 0.0
      %v1181 = vsel %vm1149, %v1025, 0.0
      %v1182 = vsel %vm1150, %v1027, 0.0
      %v1183 = vsel %vm1151, %v1029, 0.0
      %v1184 = vsel %vm1152, %v1031, 0.0
      %v1185 = vsel %vm1153, %v1033, 0.0
      %v1186 = vsel %vm1154, %v1035, 0.0
      %v1187 = vsel %vm1155, %v1037, 0.0
      %v1188 = vsel %vm1156, %v1039, 0.0
      %v1189 = vsel %vm1157, %v1041, 0.0
      %v1190 = vsel %vm1158, %v1043, 0.0
      %v1191 = vsel %vm1159, %v1045, 0.0
      %v1192 = vsel %vm1160, %v1047, 0.0
      %v1193 = vsel %vm1161, %v1049, 0.0
      %v1194 = vsel %vm1162, %v1051, 0.0
      %v1195 = vsel %vm1163, %v1053, 0.0
      %v1196 = vsel %vm1164, %v1055, 0.0
      %v1197 = vsel %vm1165, %v1057, 0.0
      %v1198 = vsel %vm1166, %v1059, 0.0
      %v1199 = vsel %vm1167, %v1061, 0.0
      %v1200 = vsel %vm1168, %v1063, 0.0
      %v1201 = vsel %vm1169, %v1065, 0.0
      %v1202 = vsel %vm1170, %v1067, 0.0
      %v1203 = vsel %vm1171, %v1069, 0.0
      %v1204 = vsel %vm1172, %v1071, 0.0
      %v1205 = vsel %vm1173, %v1073, 0.0
      %v1206 = vsel %vm1174, %v1075, 0.0
      %v1207 = vsel %vm1175, %v1077, 0.0
      %v1208 = vsel %vm1176, %v1079, 0.0
      %v1209 = vsel %vm1177, %v1081, 0.0
      %v1210 = vsel %vm1178, %v1114, 0.0
      %vm1211 = vcmask 64512
      %1212 = vst.msk [vmem:[#allocation2] sm:$0xff] %vm1211, 0.0
      %1213 = vst.msk [vmem:[#allocation2 + $0x8] sm:$0xff] %vm1211, 0.0
      %1214 = vst.msk [vmem:[#allocation2 + $0x10] sm:$0xff] %vm1211, %v986
      %1215 = vst.msk [vmem:[#allocation2 + $0x18] sm:$0xff] %vm1211, %v987
      %1216 = vst.msk [vmem:[#allocation2 + $0x20] sm:$0xff] %vm1211, %v988
      %1217 = vst.msk [vmem:[#allocation2 + $0x28] sm:$0xff] %vm1211, %v989
      %1218 = vst.msk [vmem:[#allocation2 + $0x30] sm:$0xff] %vm1211, %v990
      %1219 = vst.msk [vmem:[#allocation2 + $0x38] sm:$0xff] %vm1211, %v991
      %1220 = vst.msk [vmem:[#allocation2 + $0x40] sm:$0xff] %vm1211, %v992
      %1221 = vst.msk [vmem:[#allocation2 + $0x48] sm:$0xff] %vm1211, %v993
      %1222 = vst.msk [vmem:[#allocation2 + $0x50] sm:$0xff] %vm1211, %v994
      %1223 = vst.msk [vmem:[#allocation2 + $0x58] sm:$0xff] %vm1211, %v995
      %1224 = vst.msk [vmem:[#allocation2 + $0x60] sm:$0xff] %vm1211, %v996
      %1225 = vst.msk [vmem:[#allocation2 + $0x68] sm:$0xff] %vm1211, %v997
      %1226 = vst.msk [vmem:[#allocation2 + $0x70] sm:$0xff] %vm1211, %v998
      %1227 = vst.msk [vmem:[#allocation2 + $0x78] sm:$0xff] %vm1211, %v999
      %1228 = vst.msk [vmem:[#allocation2 + $0x80] sm:$0xff] %vm1211, %v1000
      %1229 = vst.msk [vmem:[#allocation2 + $0x88] sm:$0xff] %vm1211, %v1001
      %1230 = vst.msk [vmem:[#allocation2 + $0x90] sm:$0xff] %vm1211, %v1002
      %1231 = vst.msk [vmem:[#allocation2 + $0x98] sm:$0xff] %vm1211, %v1003
      %1232 = vst.msk [vmem:[#allocation2 + $0xa0] sm:$0xff] %vm1211, %v1004
      %1233 = vst.msk [vmem:[#allocation2 + $0xa8] sm:$0xff] %vm1211, %v1005
      %1234 = vst.msk [vmem:[#allocation2 + $0xb0] sm:$0xff] %vm1211, %v1006
      %1235 = vst.msk [vmem:[#allocation2 + $0xb8] sm:$0xff] %vm1211, %v1007
      %1236 = vst.msk [vmem:[#allocation2 + $0xc0] sm:$0xff] %vm1211, %v1008
      %1237 = vst.msk [vmem:[#allocation2 + $0xc8] sm:$0xff] %vm1211, %v1009
      %1238 = vst.msk [vmem:[#allocation2 + $0xd0] sm:$0xff] %vm1211, %v1010
      %1239 = vst.msk [vmem:[#allocation2 + $0xd8] sm:$0xff] %vm1211, %v1011
      %1240 = vst.msk [vmem:[#allocation2 + $0xe0] sm:$0xff] %vm1211, %v1012
      %1241 = vst.msk [vmem:[#allocation2 + $0xe8] sm:$0xff] %vm1211, %v1013
      %1242 = vst.msk [vmem:[#allocation2 + $0xf0] sm:$0xff] %vm1211, %v1014
      %1243 = vst.msk [vmem:[#allocation2 + $0xf8] sm:$0xff] %vm1211, %v1015
      %1276 = vrot.lane.b32.xlu0 %v986, 24
      %v1277 = vpop.permute.xlu0 %1276
      %1278 = vrot.lane.b32.xlu0 %v987, 24
      %v1279 = vpop.permute.xlu0 %1278
      %1280 = vrot.lane.b32.xlu0 %v988, 24
      %v1281 = vpop.permute.xlu0 %1280
      %1282 = vrot.lane.b32.xlu0 %v989, 24
      %v1283 = vpop.permute.xlu0 %1282
      %1284 = vrot.lane.b32.xlu0 %v990, 24
      %v1285 = vpop.permute.xlu0 %1284
      %1286 = vrot.lane.b32.xlu0 %v991, 24
      %v1287 = vpop.permute.xlu0 %1286
      %1288 = vrot.lane.b32.xlu0 %v992, 24
      %v1289 = vpop.permute.xlu0 %1288
      %1290 = vrot.lane.b32.xlu0 %v993, 24
      %v1291 = vpop.permute.xlu0 %1290
      %1292 = vrot.lane.b32.xlu0 %v994, 24
      %v1293 = vpop.permute.xlu0 %1292
      %1294 = vrot.lane.b32.xlu0 %v995, 24
      %v1295 = vpop.permute.xlu0 %1294
      %1296 = vrot.lane.b32.xlu0 %v996, 24
      %v1297 = vpop.permute.xlu0 %1296
      %1298 = vrot.lane.b32.xlu0 %v997, 24
      %v1299 = vpop.permute.xlu0 %1298
      %1300 = vrot.lane.b32.xlu0 %v998, 24
      %v1301 = vpop.permute.xlu0 %1300
      %1302 = vrot.lane.b32.xlu0 %v999, 24
      %v1303 = vpop.permute.xlu0 %1302
      %1304 = vrot.lane.b32.xlu0 %v1000, 24
      %v1305 = vpop.permute.xlu0 %1304
      %1306 = vrot.lane.b32.xlu0 %v1001, 24
      %v1307 = vpop.permute.xlu0 %1306
      %1308 = vrot.lane.b32.xlu0 %v1002, 24
      %v1309 = vpop.permute.xlu0 %1308
      %1310 = vrot.lane.b32.xlu0 %v1003, 24
      %v1311 = vpop.permute.xlu0 %1310
      %1312 = vrot.lane.b32.xlu0 %v1004, 24
      %v1313 = vpop.permute.xlu0 %1312
      %1314 = vrot.lane.b32.xlu0 %v1005, 24
      %v1315 = vpop.permute.xlu0 %1314
      %1316 = vrot.lane.b32.xlu0 %v1006, 24
      %v1317 = vpop.permute.xlu0 %1316
      %1318 = vrot.lane.b32.xlu0 %v1007, 24
      %v1319 = vpop.permute.xlu0 %1318
      %1320 = vrot.lane.b32.xlu0 %v1008, 24
      %v1321 = vpop.permute.xlu0 %1320
      %1322 = vrot.lane.b32.xlu0 %v1009, 24
      %v1323 = vpop.permute.xlu0 %1322
      %1324 = vrot.lane.b32.xlu0 %v1010, 24
      %v1325 = vpop.permute.xlu0 %1324
      %1326 = vrot.lane.b32.xlu0 %v1011, 24
      %v1327 = vpop.permute.xlu0 %1326
      %1328 = vrot.lane.b32.xlu0 %v1012, 24
      %v1329 = vpop.permute.xlu0 %1328
      %1330 = vrot.lane.b32.xlu0 %v1013, 24
      %v1331 = vpop.permute.xlu0 %1330
      %1332 = vrot.lane.b32.xlu0 %v1014, 24
      %v1333 = vpop.permute.xlu0 %1332
      %1334 = vrot.lane.b32.xlu0 %v1015, 24
      %v1335 = vpop.permute.xlu0 %1334
      %1336 = vrot.lane.b32.xlu0 %v1016, 24
      %v1337 = vpop.permute.xlu0 %1336
      %1338 = vrot.lane.b32.xlu0 %v1017, 24
      %v1339 = vpop.permute.xlu0 %1338
      %vm1372 = vcmask 261312
      %1373 = vst.msk [vmem:[#allocation2] sm:$0xff] %vm1372, %v1277
      %1374 = vst.msk [vmem:[#allocation2 + $0x8] sm:$0xff] %vm1372, %v1279
      %1375 = vst.msk [vmem:[#allocation2 + $0x10] sm:$0xff] %vm1372, %v1281
      %1376 = vst.msk [vmem:[#allocation2 + $0x18] sm:$0xff] %vm1372, %v1283
      %1377 = vst.msk [vmem:[#allocation2 + $0x20] sm:$0xff] %vm1372, %v1285
      %1378 = vst.msk [vmem:[#allocation2 + $0x28] sm:$0xff] %vm1372, %v1287
      %1379 = vst.msk [vmem:[#allocation2 + $0x30] sm:$0xff] %vm1372, %v1289
      %1380 = vst.msk [vmem:[#allocation2 + $0x38] sm:$0xff] %vm1372, %v1291
      %1381 = vst.msk [vmem:[#allocation2 + $0x40] sm:$0xff] %vm1372, %v1293
      %1382 = vst.msk [vmem:[#allocation2 + $0x48] sm:$0xff] %vm1372, %v1295
      %1383 = vst.msk [vmem:[#allocation2 + $0x50] sm:$0xff] %vm1372, %v1297
      %1384 = vst.msk [vmem:[#allocation2 + $0x58] sm:$0xff] %vm1372, %v1299
      %1385 = vst.msk [vmem:[#allocation2 + $0x60] sm:$0xff] %vm1372, %v1301
      %1386 = vst.msk [vmem:[#allocation2 + $0x68] sm:$0xff] %vm1372, %v1303
      %1387 = vst.msk [vmem:[#allocation2 + $0x70] sm:$0xff] %vm1372, %v1305
      %1388 = vst.msk [vmem:[#allocation2 + $0x78] sm:$0xff] %vm1372, %v1307
      %1389 = vst.msk [vmem:[#allocation2 + $0x80] sm:$0xff] %vm1372, %v1309
      %1390 = vst.msk [vmem:[#allocation2 + $0x88] sm:$0xff] %vm1372, %v1311
      %1391 = vst.msk [vmem:[#allocation2 + $0x90] sm:$0xff] %vm1372, %v1313
      %1392 = vst.msk [vmem:[#allocation2 + $0x98] sm:$0xff] %vm1372, %v1315
      %1393 = vst.msk [vmem:[#allocation2 + $0xa0] sm:$0xff] %vm1372, %v1317
      %1394 = vst.msk [vmem:[#allocation2 + $0xa8] sm:$0xff] %vm1372, %v1319
      %1395 = vst.msk [vmem:[#allocation2 + $0xb0] sm:$0xff] %vm1372, %v1321
      %1396 = vst.msk [vmem:[#allocation2 + $0xb8] sm:$0xff] %vm1372, %v1323
      %1397 = vst.msk [vmem:[#allocation2 + $0xc0] sm:$0xff] %vm1372, %v1325
      %1398 = vst.msk [vmem:[#allocation2 + $0xc8] sm:$0xff] %vm1372, %v1327
      %1399 = vst.msk [vmem:[#allocation2 + $0xd0] sm:$0xff] %vm1372, %v1329
      %1400 = vst.msk [vmem:[#allocation2 + $0xd8] sm:$0xff] %vm1372, %v1331
      %1401 = vst.msk [vmem:[#allocation2 + $0xe0] sm:$0xff] %vm1372, %v1333
      %1402 = vst.msk [vmem:[#allocation2 + $0xe8] sm:$0xff] %vm1372, %v1335
      %1403 = vst.msk [vmem:[#allocation2 + $0xf0] sm:$0xff] %vm1372, %v1337
      %1404 = vst.msk [vmem:[#allocation2 + $0xf8] sm:$0xff] %vm1372, %v1339
      %1406 = vrot.lane.b32.xlu0 %v988, 48
      %v1407 = vpop.permute.xlu0 %1406
      %1408 = vrot.lane.b32.xlu0 %v989, 48
      %v1409 = vpop.permute.xlu0 %1408
      %1410 = vrot.lane.b32.xlu0 %v990, 48
      %v1411 = vpop.permute.xlu0 %1410
      %1412 = vrot.lane.b32.xlu0 %v991, 48
      %v1413 = vpop.permute.xlu0 %1412
      %1414 = vrot.lane.b32.xlu0 %v992, 48
      %v1415 = vpop.permute.xlu0 %1414
      %1416 = vrot.lane.b32.xlu0 %v993, 48
      %v1417 = vpop.permute.xlu0 %1416
      %1418 = vrot.lane.b32.xlu0 %v994, 48
      %v1419 = vpop.permute.xlu0 %1418
      %1420 = vrot.lane.b32.xlu0 %v995, 48
      %v1421 = vpop.permute.xlu0 %1420
      %1422 = vrot.lane.b32.xlu0 %v996, 48
      %v1423 = vpop.permute.xlu0 %1422
      %1424 = vrot.lane.b32.xlu0 %v997, 48
      %v1425 = vpop.permute.xlu0 %1424
      %1426 = vrot.lane.b32.xlu0 %v998, 48
      %v1427 = vpop.permute.xlu0 %1426
      %1428 = vrot.lane.b32.xlu0 %v999, 48
      %v1429 = vpop.permute.xlu0 %1428
      %1430 = vrot.lane.b32.xlu0 %v1000, 48
      %v1431 = vpop.permute.xlu0 %1430
      %1432 = vrot.lane.b32.xlu0 %v1001, 48
      %v1433 = vpop.permute.xlu0 %1432
      %1434 = vrot.lane.b32.xlu0 %v1002, 48
      %v1435 = vpop.permute.xlu0 %1434
      %1436 = vrot.lane.b32.xlu0 %v1003, 48
      %v1437 = vpop.permute.xlu0 %1436
      %1438 = vrot.lane.b32.xlu0 %v1004, 48
      %v1439 = vpop.permute.xlu0 %1438
      %1440 = vrot.lane.b32.xlu0 %v1005, 48
      %v1441 = vpop.permute.xlu0 %1440
      %1442 = vrot.lane.b32.xlu0 %v1006, 48
      %v1443 = vpop.permute.xlu0 %1442
      %1444 = vrot.lane.b32.xlu0 %v1007, 48
      %v1445 = vpop.permute.xlu0 %1444
      %1446 = vrot.lane.b32.xlu0 %v1008, 48
      %v1447 = vpop.permute.xlu0 %1446
      %1448 = vrot.lane.b32.xlu0 %v1009, 48
      %v1449 = vpop.permute.xlu0 %1448
      %1450 = vrot.lane.b32.xlu0 %v1010, 48
      %v1451 = vpop.permute.xlu0 %1450
      %1452 = vrot.lane.b32.xlu0 %v1011, 48
      %v1453 = vpop.permute.xlu0 %1452
      %1454 = vrot.lane.b32.xlu0 %v1012, 48
      %v1455 = vpop.permute.xlu0 %1454
      %1456 = vrot.lane.b32.xlu0 %v1013, 48
      %v1457 = vpop.permute.xlu0 %1456
      %1458 = vrot.lane.b32.xlu0 %v1014, 48
      %v1459 = vpop.permute.xlu0 %1458
      %1460 = vrot.lane.b32.xlu0 %v1015, 48
      %v1461 = vpop.permute.xlu0 %1460
      %1462 = vrot.lane.b32.xlu0 %v1016, 48
      %v1463 = vpop.permute.xlu0 %1462
      %1464 = vrot.lane.b32.xlu0 %v1017, 48
      %v1465 = vpop.permute.xlu0 %1464
      %1466 = vrot.lane.b32.xlu0 0.0, 48
      %v1467 = vpop.permute.xlu0 %1466
      %vm1499 = vcmask 458112
      %1500 = vst.msk [vmem:[#allocation2] sm:$0xff] %vm1499, %v1407
      %1501 = vst.msk [vmem:[#allocation2 + $0x8] sm:$0xff] %vm1499, %v1409
      %1502 = vst.msk [vmem:[#allocation2 + $0x10] sm:$0xff] %vm1499, %v1411
      %1503 = vst.msk [vmem:[#allocation2 + $0x18] sm:$0xff] %vm1499, %v1413
      %1504 = vst.msk [vmem:[#allocation2 + $0x20] sm:$0xff] %vm1499, %v1415
      %1505 = vst.msk [vmem:[#allocation2 + $0x28] sm:$0xff] %vm1499, %v1417
      %1506 = vst.msk [vmem:[#allocation2 + $0x30] sm:$0xff] %vm1499, %v1419
      %1507 = vst.msk [vmem:[#allocation2 + $0x38] sm:$0xff] %vm1499, %v1421
      %1508 = vst.msk [vmem:[#allocation2 + $0x40] sm:$0xff] %vm1499, %v1423
      %1509 = vst.msk [vmem:[#allocation2 + $0x48] sm:$0xff] %vm1499, %v1425
      %1510 = vst.msk [vmem:[#allocation2 + $0x50] sm:$0xff] %vm1499, %v1427
      %1511 = vst.msk [vmem:[#allocation2 + $0x58] sm:$0xff] %vm1499, %v1429
      %1512 = vst.msk [vmem:[#allocation2 + $0x60] sm:$0xff] %vm1499, %v1431
      %1513 = vst.msk [vmem:[#allocation2 + $0x68] sm:$0xff] %vm1499, %v1433
      %1514 = vst.msk [vmem:[#allocation2 + $0x70] sm:$0xff] %vm1499, %v1435
      %1515 = vst.msk [vmem:[#allocation2 + $0x78] sm:$0xff] %vm1499, %v1437
      %1516 = vst.msk [vmem:[#allocation2 + $0x80] sm:$0xff] %vm1499, %v1439
      %1517 = vst.msk [vmem:[#allocation2 + $0x88] sm:$0xff] %vm1499, %v1441
      %1518 = vst.msk [vmem:[#allocation2 + $0x90] sm:$0xff] %vm1499, %v1443
      %1519 = vst.msk [vmem:[#allocation2 + $0x98] sm:$0xff] %vm1499, %v1445
      %1520 = vst.msk [vmem:[#allocation2 + $0xa0] sm:$0xff] %vm1499, %v1447
      %1521 = vst.msk [vmem:[#allocation2 + $0xa8] sm:$0xff] %vm1499, %v1449
      %1522 = vst.msk [vmem:[#allocation2 + $0xb0] sm:$0xff] %vm1499, %v1451
      %1523 = vst.msk [vmem:[#allocation2 + $0xb8] sm:$0xff] %vm1499, %v1453
      %1524 = vst.msk [vmem:[#allocation2 + $0xc0] sm:$0xff] %vm1499, %v1455
      %1525 = vst.msk [vmem:[#allocation2 + $0xc8] sm:$0xff] %vm1499, %v1457
      %1526 = vst.msk [vmem:[#allocation2 + $0xd0] sm:$0xff] %vm1499, %v1459
      %1527 = vst.msk [vmem:[#allocation2 + $0xd8] sm:$0xff] %vm1499, %v1461
      %1528 = vst.msk [vmem:[#allocation2 + $0xe0] sm:$0xff] %vm1499, %v1463
      %1529 = vst.msk [vmem:[#allocation2 + $0xe8] sm:$0xff] %vm1499, %v1465
      %1530 = vst.msk [vmem:[#allocation2 + $0xf0] sm:$0xff] %vm1499, %v1467
      %1531 = vst.msk [vmem:[#allocation2 + $0xf8] sm:$0xff] %vm1499, %v1467
      %1532 = vrot.lane.b32.xlu0 0.0, 8
      %v1533 = vpop.permute.xlu0 %1532
      %1534 = vrot.lane.b32.xlu0 %v280, 8
      %v1535 = vpop.permute.xlu0 %1534
      %1536 = vrot.lane.b32.xlu0 %v281, 8
      %v1537 = vpop.permute.xlu0 %1536
      %1538 = vrot.lane.b32.xlu0 %v282, 8
      %v1539 = vpop.permute.xlu0 %1538
      %1540 = vrot.lane.b32.xlu0 %v283, 8
      %v1541 = vpop.permute.xlu0 %1540
      %1542 = vrot.lane.b32.xlu0 %v284, 8
      %v1543 = vpop.permute.xlu0 %1542
      %1544 = vrot.lane.b32.xlu0 %v285, 8
      %v1545 = vpop.permute.xlu0 %1544
      %1546 = vrot.lane.b32.xlu0 %v286, 8
      %v1547 = vpop.permute.xlu0 %1546
      %1548 = vrot.lane.b32.xlu0 %v287, 8
      %v1549 = vpop.permute.xlu0 %1548
      %1550 = vrot.lane.b32.xlu0 %v288, 8
      %v1551 = vpop.permute.xlu0 %1550
      %1552 = vrot.lane.b32.xlu0 %v289, 8
      %v1553 = vpop.permute.xlu0 %1552
      %1554 = vrot.lane.b32.xlu0 %v290, 8
      %v1555 = vpop.permute.xlu0 %1554
      %1556 = vrot.lane.b32.xlu0 %v291, 8
      %v1557 = vpop.permute.xlu0 %1556
      %1558 = vrot.lane.b32.xlu0 %v292, 8
      %v1559 = vpop.permute.xlu0 %1558
      %1560 = vrot.lane.b32.xlu0 %v293, 8
      %v1561 = vpop.permute.xlu0 %1560
      %1562 = vrot.lane.b32.xlu0 %v294, 8
      %v1563 = vpop.permute.xlu0 %1562
      %1564 = vrot.lane.b32.xlu0 %v295, 8
      %v1565 = vpop.permute.xlu0 %1564
      %1566 = vrot.lane.b32.xlu0 %v296, 8
      %v1567 = vpop.permute.xlu0 %1566
      %1568 = vrot.lane.b32.xlu0 %v297, 8
      %v1569 = vpop.permute.xlu0 %1568
      %1570 = vrot.lane.b32.xlu0 %v298, 8
      %v1571 = vpop.permute.xlu0 %1570
      %1572 = vrot.lane.b32.xlu0 %v299, 8
      %v1573 = vpop.permute.xlu0 %1572
      %1574 = vrot.lane.b32.xlu0 %v300, 8
      %v1575 = vpop.permute.xlu0 %1574
      %1576 = vrot.lane.b32.xlu0 %v301, 8
      %v1577 = vpop.permute.xlu0 %1576
      %1578 = vrot.lane.b32.xlu0 %v302, 8
      %v1579 = vpop.permute.xlu0 %1578
      %1580 = vrot.lane.b32.xlu0 %v303, 8
      %v1581 = vpop.permute.xlu0 %1580
      %1582 = vrot.lane.b32.xlu0 %v304, 8
      %v1583 = vpop.permute.xlu0 %1582
      %1584 = vrot.lane.b32.xlu0 %v305, 8
      %v1585 = vpop.permute.xlu0 %1584
      %1586 = vrot.lane.b32.xlu0 %v306, 8
      %v1587 = vpop.permute.xlu0 %1586
      %1588 = vrot.lane.b32.xlu0 %v307, 8
      %v1589 = vpop.permute.xlu0 %1588
      %1590 = vrot.lane.b32.xlu0 %v308, 8
      %v1591 = vpop.permute.xlu0 %1590
      %1592 = vrot.lane.b32.xlu0 %v309, 8
      %v1593 = vpop.permute.xlu0 %1592
      %vm1625 = vcmask 130112
      %1626 = vst.msk [vmem:[#allocation2] sm:$0xff] %vm1625, %v1533
      %1627 = vst.msk [vmem:[#allocation2 + $0x8] sm:$0xff] %vm1625, %v1533
      %1628 = vst.msk [vmem:[#allocation2 + $0x10] sm:$0xff] %vm1625, %v1535
      %1629 = vst.msk [vmem:[#allocation2 + $0x18] sm:$0xff] %vm1625, %v1537
      %1630 = vst.msk [vmem:[#allocation2 + $0x20] sm:$0xff] %vm1625, %v1539
      %1631 = vst.msk [vmem:[#allocation2 + $0x28] sm:$0xff] %vm1625, %v1541
      %1632 = vst.msk [vmem:[#allocation2 + $0x30] sm:$0xff] %vm1625, %v1543
      %1633 = vst.msk [vmem:[#allocation2 + $0x38] sm:$0xff] %vm1625, %v1545
      %1634 = vst.msk [vmem:[#allocation2 + $0x40] sm:$0xff] %vm1625, %v1547
      %1635 = vst.msk [vmem:[#allocation2 + $0x48] sm:$0xff] %vm1625, %v1549
      %1636 = vst.msk [vmem:[#allocation2 + $0x50] sm:$0xff] %vm1625, %v1551
      %1637 = vst.msk [vmem:[#allocation2 + $0x58] sm:$0xff] %vm1625, %v1553
      %1638 = vst.msk [vmem:[#allocation2 + $0x60] sm:$0xff] %vm1625, %v1555
      %1639 = vst.msk [vmem:[#allocation2 + $0x68] sm:$0xff] %vm1625, %v1557
      %1640 = vst.msk [vmem:[#allocation2 + $0x70] sm:$0xff] %vm1625, %v1559
      %1641 = vst.msk [vmem:[#allocation2 + $0x78] sm:$0xff] %vm1625, %v1561
      %1642 = vst.msk [vmem:[#allocation2 + $0x80] sm:$0xff] %vm1625, %v1563
      %1643 = vst.msk [vmem:[#allocation2 + $0x88] sm:$0xff] %vm1625, %v1565
      %1644 = vst.msk [vmem:[#allocation2 + $0x90] sm:$0xff] %vm1625, %v1567
      %1645 = vst.msk [vmem:[#allocation2 + $0x98] sm:$0xff] %vm1625, %v1569
      %1646 = vst.msk [vmem:[#allocation2 + $0xa0] sm:$0xff] %vm1625, %v1571
      %1647 = vst.msk [vmem:[#allocation2 + $0xa8] sm:$0xff] %vm1625, %v1573
      %1648 = vst.msk [vmem:[#allocation2 + $0xb0] sm:$0xff] %vm1625, %v1575
      %1649 = vst.msk [vmem:[#allocation2 + $0xb8] sm:$0xff] %vm1625, %v1577
      %1650 = vst.msk [vmem:[#allocation2 + $0xc0] sm:$0xff] %vm1625, %v1579
      %1651 = vst.msk [vmem:[#allocation2 + $0xc8] sm:$0xff] %vm1625, %v1581
      %1652 = vst.msk [vmem:[#allocation2 + $0xd0] sm:$0xff] %vm1625, %v1583
      %1653 = vst.msk [vmem:[#allocation2 + $0xd8] sm:$0xff] %vm1625, %v1585
      %1654 = vst.msk [vmem:[#allocation2 + $0xe0] sm:$0xff] %vm1625, %v1587
      %1655 = vst.msk [vmem:[#allocation2 + $0xe8] sm:$0xff] %vm1625, %v1589
      %1656 = vst.msk [vmem:[#allocation2 + $0xf0] sm:$0xff] %vm1625, %v1591
      %1657 = vst.msk [vmem:[#allocation2 + $0xf8] sm:$0xff] %vm1625, %v1593
      %1658 = vrot.lane.b32.xlu0 %v280, 32
      %v1659 = vpop.permute.xlu0 %1658
      %1660 = vrot.lane.b32.xlu0 %v281, 32
      %v1661 = vpop.permute.xlu0 %1660
      %1662 = vrot.lane.b32.xlu0 %v282, 32
      %v1663 = vpop.permute.xlu0 %1662
      %1664 = vrot.lane.b32.xlu0 %v283, 32
      %v1665 = vpop.permute.xlu0 %1664
      %1666 = vrot.lane.b32.xlu0 %v284, 32
      %v1667 = vpop.permute.xlu0 %1666
      %1668 = vrot.lane.b32.xlu0 %v285, 32
      %v1669 = vpop.permute.xlu0 %1668
      %1670 = vrot.lane.b32.xlu0 %v286, 32
      %v1671 = vpop.permute.xlu0 %1670
      %1672 = vrot.lane.b32.xlu0 %v287, 32
      %v1673 = vpop.permute.xlu0 %1672
      %1674 = vrot.lane.b32.xlu0 %v288, 32
      %v1675 = vpop.permute.xlu0 %1674
      %1676 = vrot.lane.b32.xlu0 %v289, 32
      %v1677 = vpop.permute.xlu0 %1676
      %1678 = vrot.lane.b32.xlu0 %v290, 32
      %v1679 = vpop.permute.xlu0 %1678
      %1680 = vrot.lane.b32.xlu0 %v291, 32
      %v1681 = vpop.permute.xlu0 %1680
      %1682 = vrot.lane.b32.xlu0 %v292, 32
      %v1683 = vpop.permute.xlu0 %1682
      %1684 = vrot.lane.b32.xlu0 %v293, 32
      %v1685 = vpop.permute.xlu0 %1684
      %1686 = vrot.lane.b32.xlu0 %v294, 32
      %v1687 = vpop.permute.xlu0 %1686
      %1688 = vrot.lane.b32.xlu0 %v295, 32
      %v1689 = vpop.permute.xlu0 %1688
      %1690 = vrot.lane.b32.xlu0 %v296, 32
      %v1691 = vpop.permute.xlu0 %1690
      %1692 = vrot.lane.b32.xlu0 %v297, 32
      %v1693 = vpop.permute.xlu0 %1692
      %1694 = vrot.lane.b32.xlu0 %v298, 32
      %v1695 = vpop.permute.xlu0 %1694
      %1696 = vrot.lane.b32.xlu0 %v299, 32
      %v1697 = vpop.permute.xlu0 %1696
      %1698 = vrot.lane.b32.xlu0 %v300, 32
      %v1699 = vpop.permute.xlu0 %1698
      %1700 = vrot.lane.b32.xlu0 %v301, 32
      %v1701 = vpop.permute.xlu0 %1700
      %1702 = vrot.lane.b32.xlu0 %v302, 32
      %v1703 = vpop.permute.xlu0 %1702
      %1704 = vrot.lane.b32.xlu0 %v303, 32
      %v1705 = vpop.permute.xlu0 %1704
      %1706 = vrot.lane.b32.xlu0 %v304, 32
      %v1707 = vpop.permute.xlu0 %1706
      %1708 = vrot.lane.b32.xlu0 %v305, 32
      %v1709 = vpop.permute.xlu0 %1708
      %1710 = vrot.lane.b32.xlu0 %v306, 32
      %v1711 = vpop.permute.xlu0 %1710
      %1712 = vrot.lane.b32.xlu0 %v307, 32
      %v1713 = vpop.permute.xlu0 %1712
      %1714 = vrot.lane.b32.xlu0 %v308, 32
      %v1715 = vpop.permute.xlu0 %1714
      %1716 = vrot.lane.b32.xlu0 %v309, 32
      %v1717 = vpop.permute.xlu0 %1716
      %1718 = vrot.lane.b32.xlu0 %v310, 32
      %v1719 = vpop.permute.xlu0 %1718
      %1720 = vrot.lane.b32.xlu0 %v311, 32
      %v1721 = vpop.permute.xlu0 %1720
      %vm1754 = vcmask 326912
      %1755 = vst.msk [vmem:[#allocation2] sm:$0xff] %vm1754, %v1659
      %1756 = vst.msk [vmem:[#allocation2 + $0x8] sm:$0xff] %vm1754, %v1661
      %1757 = vst.msk [vmem:[#allocation2 + $0x10] sm:$0xff] %vm1754, %v1663
      %1758 = vst.msk [vmem:[#allocation2 + $0x18] sm:$0xff] %vm1754, %v1665
      %1759 = vst.msk [vmem:[#allocation2 + $0x20] sm:$0xff] %vm1754, %v1667
      %1760 = vst.msk [vmem:[#allocation2 + $0x28] sm:$0xff] %vm1754, %v1669
      %1761 = vst.msk [vmem:[#allocation2 + $0x30] sm:$0xff] %vm1754, %v1671
      %1762 = vst.msk [vmem:[#allocation2 + $0x38] sm:$0xff] %vm1754, %v1673
      %1763 = vst.msk [vmem:[#allocation2 + $0x40] sm:$0xff] %vm1754, %v1675
      %1764 = vst.msk [vmem:[#allocation2 + $0x48] sm:$0xff] %vm1754, %v1677
      %1765 = vst.msk [vmem:[#allocation2 + $0x50] sm:$0xff] %vm1754, %v1679
      %1766 = vst.msk [vmem:[#allocation2 + $0x58] sm:$0xff] %vm1754, %v1681
      %1767 = vst.msk [vmem:[#allocation2 + $0x60] sm:$0xff] %vm1754, %v1683
      %1768 = vst.msk [vmem:[#allocation2 + $0x68] sm:$0xff] %vm1754, %v1685
      %1769 = vst.msk [vmem:[#allocation2 + $0x70] sm:$0xff] %vm1754, %v1687
      %1770 = vst.msk [vmem:[#allocation2 + $0x78] sm:$0xff] %vm1754, %v1689
      %1771 = vst.msk [vmem:[#allocation2 + $0x80] sm:$0xff] %vm1754, %v1691
      %1772 = vst.msk [vmem:[#allocation2 + $0x88] sm:$0xff] %vm1754, %v1693
      %1773 = vst.msk [vmem:[#allocation2 + $0x90] sm:$0xff] %vm1754, %v1695
      %1774 = vst.msk [vmem:[#allocation2 + $0x98] sm:$0xff] %vm1754, %v1697
      %1775 = vst.msk [vmem:[#allocation2 + $0xa0] sm:$0xff] %vm1754, %v1699
      %1776 = vst.msk [vmem:[#allocation2 + $0xa8] sm:$0xff] %vm1754, %v1701
      %1777 = vst.msk [vmem:[#allocation2 + $0xb0] sm:$0xff] %vm1754, %v1703
      %1778 = vst.msk [vmem:[#allocation2 + $0xb8] sm:$0xff] %vm1754, %v1705
      %1779 = vst.msk [vmem:[#allocation2 + $0xc0] sm:$0xff] %vm1754, %v1707
      %1780 = vst.msk [vmem:[#allocation2 + $0xc8] sm:$0xff] %vm1754, %v1709
      %1781 = vst.msk [vmem:[#allocation2 + $0xd0] sm:$0xff] %vm1754, %v1711
      %1782 = vst.msk [vmem:[#allocation2 + $0xd8] sm:$0xff] %vm1754, %v1713
      %1783 = vst.msk [vmem:[#allocation2 + $0xe0] sm:$0xff] %vm1754, %v1715
      %1784 = vst.msk [vmem:[#allocation2 + $0xe8] sm:$0xff] %vm1754, %v1717
      %1785 = vst.msk [vmem:[#allocation2 + $0xf0] sm:$0xff] %vm1754, %v1719
      %1786 = vst.msk [vmem:[#allocation2 + $0xf8] sm:$0xff] %vm1754, %v1721
      %1787 = vrot.lane.b32.xlu0 %v282, 56
      %v1788 = vpop.permute.xlu0 %1787
      %1789 = vrot.lane.b32.xlu0 %v283, 56
      %v1790 = vpop.permute.xlu0 %1789
      %1791 = vrot.lane.b32.xlu0 %v284, 56
      %v1792 = vpop.permute.xlu0 %1791
      %1793 = vrot.lane.b32.xlu0 %v285, 56
      %v1794 = vpop.permute.xlu0 %1793
      %1795 = vrot.lane.b32.xlu0 %v286, 56
      %v1796 = vpop.permute.xlu0 %1795
      %1797 = vrot.lane.b32.xlu0 %v287, 56
      %v1798 = vpop.permute.xlu0 %1797
      %1799 = vrot.lane.b32.xlu0 %v288, 56
      %v1800 = vpop.permute.xlu0 %1799
      %1801 = vrot.lane.b32.xlu0 %v289, 56
      %v1802 = vpop.permute.xlu0 %1801
      %1803 = vrot.lane.b32.xlu0 %v290, 56
      %v1804 = vpop.permute.xlu0 %1803
      %1805 = vrot.lane.b32.xlu0 %v291, 56
      %v1806 = vpop.permute.xlu0 %1805
      %1807 = vrot.lane.b32.xlu0 %v292, 56
      %v1808 = vpop.permute.xlu0 %1807
      %1809 = vrot.lane.b32.xlu0 %v293, 56
      %v1810 = vpop.permute.xlu0 %1809
      %1811 = vrot.lane.b32.xlu0 %v294, 56
      %v1812 = vpop.permute.xlu0 %1811
      %1813 = vrot.lane.b32.xlu0 %v295, 56
      %v1814 = vpop.permute.xlu0 %1813
      %1815 = vrot.lane.b32.xlu0 %v296, 56
      %v1816 = vpop.permute.xlu0 %1815
      %1817 = vrot.lane.b32.xlu0 %v297, 56
      %v1818 = vpop.permute.xlu0 %1817
      %1819 = vrot.lane.b32.xlu0 %v298, 56
      %v1820 = vpop.permute.xlu0 %1819
      %1821 = vrot.lane.b32.xlu0 %v299, 56
      %v1822 = vpop.permute.xlu0 %1821
      %1823 = vrot.lane.b32.xlu0 %v300, 56
      %v1824 = vpop.permute.xlu0 %1823
      %1825 = vrot.lane.b32.xlu0 %v301, 56
      %v1826 = vpop.permute.xlu0 %1825
      %1827 = vrot.lane.b32.xlu0 %v302, 56
      %v1828 = vpop.permute.xlu0 %1827
      %1829 = vrot.lane.b32.xlu0 %v303, 56
      %v1830 = vpop.permute.xlu0 %1829
      %1831 = vrot.lane.b32.xlu0 %v304, 56
      %v1832 = vpop.permute.xlu0 %1831
      %1833 = vrot.lane.b32.xlu0 %v305, 56
      %v1834 = vpop.permute.xlu0 %1833
      %1835 = vrot.lane.b32.xlu0 %v306, 56
      %v1836 = vpop.permute.xlu0 %1835
      %1837 = vrot.lane.b32.xlu0 %v307, 56
      %v1838 = vpop.permute.xlu0 %1837
      %1839 = vrot.lane.b32.xlu0 %v308, 56
      %v1840 = vpop.permute.xlu0 %1839
      %1841 = vrot.lane.b32.xlu0 %v309, 56
      %v1842 = vpop.permute.xlu0 %1841
      %1843 = vrot.lane.b32.xlu0 %v310, 56
      %v1844 = vpop.permute.xlu0 %1843
      %1845 = vrot.lane.b32.xlu0 %v311, 56
      %v1846 = vpop.permute.xlu0 %1845
      %1847 = vrot.lane.b32.xlu0 0.0, 56
      %v1848 = vpop.permute.xlu0 %1847
      %vm1880 = vcmask 523712
      %1881 = vst.msk [vmem:[#allocation2] sm:$0xff] %vm1880, %v1788
      %1882 = vst.msk [vmem:[#allocation2 + $0x8] sm:$0xff] %vm1880, %v1790
      %1883 = vst.msk [vmem:[#allocation2 + $0x10] sm:$0xff] %vm1880, %v1792
      %1884 = vst.msk [vmem:[#allocation2 + $0x18] sm:$0xff] %vm1880, %v1794
      %1885 = vst.msk [vmem:[#allocation2 + $0x20] sm:$0xff] %vm1880, %v1796
      %1886 = vst.msk [vmem:[#allocation2 + $0x28] sm:$0xff] %vm1880, %v1798
      %1887 = vst.msk [vmem:[#allocation2 + $0x30] sm:$0xff] %vm1880, %v1800
      %1888 = vst.msk [vmem:[#allocation2 + $0x38] sm:$0xff] %vm1880, %v1802
      %1889 = vst.msk [vmem:[#allocation2 + $0x40] sm:$0xff] %vm1880, %v1804
      %1890 = vst.msk [vmem:[#allocation2 + $0x48] sm:$0xff] %vm1880, %v1806
      %1891 = vst.msk [vmem:[#allocation2 + $0x50] sm:$0xff] %vm1880, %v1808
      %1892 = vst.msk [vmem:[#allocation2 + $0x58] sm:$0xff] %vm1880, %v1810
      %1893 = vst.msk [vmem:[#allocation2 + $0x60] sm:$0xff] %vm1880, %v1812
      %1894 = vst.msk [vmem:[#allocation2 + $0x68] sm:$0xff] %vm1880, %v1814
      %1895 = vst.msk [vmem:[#allocation2 + $0x70] sm:$0xff] %vm1880, %v1816
      %1896 = vst.msk [vmem:[#allocation2 + $0x78] sm:$0xff] %vm1880, %v1818
      %1897 = vst.msk [vmem:[#allocation2 + $0x80] sm:$0xff] %vm1880, %v1820
      %1898 = vst.msk [vmem:[#allocation2 + $0x88] sm:$0xff] %vm1880, %v1822
      %1899 = vst.msk [vmem:[#allocation2 + $0x90] sm:$0xff] %vm1880, %v1824
      %1900 = vst.msk [vmem:[#allocation2 + $0x98] sm:$0xff] %vm1880, %v1826
      %1901 = vst.msk [vmem:[#allocation2 + $0xa0] sm:$0xff] %vm1880, %v1828
      %1902 = vst.msk [vmem:[#allocation2 + $0xa8] sm:$0xff] %vm1880, %v1830
      %1903 = vst.msk [vmem:[#allocation2 + $0xb0] sm:$0xff] %vm1880, %v1832
      %1904 = vst.msk [vmem:[#allocation2 + $0xb8] sm:$0xff] %vm1880, %v1834
      %1905 = vst.msk [vmem:[#allocation2 + $0xc0] sm:$0xff] %vm1880, %v1836
      %1906 = vst.msk [vmem:[#allocation2 + $0xc8] sm:$0xff] %vm1880, %v1838
      %1907 = vst.msk [vmem:[#allocation2 + $0xd0] sm:$0xff] %vm1880, %v1840
      %1908 = vst.msk [vmem:[#allocation2 + $0xd8] sm:$0xff] %vm1880, %v1842
      %1909 = vst.msk [vmem:[#allocation2 + $0xe0] sm:$0xff] %vm1880, %v1844
      %1910 = vst.msk [vmem:[#allocation2 + $0xe8] sm:$0xff] %vm1880, %v1846
      %1911 = vst.msk [vmem:[#allocation2 + $0xf0] sm:$0xff] %vm1880, %v1848
      %1912 = vst.msk [vmem:[#allocation2 + $0xf8] sm:$0xff] %vm1880, %v1848
      %1943 = vrot.lane.b32.xlu0 0.0, 16
      %v1944 = vpop.permute.xlu0 %1943
      %1945 = vrot.lane.b32.xlu0 %v1179, 16
      %v1946 = vpop.permute.xlu0 %1945
      %1947 = vrot.lane.b32.xlu0 %v1180, 16
      %v1948 = vpop.permute.xlu0 %1947
      %1949 = vrot.lane.b32.xlu0 %v1181, 16
      %v1950 = vpop.permute.xlu0 %1949
      %1951 = vrot.lane.b32.xlu0 %v1182, 16
      %v1952 = vpop.permute.xlu0 %1951
      %1953 = vrot.lane.b32.xlu0 %v1183, 16
      %v1954 = vpop.permute.xlu0 %1953
      %1955 = vrot.lane.b32.xlu0 %v1184, 16
      %v1956 = vpop.permute.xlu0 %1955
      %1957 = vrot.lane.b32.xlu0 %v1185, 16
      %v1958 = vpop.permute.xlu0 %1957
      %1959 = vrot.lane.b32.xlu0 %v1186, 16
      %v1960 = vpop.permute.xlu0 %1959
      %1961 = vrot.lane.b32.xlu0 %v1187, 16
      %v1962 = vpop.permute.xlu0 %1961
      %1963 = vrot.lane.b32.xlu0 %v1188, 16
      %v1964 = vpop.permute.xlu0 %1963
      %1965 = vrot.lane.b32.xlu0 %v1189, 16
      %v1966 = vpop.permute.xlu0 %1965
      %1967 = vrot.lane.b32.xlu0 %v1190, 16
      %v1968 = vpop.permute.xlu0 %1967
      %1969 = vrot.lane.b32.xlu0 %v1191, 16
      %v1970 = vpop.permute.xlu0 %1969
      %1971 = vrot.lane.b32.xlu0 %v1192, 16
      %v1972 = vpop.permute.xlu0 %1971
      %1973 = vrot.lane.b32.xlu0 %v1193, 16
      %v1974 = vpop.permute.xlu0 %1973
      %1975 = vrot.lane.b32.xlu0 %v1194, 16
      %v1976 = vpop.permute.xlu0 %1975
      %1977 = vrot.lane.b32.xlu0 %v1195, 16
      %v1978 = vpop.permute.xlu0 %1977
      %1979 = vrot.lane.b32.xlu0 %v1196, 16
      %v1980 = vpop.permute.xlu0 %1979
      %1981 = vrot.lane.b32.xlu0 %v1197, 16
      %v1982 = vpop.permute.xlu0 %1981
      %1983 = vrot.lane.b32.xlu0 %v1198, 16
      %v1984 = vpop.permute.xlu0 %1983
      %1985 = vrot.lane.b32.xlu0 %v1199, 16
      %v1986 = vpop.permute.xlu0 %1985
      %1987 = vrot.lane.b32.xlu0 %v1200, 16
      %v1988 = vpop.permute.xlu0 %1987
      %1989 = vrot.lane.b32.xlu0 %v1201, 16
      %v1990 = vpop.permute.xlu0 %1989
      %1991 = vrot.lane.b32.xlu0 %v1202, 16
      %v1992 = vpop.permute.xlu0 %1991
      %1993 = vrot.lane.b32.xlu0 %v1203, 16
      %v1994 = vpop.permute.xlu0 %1993
      %1995 = vrot.lane.b32.xlu0 %v1204, 16
      %v1996 = vpop.permute.xlu0 %1995
      %1997 = vrot.lane.b32.xlu0 %v1205, 16
      %v1998 = vpop.permute.xlu0 %1997
      %1999 = vrot.lane.b32.xlu0 %v1206, 16
      %v2000 = vpop.permute.xlu0 %1999
      %2001 = vrot.lane.b32.xlu0 %v1207, 16
      %v2002 = vpop.permute.xlu0 %2001
      %2003 = vrot.lane.b32.xlu0 %v1208, 16
      %v2004 = vpop.permute.xlu0 %2003
      %vm2036 = vcmask 195712
      %2037 = vst.msk [vmem:[#allocation2] sm:$0xff] %vm2036, %v1944
      %2038 = vst.msk [vmem:[#allocation2 + $0x8] sm:$0xff] %vm2036, %v1944
      %2039 = vst.msk [vmem:[#allocation2 + $0x10] sm:$0xff] %vm2036, %v1946
      %2040 = vst.msk [vmem:[#allocation2 + $0x18] sm:$0xff] %vm2036, %v1948
      %2041 = vst.msk [vmem:[#allocation2 + $0x20] sm:$0xff] %vm2036, %v1950
      %2042 = vst.msk [vmem:[#allocation2 + $0x28] sm:$0xff] %vm2036, %v1952
      %2043 = vst.msk [vmem:[#allocation2 + $0x30] sm:$0xff] %vm2036, %v1954
      %2044 = vst.msk [vmem:[#allocation2 + $0x38] sm:$0xff] %vm2036, %v1956
      %2045 = vst.msk [vmem:[#allocation2 + $0x40] sm:$0xff] %vm2036, %v1958
      %2046 = vst.msk [vmem:[#allocation2 + $0x48] sm:$0xff] %vm2036, %v1960
      %2047 = vst.msk [vmem:[#allocation2 + $0x50] sm:$0xff] %vm2036, %v1962
      %2048 = vst.msk [vmem:[#allocation2 + $0x58] sm:$0xff] %vm2036, %v1964
      %2049 = vst.msk [vmem:[#allocation2 + $0x60] sm:$0xff] %vm2036, %v1966
      %2050 = vst.msk [vmem:[#allocation2 + $0x68] sm:$0xff] %vm2036, %v1968
      %2051 = vst.msk [vmem:[#allocation2 + $0x70] sm:$0xff] %vm2036, %v1970
      %2052 = vst.msk [vmem:[#allocation2 + $0x78] sm:$0xff] %vm2036, %v1972
      %2053 = vst.msk [vmem:[#allocation2 + $0x80] sm:$0xff] %vm2036, %v1974
      %2054 = vst.msk [vmem:[#allocation2 + $0x88] sm:$0xff] %vm2036, %v1976
      %2055 = vst.msk [vmem:[#allocation2 + $0x90] sm:$0xff] %vm2036, %v1978
      %2056 = vst.msk [vmem:[#allocation2 + $0x98] sm:$0xff] %vm2036, %v1980
      %2057 = vst.msk [vmem:[#allocation2 + $0xa0] sm:$0xff] %vm2036, %v1982
      %2058 = vst.msk [vmem:[#allocation2 + $0xa8] sm:$0xff] %vm2036, %v1984
      %2059 = vst.msk [vmem:[#allocation2 + $0xb0] sm:$0xff] %vm2036, %v1986
      %2060 = vst.msk [vmem:[#allocation2 + $0xb8] sm:$0xff] %vm2036, %v1988
      %2061 = vst.msk [vmem:[#allocation2 + $0xc0] sm:$0xff] %vm2036, %v1990
      %2062 = vst.msk [vmem:[#allocation2 + $0xc8] sm:$0xff] %vm2036, %v1992
      %2063 = vst.msk [vmem:[#allocation2 + $0xd0] sm:$0xff] %vm2036, %v1994
      %2064 = vst.msk [vmem:[#allocation2 + $0xd8] sm:$0xff] %vm2036, %v1996
      %2065 = vst.msk [vmem:[#allocation2 + $0xe0] sm:$0xff] %vm2036, %v1998
      %2066 = vst.msk [vmem:[#allocation2 + $0xe8] sm:$0xff] %vm2036, %v2000
      %2067 = vst.msk [vmem:[#allocation2 + $0xf0] sm:$0xff] %vm2036, %v2002
      %2068 = vst.msk [vmem:[#allocation2 + $0xf8] sm:$0xff] %vm2036, %v2004
      %2071 = vrot.lane.b32.xlu0 %v1179, 40
      %v2072 = vpop.permute.xlu0 %2071
      %2073 = vrot.lane.b32.xlu0 %v1180, 40
      %v2074 = vpop.permute.xlu0 %2073
      %2075 = vrot.lane.b32.xlu0 %v1181, 40
      %v2076 = vpop.permute.xlu0 %2075
      %2077 = vrot.lane.b32.xlu0 %v1182, 40
      %v2078 = vpop.permute.xlu0 %2077
      %2079 = vrot.lane.b32.xlu0 %v1183, 40
      %v2080 = vpop.permute.xlu0 %2079
      %2081 = vrot.lane.b32.xlu0 %v1184, 40
      %v2082 = vpop.permute.xlu0 %2081
      %2083 = vrot.lane.b32.xlu0 %v1185, 40
      %v2084 = vpop.permute.xlu0 %2083
      %2085 = vrot.lane.b32.xlu0 %v1186, 40
      %v2086 = vpop.permute.xlu0 %2085
      %2087 = vrot.lane.b32.xlu0 %v1187, 40
      %v2088 = vpop.permute.xlu0 %2087
      %2089 = vrot.lane.b32.xlu0 %v1188, 40
      %v2090 = vpop.permute.xlu0 %2089
      %2091 = vrot.lane.b32.xlu0 %v1189, 40
      %v2092 = vpop.permute.xlu0 %2091
      %2093 = vrot.lane.b32.xlu0 %v1190, 40
      %v2094 = vpop.permute.xlu0 %2093
      %2095 = vrot.lane.b32.xlu0 %v1191, 40
      %v2096 = vpop.permute.xlu0 %2095
      %2097 = vrot.lane.b32.xlu0 %v1192, 40
      %v2098 = vpop.permute.xlu0 %2097
      %2099 = vrot.lane.b32.xlu0 %v1193, 40
      %v2100 = vpop.permute.xlu0 %2099
      %2101 = vrot.lane.b32.xlu0 %v1194, 40
      %v2102 = vpop.permute.xlu0 %2101
      %2103 = vrot.lane.b32.xlu0 %v1195, 40
      %v2104 = vpop.permute.xlu0 %2103
      %2105 = vrot.lane.b32.xlu0 %v1196, 40
      %v2106 = vpop.permute.xlu0 %2105
      %2107 = vrot.lane.b32.xlu0 %v1197, 40
      %v2108 = vpop.permute.xlu0 %2107
      %2109 = vrot.lane.b32.xlu0 %v1198, 40
      %v2110 = vpop.permute.xlu0 %2109
      %2111 = vrot.lane.b32.xlu0 %v1199, 40
      %v2112 = vpop.permute.xlu0 %2111
      %2113 = vrot.lane.b32.xlu0 %v1200, 40
      %v2114 = vpop.permute.xlu0 %2113
      %2115 = vrot.lane.b32.xlu0 %v1201, 40
      %v2116 = vpop.permute.xlu0 %2115
      %2117 = vrot.lane.b32.xlu0 %v1202, 40
      %v2118 = vpop.permute.xlu0 %2117
      %2119 = vrot.lane.b32.xlu0 %v1203, 40
      %v2120 = vpop.permute.xlu0 %2119
      %2121 = vrot.lane.b32.xlu0 %v1204, 40
      %v2122 = vpop.permute.xlu0 %2121
      %2123 = vrot.lane.b32.xlu0 %v1205, 40
      %v2124 = vpop.permute.xlu0 %2123
      %2125 = vrot.lane.b32.xlu0 %v1206, 40
      %v2126 = vpop.permute.xlu0 %2125
      %2127 = vrot.lane.b32.xlu0 %v1207, 40
      %v2128 = vpop.permute.xlu0 %2127
      %2129 = vrot.lane.b32.xlu0 %v1208, 40
      %v2130 = vpop.permute.xlu0 %2129
      %2131 = vrot.lane.b32.xlu0 %v1209, 40
      %v2132 = vpop.permute.xlu0 %2131
      %2133 = vrot.lane.b32.xlu0 %v1210, 40
      %v2134 = vpop.permute.xlu0 %2133
      %vm2167 = vcmask 392512
      %2168 = vst.msk [vmem:[#allocation2] sm:$0xff] %vm2167, %v2072
      %2169 = vst.msk [vmem:[#allocation2 + $0x8] sm:$0xff] %vm2167, %v2074
      %2170 = vst.msk [vmem:[#allocation2 + $0x10] sm:$0xff] %vm2167, %v2076
      %2171 = vst.msk [vmem:[#allocation2 + $0x18] sm:$0xff] %vm2167, %v2078
      %2172 = vst.msk [vmem:[#allocation2 + $0x20] sm:$0xff] %vm2167, %v2080
      %2173 = vst.msk [vmem:[#allocation2 + $0x28] sm:$0xff] %vm2167, %v2082
      %2174 = vst.msk [vmem:[#allocation2 + $0x30] sm:$0xff] %vm2167, %v2084
      %2175 = vst.msk [vmem:[#allocation2 + $0x38] sm:$0xff] %vm2167, %v2086
      %2176 = vst.msk [vmem:[#allocation2 + $0x40] sm:$0xff] %vm2167, %v2088
      %2177 = vst.msk [vmem:[#allocation2 + $0x48] sm:$0xff] %vm2167, %v2090
      %2178 = vst.msk [vmem:[#allocation2 + $0x50] sm:$0xff] %vm2167, %v2092
      %2179 = vst.msk [vmem:[#allocation2 + $0x58] sm:$0xff] %vm2167, %v2094
      %2180 = vst.msk [vmem:[#allocation2 + $0x60] sm:$0xff] %vm2167, %v2096
      %2181 = vst.msk [vmem:[#allocation2 + $0x68] sm:$0xff] %vm2167, %v2098
      %2182 = vst.msk [vmem:[#allocation2 + $0x70] sm:$0xff] %vm2167, %v2100
      %2183 = vst.msk [vmem:[#allocation2 + $0x78] sm:$0xff] %vm2167, %v2102
      %2184 = vst.msk [vmem:[#allocation2 + $0x80] sm:$0xff] %vm2167, %v2104
      %2185 = vst.msk [vmem:[#allocation2 + $0x88] sm:$0xff] %vm2167, %v2106
      %2186 = vst.msk [vmem:[#allocation2 + $0x90] sm:$0xff] %vm2167, %v2108
      %2187 = vst.msk [vmem:[#allocation2 + $0x98] sm:$0xff] %vm2167, %v2110
      %2188 = vst.msk [vmem:[#allocation2 + $0xa0] sm:$0xff] %vm2167, %v2112
      %2189 = vst.msk [vmem:[#allocation2 + $0xa8] sm:$0xff] %vm2167, %v2114
      %2190 = vst.msk [vmem:[#allocation2 + $0xb0] sm:$0xff] %vm2167, %v2116
      %2191 = vst.msk [vmem:[#allocation2 + $0xb8] sm:$0xff] %vm2167, %v2118
      %2192 = vst.msk [vmem:[#allocation2 + $0xc0] sm:$0xff] %vm2167, %v2120
      %2193 = vst.msk [vmem:[#allocation2 + $0xc8] sm:$0xff] %vm2167, %v2122
      %2194 = vst.msk [vmem:[#allocation2 + $0xd0] sm:$0xff] %vm2167, %v2124
      %2195 = vst.msk [vmem:[#allocation2 + $0xd8] sm:$0xff] %vm2167, %v2126
      %2196 = vst.msk [vmem:[#allocation2 + $0xe0] sm:$0xff] %vm2167, %v2128
      %2197 = vst.msk [vmem:[#allocation2 + $0xe8] sm:$0xff] %vm2167, %v2130
      %2198 = vst.msk [vmem:[#allocation2 + $0xf0] sm:$0xff] %vm2167, %v2132
      %2199 = vst.msk [vmem:[#allocation2 + $0xf8] sm:$0xff] %vm2167, %v2134
      %2200 = vrot.lane.b32.xlu0 %v1181, 64
      %v2201 = vpop.permute.xlu0 %2200
      %2202 = vrot.lane.b32.xlu0 %v1182, 64
      %v2203 = vpop.permute.xlu0 %2202
      %2204 = vrot.lane.b32.xlu0 %v1183, 64
      %v2205 = vpop.permute.xlu0 %2204
      %2206 = vrot.lane.b32.xlu0 %v1184, 64
      %v2207 = vpop.permute.xlu0 %2206
      %2208 = vrot.lane.b32.xlu0 %v1185, 64
      %v2209 = vpop.permute.xlu0 %2208
      %2210 = vrot.lane.b32.xlu0 %v1186, 64
      %v2211 = vpop.permute.xlu0 %2210
      %2212 = vrot.lane.b32.xlu0 %v1187, 64
      %v2213 = vpop.permute.xlu0 %2212
      %2214 = vrot.lane.b32.xlu0 %v1188, 64
      %v2215 = vpop.permute.xlu0 %2214
      %2216 = vrot.lane.b32.xlu0 %v1189, 64
      %v2217 = vpop.permute.xlu0 %2216
      %2218 = vrot.lane.b32.xlu0 %v1190, 64
      %v2219 = vpop.permute.xlu0 %2218
      %2220 = vrot.lane.b32.xlu0 %v1191, 64
      %v2221 = vpop.permute.xlu0 %2220
      %2222 = vrot.lane.b32.xlu0 %v1192, 64
      %v2223 = vpop.permute.xlu0 %2222
      %2224 = vrot.lane.b32.xlu0 %v1193, 64
      %v2225 = vpop.permute.xlu0 %2224
      %2226 = vrot.lane.b32.xlu0 %v1194, 64
      %v2227 = vpop.permute.xlu0 %2226
      %2228 = vrot.lane.b32.xlu0 %v1195, 64
      %v2229 = vpop.permute.xlu0 %2228
      %2230 = vrot.lane.b32.xlu0 %v1196, 64
      %v2231 = vpop.permute.xlu0 %2230
      %2232 = vrot.lane.b32.xlu0 %v1197, 64
      %v2233 = vpop.permute.xlu0 %2232
      %2234 = vrot.lane.b32.xlu0 %v1198, 64
      %v2235 = vpop.permute.xlu0 %2234
      %2236 = vrot.lane.b32.xlu0 %v1199, 64
      %v2237 = vpop.permute.xlu0 %2236
      %2238 = vrot.lane.b32.xlu0 %v1200, 64
      %v2239 = vpop.permute.xlu0 %2238
      %2240 = vrot.lane.b32.xlu0 %v1201, 64
      %v2241 = vpop.permute.xlu0 %2240
      %2242 = vrot.lane.b32.xlu0 %v1202, 64
      %v2243 = vpop.permute.xlu0 %2242
      %2244 = vrot.lane.b32.xlu0 %v1203, 64
      %v2245 = vpop.permute.xlu0 %2244
      %2246 = vrot.lane.b32.xlu0 %v1204, 64
      %v2247 = vpop.permute.xlu0 %2246
      %2248 = vrot.lane.b32.xlu0 %v1205, 64
      %v2249 = vpop.permute.xlu0 %2248
      %2250 = vrot.lane.b32.xlu0 %v1206, 64
      %v2251 = vpop.permute.xlu0 %2250
      %2252 = vrot.lane.b32.xlu0 %v1207, 64
      %v2253 = vpop.permute.xlu0 %2252
      %2254 = vrot.lane.b32.xlu0 %v1208, 64
      %v2255 = vpop.permute.xlu0 %2254
      %2256 = vrot.lane.b32.xlu0 %v1209, 64
      %v2257 = vpop.permute.xlu0 %2256
      %2258 = vrot.lane.b32.xlu0 %v1210, 64
      %v2259 = vpop.permute.xlu0 %2258
      %2260 = vrot.lane.b32.xlu0 0.0, 64
      %v2261 = vpop.permute.xlu0 %2260
      %vm2293 = vcmask 589312
      %2294 = vst.msk [vmem:[#allocation2] sm:$0xff] %vm2293, %v2201
      %2295 = vst.msk [vmem:[#allocation2 + $0x8] sm:$0xff] %vm2293, %v2203
      %2296 = vst.msk [vmem:[#allocation2 + $0x10] sm:$0xff] %vm2293, %v2205
      %2297 = vst.msk [vmem:[#allocation2 + $0x18] sm:$0xff] %vm2293, %v2207
      %2298 = vst.msk [vmem:[#allocation2 + $0x20] sm:$0xff] %vm2293, %v2209
      %2299 = vst.msk [vmem:[#allocation2 + $0x28] sm:$0xff] %vm2293, %v2211
      %2300 = vst.msk [vmem:[#allocation2 + $0x30] sm:$0xff] %vm2293, %v2213
      %2301 = vst.msk [vmem:[#allocation2 + $0x38] sm:$0xff] %vm2293, %v2215
      %2302 = vst.msk [vmem:[#allocation2 + $0x40] sm:$0xff] %vm2293, %v2217
      %2303 = vst.msk [vmem:[#allocation2 + $0x48] sm:$0xff] %vm2293, %v2219
      %2304 = vst.msk [vmem:[#allocation2 + $0x50] sm:$0xff] %vm2293, %v2221
      %2305 = vst.msk [vmem:[#allocation2 + $0x58] sm:$0xff] %vm2293, %v2223
      %2306 = vst.msk [vmem:[#allocation2 + $0x60] sm:$0xff] %vm2293, %v2225
      %2307 = vst.msk [vmem:[#allocation2 + $0x68] sm:$0xff] %vm2293, %v2227
      %2308 = vst.msk [vmem:[#allocation2 + $0x70] sm:$0xff] %vm2293, %v2229
      %2309 = vst.msk [vmem:[#allocation2 + $0x78] sm:$0xff] %vm2293, %v2231
      %2310 = vst.msk [vmem:[#allocation2 + $0x80] sm:$0xff] %vm2293, %v2233
      %2311 = vst.msk [vmem:[#allocation2 + $0x88] sm:$0xff] %vm2293, %v2235
      %2312 = vst.msk [vmem:[#allocation2 + $0x90] sm:$0xff] %vm2293, %v2237
      %2313 = vst.msk [vmem:[#allocation2 + $0x98] sm:$0xff] %vm2293, %v2239
      %2314 = vst.msk [vmem:[#allocation2 + $0xa0] sm:$0xff] %vm2293, %v2241
      %2315 = vst.msk [vmem:[#allocation2 + $0xa8] sm:$0xff] %vm2293, %v2243
      %2316 = vst.msk [vmem:[#allocation2 + $0xb0] sm:$0xff] %vm2293, %v2245
      %2317 = vst.msk [vmem:[#allocation2 + $0xb8] sm:$0xff] %vm2293, %v2247
      %2318 = vst.msk [vmem:[#allocation2 + $0xc0] sm:$0xff] %vm2293, %v2249
      %2319 = vst.msk [vmem:[#allocation2 + $0xc8] sm:$0xff] %vm2293, %v2251
      %2320 = vst.msk [vmem:[#allocation2 + $0xd0] sm:$0xff] %vm2293, %v2253
      %2321 = vst.msk [vmem:[#allocation2 + $0xd8] sm:$0xff] %vm2293, %v2255
      %2322 = vst.msk [vmem:[#allocation2 + $0xe0] sm:$0xff] %vm2293, %v2257
      %2323 = vst.msk [vmem:[#allocation2 + $0xe8] sm:$0xff] %vm2293, %v2259
      %2324 = vst.msk [vmem:[#allocation2 + $0xf0] sm:$0xff] %vm2293, %v2261
      %2325 = vst.msk [vmem:[#allocation2 + $0xf8] sm:$0xff] %vm2293, %v2261
      %v2326 = vld [vmem:[#allocation2] sm:$0xff]
      %v2327 = vld [vmem:[#allocation2 + $0x8] sm:$0xff]
      %v2328 = vld [vmem:[#allocation2 + $0x10] sm:$0xff]
      %v2329 = vld [vmem:[#allocation2 + $0x18] sm:$0xff]
      %v2330 = vld [vmem:[#allocation2 + $0x20] sm:$0xff]
      %v2331 = vld [vmem:[#allocation2 + $0x28] sm:$0xff]
      %v2332 = vld [vmem:[#allocation2 + $0x30] sm:$0xff]
      %v2333 = vld [vmem:[#allocation2 + $0x38] sm:$0xff]
      %v2334 = vld [vmem:[#allocation2 + $0x40] sm:$0xff]
      %v2335 = vld [vmem:[#allocation2 + $0x48] sm:$0xff]
      %v2336 = vld [vmem:[#allocation2 + $0x50] sm:$0xff]
      %v2337 = vld [vmem:[#allocation2 + $0x58] sm:$0xff]
      %v2338 = vld [vmem:[#allocation2 + $0x60] sm:$0xff]
      %v2339 = vld [vmem:[#allocation2 + $0x68] sm:$0xff]
      %v2340 = vld [vmem:[#allocation2 + $0x70] sm:$0xff]
      %v2341 = vld [vmem:[#allocation2 + $0x78] sm:$0xff]
      %v2342 = vld [vmem:[#allocation2 + $0x80] sm:$0xff]
      %v2343 = vld [vmem:[#allocation2 + $0x88] sm:$0xff]
      %v2344 = vld [vmem:[#allocation2 + $0x90] sm:$0xff]
      %v2345 = vld [vmem:[#allocation2 + $0x98] sm:$0xff]
      %v2346 = vld [vmem:[#allocation2 + $0xa0] sm:$0xff]
      %v2347 = vld [vmem:[#allocation2 + $0xa8] sm:$0xff]
      %v2348 = vld [vmem:[#allocation2 + $0xb0] sm:$0xff]
      %v2349 = vld [vmem:[#allocation2 + $0xb8] sm:$0xff]
      %v2350 = vld [vmem:[#allocation2 + $0xc0] sm:$0xff]
      %v2351 = vld [vmem:[#allocation2 + $0xc8] sm:$0xff]
      %v2352 = vld [vmem:[#allocation2 + $0xd0] sm:$0xff]
      %v2353 = vld [vmem:[#allocation2 + $0xd8] sm:$0xff]
      %v2354 = vld [vmem:[#allocation2 + $0xe0] sm:$0xff]
      %v2355 = vld [vmem:[#allocation2 + $0xe8] sm:$0xff]
      %v2356 = vld [vmem:[#allocation2 + $0xf0] sm:$0xff]
      %v2357 = vld [vmem:[#allocation2 + $0xf8] sm:$0xff]
      %v2358 = vpack.c.bf16 %v2327, %v2326
      %v2359 = vpack.c.bf16 %v2329, %v2328
      %v2360 = vpack.c.bf16 %v2331, %v2330
      %v2361 = vpack.c.bf16 %v2333, %v2332
      %v2362 = vpack.c.bf16 %v2335, %v2334
      %v2363 = vpack.c.bf16 %v2337, %v2336
      %v2364 = vpack.c.bf16 %v2339, %v2338
      %v2365 = vpack.c.bf16 %v2341, %v2340
      %v2366 = vpack.c.bf16 %v2343, %v2342
      %v2367 = vpack.c.bf16 %v2345, %v2344
      %v2368 = vpack.c.bf16 %v2347, %v2346
      %v2369 = vpack.c.bf16 %v2349, %v2348
      %v2370 = vpack.c.bf16 %v2351, %v2350
      %v2371 = vpack.c.bf16 %v2353, %v2352
      %v2372 = vpack.c.bf16 %v2355, %v2354
      %v2373 = vpack.c.bf16 %v2357, %v2356
      %v2374 = vld [vmem:[%s1] sm:$0xf]
      %v2375 = vld [vmem:[%s1 + $0x4] sm:$0xf]
      %v2376 = vld [vmem:[%s1 + $0x8] sm:$0xf]
      %v2377 = vld [vmem:[%s1 + $0xc] sm:$0xf]
      %v2378 = vld [vmem:[%s1 + $0x10] sm:$0xf]
      %v2379 = vld [vmem:[%s1 + $0x14] sm:$0xf]
      %v2380 = vld [vmem:[%s1 + $0x18] sm:$0xf]
      %v2381 = vld [vmem:[%s1 + $0x1c] sm:$0xf]
      %v2382 = vld [vmem:[%s1 + $0x20] sm:$0xf]
      %v2392 = vunpack.c.l.b16 %v2374
      %v2393 = vunpack.c.l.b16 %v2375
      %v2394 = vunpack.c.l.b16 %v2376
      %v2395 = vunpack.c.l.b16 %v2377
      %v2396 = vunpack.c.l.b16 %v2378
      %v2397 = vunpack.c.l.b16 %v2379
      %v2398 = vunpack.c.l.b16 %v2380
      %v2399 = vunpack.c.l.b16 %v2381
      %v2400 = vunpack.c.l.b16 %v2382
      %v2401 = vpack.c.b16 %v2393, %v2392
      %v2402 = vpack.c.b16 %v2395, %v2394
      %v2403 = vpack.c.b16 %v2397, %v2396
      %v2404 = vpack.c.b16 %v2399, %v2398
      %v2405 = vpack.c.b16 %v2400, %v2400
      %vm2410 = vcmask 588800
      %v2412 = vsel %vm2410, %v2358, 0
      %v2415 = vsel %vm2410, %v2359, 0
      %v2418 = vsel %vm2410, %v2360, 0
      %v2421 = vsel %vm2410, %v2361, 0
      %v2424 = vsel %vm2410, %v2362, 0
      %v2427 = vsel %vm2410, %v2363, 0
      %v2430 = vsel %vm2410, %v2364, 0
      %v2433 = vsel %vm2410, %v2365, 0
      %v2436 = vsel %vm2410, %v2366, 0
      %v2439 = vsel %vm2410, %v2367, 0
      %v2442 = vsel %vm2410, %v2368, 0
      %v2445 = vsel %vm2410, %v2369, 0
      %v2448 = vsel %vm2410, %v2370, 0
      %v2451 = vsel %vm2410, %v2371, 0
      %v2454 = vsel %vm2410, %v2372, 0
      %v2457 = vsel %vm2410, %v2373, 0
      %vm2459 = vcmask 1043456
      %v2461 = vsel %vm2459, %v2405, 0
      %2463 = vmatpush.bf16.msra.mxu0 0
      %2464 = vmatpush.bf16.msra.mxu0 0
      %2465 = vmatpush.bf16.msra.mxu0 0
      %2466 = vmatpush.bf16.msra.mxu0 %v2461
      %2467 = vmatpush.bf16.msra.mxu0 %v2404
      %2468 = vmatpush.bf16.msra.mxu0 %v2403
      %2469 = vmatpush.bf16.msra.mxu0 %v2402
      %2470 = vmatpush.bf16.msra.mxu0 %v2401
      %2471 = vmatmul.bf16.gmra.mxu0 %v2412
      %v2472 = vpop.f32.mrf.mxu0
      %v2473 = vadd.f32 0.0, %v2472
      %v2474 = vpop.f32.mrf.mxu0
      %v2475 = vadd.f32 0.0, %v2474
      %2476 = vmatmul.bf16.gmra.mxu0 %v2415
      %v2477 = vpop.f32.mrf.mxu0
      %v2478 = vadd.f32 0.0, %v2477
      %v2479 = vpop.f32.mrf.mxu0
      %v2480 = vadd.f32 0.0, %v2479
      %2481 = vmatmul.bf16.gmra.mxu0 %v2418
      %v2482 = vpop.f32.mrf.mxu0
      %v2483 = vadd.f32 0.0, %v2482
      %v2484 = vpop.f32.mrf.mxu0
      %v2485 = vadd.f32 0.0, %v2484
      %2486 = vmatmul.bf16.gmra.mxu0 %v2421
      %v2487 = vpop.f32.mrf.mxu0
      %v2488 = vadd.f32 0.0, %v2487
      %v2489 = vpop.f32.mrf.mxu0
      %v2490 = vadd.f32 0.0, %v2489
      %2491 = vmatmul.bf16.gmra.mxu0 %v2424
      %v2492 = vpop.f32.mrf.mxu0
      %v2493 = vadd.f32 0.0, %v2492
      %v2494 = vpop.f32.mrf.mxu0
      %v2495 = vadd.f32 0.0, %v2494
      %2496 = vmatmul.bf16.gmra.mxu0 %v2427
      %v2497 = vpop.f32.mrf.mxu0
      %v2498 = vadd.f32 0.0, %v2497
      %v2499 = vpop.f32.mrf.mxu0
      %v2500 = vadd.f32 0.0, %v2499
      %2501 = vmatmul.bf16.gmra.mxu0 %v2430
      %v2502 = vpop.f32.mrf.mxu0
      %v2503 = vadd.f32 0.0, %v2502
      %v2504 = vpop.f32.mrf.mxu0
      %v2505 = vadd.f32 0.0, %v2504
      %2506 = vmatmul.bf16.gmra.mxu0 %v2433
      %v2507 = vpop.f32.mrf.mxu0
      %v2508 = vadd.f32 0.0, %v2507
      %v2509 = vpop.f32.mrf.mxu0
      %v2510 = vadd.f32 0.0, %v2509
      %2511 = vmatmul.bf16.gmra.mxu0 %v2436
      %v2512 = vpop.f32.mrf.mxu0
      %v2513 = vadd.f32 0.0, %v2512
      %v2514 = vpop.f32.mrf.mxu0
      %v2515 = vadd.f32 0.0, %v2514
      %2516 = vmatmul.bf16.gmra.mxu0 %v2439
      %v2517 = vpop.f32.mrf.mxu0
      %v2518 = vadd.f32 0.0, %v2517
      %v2519 = vpop.f32.mrf.mxu0
      %v2520 = vadd.f32 0.0, %v2519
      %2521 = vmatmul.bf16.gmra.mxu0 %v2442
      %v2522 = vpop.f32.mrf.mxu0
      %v2523 = vadd.f32 0.0, %v2522
      %v2524 = vpop.f32.mrf.mxu0
      %v2525 = vadd.f32 0.0, %v2524
      %2526 = vmatmul.bf16.gmra.mxu0 %v2445
      %v2527 = vpop.f32.mrf.mxu0
      %v2528 = vadd.f32 0.0, %v2527
      %v2529 = vpop.f32.mrf.mxu0
      %v2530 = vadd.f32 0.0, %v2529
      %2531 = vmatmul.bf16.gmra.mxu0 %v2448
      %v2532 = vpop.f32.mrf.mxu0
      %v2533 = vadd.f32 0.0, %v2532
      %v2534 = vpop.f32.mrf.mxu0
      %v2535 = vadd.f32 0.0, %v2534
      %2536 = vmatmul.bf16.gmra.mxu0 %v2451
      %v2537 = vpop.f32.mrf.mxu0
      %v2538 = vadd.f32 0.0, %v2537
      %v2539 = vpop.f32.mrf.mxu0
      %v2540 = vadd.f32 0.0, %v2539
      %2541 = vmatmul.bf16.gmra.mxu0 %v2454
      %v2542 = vpop.f32.mrf.mxu0
      %v2543 = vadd.f32 0.0, %v2542
      %v2544 = vpop.f32.mrf.mxu0
      %v2545 = vadd.f32 0.0, %v2544
      %2546 = vmatmul.bf16.gmra.mxu0 %v2457
      %v2547 = vpop.f32.mrf.mxu0
      %v2548 = vadd.f32 0.0, %v2547
      %v2549 = vpop.f32.mrf.mxu0
      %v2550 = vadd.f32 0.0, %v2549
      %2551 = vdwg.mxu0
      %v2552 = vld [vmem:[%s2] sm:$0x1]
      %v2554 = vperm.slane %v2552, 0
      %v2556 = vmul.f32 %v2473, %v2554
      %v2557 = vmul.f32 %v2475, %v2554
      %v2558 = vmul.f32 %v2478, %v2554
      %v2559 = vmul.f32 %v2480, %v2554
      %v2560 = vmul.f32 %v2483, %v2554
      %v2561 = vmul.f32 %v2485, %v2554
      %v2562 = vmul.f32 %v2488, %v2554
      %v2563 = vmul.f32 %v2490, %v2554
      %v2564 = vmul.f32 %v2493, %v2554
      %v2565 = vmul.f32 %v2495, %v2554
      %v2566 = vmul.f32 %v2498, %v2554
      %v2567 = vmul.f32 %v2500, %v2554
      %v2568 = vmul.f32 %v2503, %v2554
      %v2569 = vmul.f32 %v2505, %v2554
      %v2570 = vmul.f32 %v2508, %v2554
      %v2571 = vmul.f32 %v2510, %v2554
      %v2572 = vmul.f32 %v2513, %v2554
      %v2573 = vmul.f32 %v2515, %v2554
      %v2574 = vmul.f32 %v2518, %v2554
      %v2575 = vmul.f32 %v2520, %v2554
      %v2576 = vmul.f32 %v2523, %v2554
      %v2577 = vmul.f32 %v2525, %v2554
      %v2578 = vmul.f32 %v2528, %v2554
      %v2579 = vmul.f32 %v2530, %v2554
      %v2580 = vmul.f32 %v2533, %v2554
      %v2581 = vmul.f32 %v2535, %v2554
      %v2582 = vmul.f32 %v2538, %v2554
      %v2583 = vmul.f32 %v2540, %v2554
      %v2584 = vmul.f32 %v2543, %v2554
      %v2585 = vmul.f32 %v2545, %v2554
      %v2586 = vmul.f32 %v2548, %v2554
      %v2587 = vmul.f32 %v2550, %v2554
      %v2588 = vld [vmem:[%s3] sm:$0x1]
      %v2590 = vperm.slane %v2588, 0
      %v2592 = vadd.f32 %v2556, %v2590
      %v2593 = vadd.f32 %v2557, %v2590
      %v2594 = vadd.f32 %v2558, %v2590
      %v2595 = vadd.f32 %v2559, %v2590
      %v2596 = vadd.f32 %v2560, %v2590
      %v2597 = vadd.f32 %v2561, %v2590
      %v2598 = vadd.f32 %v2562, %v2590
      %v2599 = vadd.f32 %v2563, %v2590
      %v2600 = vadd.f32 %v2564, %v2590
      %v2601 = vadd.f32 %v2565, %v2590
      %v2602 = vadd.f32 %v2566, %v2590
      %v2603 = vadd.f32 %v2567, %v2590
      %v2604 = vadd.f32 %v2568, %v2590
      %v2605 = vadd.f32 %v2569, %v2590
      %v2606 = vadd.f32 %v2570, %v2590
      %v2607 = vadd.f32 %v2571, %v2590
      %v2608 = vadd.f32 %v2572, %v2590
      %v2609 = vadd.f32 %v2573, %v2590
      %v2610 = vadd.f32 %v2574, %v2590
      %v2611 = vadd.f32 %v2575, %v2590
      %v2612 = vadd.f32 %v2576, %v2590
      %v2613 = vadd.f32 %v2577, %v2590
      %v2614 = vadd.f32 %v2578, %v2590
      %v2615 = vadd.f32 %v2579, %v2590
      %v2616 = vadd.f32 %v2580, %v2590
      %v2617 = vadd.f32 %v2581, %v2590
      %v2618 = vadd.f32 %v2582, %v2590
      %v2619 = vadd.f32 %v2583, %v2590
      %v2620 = vadd.f32 %v2584, %v2590
      %v2621 = vadd.f32 %v2585, %v2590
      %v2622 = vadd.f32 %v2586, %v2590
      %v2623 = vadd.f32 %v2587, %v2590
      %v2624 = vmax.f32 %v2592, 0.0
      %v2625 = vmax.f32 %v2593, 0.0
      %v2626 = vmax.f32 %v2594, 0.0
      %v2627 = vmax.f32 %v2595, 0.0
      %v2628 = vmax.f32 %v2596, 0.0
      %v2629 = vmax.f32 %v2597, 0.0
      %v2630 = vmax.f32 %v2598, 0.0
      %v2631 = vmax.f32 %v2599, 0.0
      %v2632 = vmax.f32 %v2600, 0.0
      %v2633 = vmax.f32 %v2601, 0.0
      %v2634 = vmax.f32 %v2602, 0.0
      %v2635 = vmax.f32 %v2603, 0.0
      %v2636 = vmax.f32 %v2604, 0.0
      %v2637 = vmax.f32 %v2605, 0.0
      %v2638 = vmax.f32 %v2606, 0.0
      %v2639 = vmax.f32 %v2607, 0.0
      %v2640 = vmax.f32 %v2608, 0.0
      %v2641 = vmax.f32 %v2609, 0.0
      %v2642 = vmax.f32 %v2610, 0.0
      %v2643 = vmax.f32 %v2611, 0.0
      %v2644 = vmax.f32 %v2612, 0.0
      %v2645 = vmax.f32 %v2613, 0.0
      %v2646 = vmax.f32 %v2614, 0.0
      %v2647 = vmax.f32 %v2615, 0.0
      %v2648 = vmax.f32 %v2616, 0.0
      %v2649 = vmax.f32 %v2617, 0.0
      %v2650 = vmax.f32 %v2618, 0.0
      %v2651 = vmax.f32 %v2619, 0.0
      %v2652 = vmax.f32 %v2620, 0.0
      %v2653 = vmax.f32 %v2621, 0.0
      %v2654 = vmax.f32 %v2622, 0.0
      %v2655 = vmax.f32 %v2623, 0.0
      %v2688 = vrot.slane %v2624, 7
      %v2689 = vrot.slane %v2625, 7
      %v2690 = vsel %vm825, %v2688, %v2689
      %v2691 = vrot.slane %v2626, 7
      %v2692 = vsel %vm825, %v2689, %v2691
      %v2693 = vrot.slane %v2627, 7
      %v2694 = vsel %vm825, %v2691, %v2693
      %v2695 = vrot.slane %v2628, 7
      %v2696 = vsel %vm825, %v2693, %v2695
      %v2697 = vrot.slane %v2629, 7
      %v2698 = vsel %vm825, %v2695, %v2697
      %v2699 = vrot.slane %v2630, 7
      %v2700 = vsel %vm825, %v2697, %v2699
      %v2701 = vrot.slane %v2631, 7
      %v2702 = vsel %vm825, %v2699, %v2701
      %v2703 = vrot.slane %v2632, 7
      %v2704 = vsel %vm825, %v2701, %v2703
      %v2705 = vrot.slane %v2633, 7
      %v2706 = vsel %vm825, %v2703, %v2705
      %v2707 = vrot.slane %v2634, 7
      %v2708 = vsel %vm825, %v2705, %v2707
      %v2709 = vrot.slane %v2635, 7
      %v2710 = vsel %vm825, %v2707, %v2709
      %v2711 = vrot.slane %v2636, 7
      %v2712 = vsel %vm825, %v2709, %v2711
      %v2713 = vrot.slane %v2637, 7
      %v2714 = vsel %vm825, %v2711, %v2713
      %v2715 = vrot.slane %v2638, 7
      %v2716 = vsel %vm825, %v2713, %v2715
      %v2717 = vrot.slane %v2639, 7
      %v2718 = vsel %vm825, %v2715, %v2717
      %v2719 = vrot.slane %v2640, 7
      %v2720 = vsel %vm825, %v2717, %v2719
      %v2721 = vrot.slane %v2641, 7
      %v2722 = vsel %vm825, %v2719, %v2721
      %v2723 = vrot.slane %v2642, 7
      %v2724 = vsel %vm825, %v2721, %v2723
      %v2725 = vrot.slane %v2643, 7
      %v2726 = vsel %vm825, %v2723, %v2725
      %v2727 = vrot.slane %v2644, 7
      %v2728 = vsel %vm825, %v2725, %v2727
      %v2729 = vrot.slane %v2645, 7
      %v2730 = vsel %vm825, %v2727, %v2729
      %v2731 = vrot.slane %v2646, 7
      %v2732 = vsel %vm825, %v2729, %v2731
      %v2733 = vrot.slane %v2647, 7
      %v2734 = vsel %vm825, %v2731, %v2733
      %v2735 = vrot.slane %v2648, 7
      %v2736 = vsel %vm825, %v2733, %v2735
      %v2737 = vrot.slane %v2649, 7
      %v2738 = vsel %vm825, %v2735, %v2737
      %v2739 = vrot.slane %v2650, 7
      %v2740 = vsel %vm825, %v2737, %v2739
      %v2741 = vrot.slane %v2651, 7
      %v2742 = vsel %vm825, %v2739, %v2741
      %v2743 = vrot.slane %v2652, 7
      %v2744 = vsel %vm825, %v2741, %v2743
      %v2745 = vrot.slane %v2653, 7
      %v2746 = vsel %vm825, %v2743, %v2745
      %v2747 = vrot.slane %v2654, 7
      %v2748 = vsel %vm825, %v2745, %v2747
      %v2749 = vrot.slane %v2655, 7
      %v2750 = vsel %vm825, %v2747, %v2749
      %v2783 = vsel %vm825, 0.0, %v2688
      %v2784 = vsel %vm954, %v2783, 0.0
      %v2785 = vsel %vm955, %v2690, 0.0
      %v2786 = vsel %vm956, %v2692, 0.0
      %v2787 = vsel %vm957, %v2694, 0.0
      %v2788 = vsel %vm958, %v2696, 0.0
      %v2789 = vsel %vm959, %v2698, 0.0
      %v2790 = vsel %vm960, %v2700, 0.0
      %v2791 = vsel %vm961, %v2702, 0.0
      %v2792 = vsel %vm962, %v2704, 0.0
      %v2793 = vsel %vm963, %v2706, 0.0
      %v2794 = vsel %vm964, %v2708, 0.0
      %v2795 = vsel %vm965, %v2710, 0.0
      %v2796 = vsel %vm966, %v2712, 0.0
      %v2797 = vsel %vm967, %v2714, 0.0
      %v2798 = vsel %vm968, %v2716, 0.0
      %v2799 = vsel %vm969, %v2718, 0.0
      %v2800 = vsel %vm970, %v2720, 0.0
      %v2801 = vsel %vm971, %v2722, 0.0
      %v2802 = vsel %vm972, %v2724, 0.0
      %v2803 = vsel %vm973, %v2726, 0.0
      %v2804 = vsel %vm974, %v2728, 0.0
      %v2805 = vsel %vm975, %v2730, 0.0
      %v2806 = vsel %vm976, %v2732, 0.0
      %v2807 = vsel %vm977, %v2734, 0.0
      %v2808 = vsel %vm978, %v2736, 0.0
      %v2809 = vsel %vm979, %v2738, 0.0
      %v2810 = vsel %vm980, %v2740, 0.0
      %v2811 = vsel %vm981, %v2742, 0.0
      %v2812 = vsel %vm982, %v2744, 0.0
      %v2813 = vsel %vm983, %v2746, 0.0
      %v2814 = vsel %vm984, %v2748, 0.0
      %v2815 = vsel %vm985, %v2750, 0.0
      %v2816 = vrot.slane %v2624, 1
      %v2817 = vrot.slane %v2625, 1
      %v2818 = vsel %vm1018, %v2816, %v2817
      %v2819 = vrot.slane %v2626, 1
      %v2820 = vsel %vm1018, %v2817, %v2819
      %v2821 = vrot.slane %v2627, 1
      %v2822 = vsel %vm1018, %v2819, %v2821
      %v2823 = vrot.slane %v2628, 1
      %v2824 = vsel %vm1018, %v2821, %v2823
      %v2825 = vrot.slane %v2629, 1
      %v2826 = vsel %vm1018, %v2823, %v2825
      %v2827 = vrot.slane %v2630, 1
      %v2828 = vsel %vm1018, %v2825, %v2827
      %v2829 = vrot.slane %v2631, 1
      %v2830 = vsel %vm1018, %v2827, %v2829
      %v2831 = vrot.slane %v2632, 1
      %v2832 = vsel %vm1018, %v2829, %v2831
      %v2833 = vrot.slane %v2633, 1
      %v2834 = vsel %vm1018, %v2831, %v2833
      %v2835 = vrot.slane %v2634, 1
      %v2836 = vsel %vm1018, %v2833, %v2835
      %v2837 = vrot.slane %v2635, 1
      %v2838 = vsel %vm1018, %v2835, %v2837
      %v2839 = vrot.slane %v2636, 1
      %v2840 = vsel %vm1018, %v2837, %v2839
      %v2841 = vrot.slane %v2637, 1
      %v2842 = vsel %vm1018, %v2839, %v2841
      %v2843 = vrot.slane %v2638, 1
      %v2844 = vsel %vm1018, %v2841, %v2843
      %v2845 = vrot.slane %v2639, 1
      %v2846 = vsel %vm1018, %v2843, %v2845
      %v2847 = vrot.slane %v2640, 1
      %v2848 = vsel %vm1018, %v2845, %v2847
      %v2849 = vrot.slane %v2641, 1
      %v2850 = vsel %vm1018, %v2847, %v2849
      %v2851 = vrot.slane %v2642, 1
      %v2852 = vsel %vm1018, %v2849, %v2851
      %v2853 = vrot.slane %v2643, 1
      %v2854 = vsel %vm1018, %v2851, %v2853
      %v2855 = vrot.slane %v2644, 1
      %v2856 = vsel %vm1018, %v2853, %v2855
      %v2857 = vrot.slane %v2645, 1
      %v2858 = vsel %vm1018, %v2855, %v2857
      %v2859 = vrot.slane %v2646, 1
      %v2860 = vsel %vm1018, %v2857, %v2859
      %v2861 = vrot.slane %v2647, 1
      %v2862 = vsel %vm1018, %v2859, %v2861
      %v2863 = vrot.slane %v2648, 1
      %v2864 = vsel %vm1018, %v2861, %v2863
      %v2865 = vrot.slane %v2649, 1
      %v2866 = vsel %vm1018, %v2863, %v2865
      %v2867 = vrot.slane %v2650, 1
      %v2868 = vsel %vm1018, %v2865, %v2867
      %v2869 = vrot.slane %v2651, 1
      %v2870 = vsel %vm1018, %v2867, %v2869
      %v2871 = vrot.slane %v2652, 1
      %v2872 = vsel %vm1018, %v2869, %v2871
      %v2873 = vrot.slane %v2653, 1
      %v2874 = vsel %vm1018, %v2871, %v2873
      %v2875 = vrot.slane %v2654, 1
      %v2876 = vsel %vm1018, %v2873, %v2875
      %v2877 = vrot.slane %v2655, 1
      %v2878 = vsel %vm1018, %v2875, %v2877
      %v2911 = vsel %vm1018, %v2877, 0.0
      %v2912 = vsel %vm1147, %v2818, 0.0
      %v2913 = vsel %vm1148, %v2820, 0.0
      %v2914 = vsel %vm1149, %v2822, 0.0
      %v2915 = vsel %vm1150, %v2824, 0.0
      %v2916 = vsel %vm1151, %v2826, 0.0
      %v2917 = vsel %vm1152, %v2828, 0.0
      %v2918 = vsel %vm1153, %v2830, 0.0
      %v2919 = vsel %vm1154, %v2832, 0.0
      %v2920 = vsel %vm1155, %v2834, 0.0
      %v2921 = vsel %vm1156, %v2836, 0.0
      %v2922 = vsel %vm1157, %v2838, 0.0
      %v2923 = vsel %vm1158, %v2840, 0.0
      %v2924 = vsel %vm1159, %v2842, 0.0
      %v2925 = vsel %vm1160, %v2844, 0.0
      %v2926 = vsel %vm1161, %v2846, 0.0
      %v2927 = vsel %vm1162, %v2848, 0.0
      %v2928 = vsel %vm1163, %v2850, 0.0
      %v2929 = vsel %vm1164, %v2852, 0.0
      %v2930 = vsel %vm1165, %v2854, 0.0
      %v2931 = vsel %vm1166, %v2856, 0.0
      %v2932 = vsel %vm1167, %v2858, 0.0
      %v2933 = vsel %vm1168, %v2860, 0.0
      %v2934 = vsel %vm1169, %v2862, 0.0
      %v2935 = vsel %vm1170, %v2864, 0.0
      %v2936 = vsel %vm1171, %v2866, 0.0
      %v2937 = vsel %vm1172, %v2868, 0.0
      %v2938 = vsel %vm1173, %v2870, 0.0
      %v2939 = vsel %vm1174, %v2872, 0.0
      %v2940 = vsel %vm1175, %v2874, 0.0
      %v2941 = vsel %vm1176, %v2876, 0.0
      %v2942 = vsel %vm1177, %v2878, 0.0
      %v2943 = vsel %vm1178, %v2911, 0.0
      %2944 = vst.msk [vmem:[#allocation2] sm:$0xff] %vm1211, 0.0
      %2945 = vst.msk [vmem:[#allocation2 + $0x8] sm:$0xff] %vm1211, 0.0
      %2946 = vst.msk [vmem:[#allocation2 + $0x10] sm:$0xff] %vm1211, %v2784
      %2947 = vst.msk [vmem:[#allocation2 + $0x18] sm:$0xff] %vm1211, %v2785
      %2948 = vst.msk [vmem:[#allocation2 + $0x20] sm:$0xff] %vm1211, %v2786
      %2949 = vst.msk [vmem:[#allocation2 + $0x28] sm:$0xff] %vm1211, %v2787
      %2950 = vst.msk [vmem:[#allocation2 + $0x30] sm:$0xff] %vm1211, %v2788
      %2951 = vst.msk [vmem:[#allocation2 + $0x38] sm:$0xff] %vm1211, %v2789
      %2952 = vst.msk [vmem:[#allocation2 + $0x40] sm:$0xff] %vm1211, %v2790
      %2953 = vst.msk [vmem:[#allocation2 + $0x48] sm:$0xff] %vm1211, %v2791
      %2954 = vst.msk [vmem:[#allocation2 + $0x50] sm:$0xff] %vm1211, %v2792
      %2955 = vst.msk [vmem:[#allocation2 + $0x58] sm:$0xff] %vm1211, %v2793
      %2956 = vst.msk [vmem:[#allocation2 + $0x60] sm:$0xff] %vm1211, %v2794
      %2957 = vst.msk [vmem:[#allocation2 + $0x68] sm:$0xff] %vm1211, %v2795
      %2958 = vst.msk [vmem:[#allocation2 + $0x70] sm:$0xff] %vm1211, %v2796
      %2959 = vst.msk [vmem:[#allocation2 + $0x78] sm:$0xff] %vm1211, %v2797
      %2960 = vst.msk [vmem:[#allocation2 + $0x80] sm:$0xff] %vm1211, %v2798
      %2961 = vst.msk [vmem:[#allocation2 + $0x88] sm:$0xff] %vm1211, %v2799
      %2962 = vst.msk [vmem:[#allocation2 + $0x90] sm:$0xff] %vm1211, %v2800
      %2963 = vst.msk [vmem:[#allocation2 + $0x98] sm:$0xff] %vm1211, %v2801
      %2964 = vst.msk [vmem:[#allocation2 + $0xa0] sm:$0xff] %vm1211, %v2802
      %2965 = vst.msk [vmem:[#allocation2 + $0xa8] sm:$0xff] %vm1211, %v2803
      %2966 = vst.msk [vmem:[#allocation2 + $0xb0] sm:$0xff] %vm1211, %v2804
      %2967 = vst.msk [vmem:[#allocation2 + $0xb8] sm:$0xff] %vm1211, %v2805
      %2968 = vst.msk [vmem:[#allocation2 + $0xc0] sm:$0xff] %vm1211, %v2806
      %2969 = vst.msk [vmem:[#allocation2 + $0xc8] sm:$0xff] %vm1211, %v2807
      %2970 = vst.msk [vmem:[#allocation2 + $0xd0] sm:$0xff] %vm1211, %v2808
      %2971 = vst.msk [vmem:[#allocation2 + $0xd8] sm:$0xff] %vm1211, %v2809
      %2972 = vst.msk [vmem:[#allocation2 + $0xe0] sm:$0xff] %vm1211, %v2810
      %2973 = vst.msk [vmem:[#allocation2 + $0xe8] sm:$0xff] %vm1211, %v2811
      %2974 = vst.msk [vmem:[#allocation2 + $0xf0] sm:$0xff] %vm1211, %v2812
      %2975 = vst.msk [vmem:[#allocation2 + $0xf8] sm:$0xff] %vm1211, %v2813
      %3008 = vrot.lane.b32.xlu0 %v2784, 24
      %v3009 = vpop.permute.xlu0 %3008
      %3010 = vrot.lane.b32.xlu0 %v2785, 24
      %v3011 = vpop.permute.xlu0 %3010
      %3012 = vrot.lane.b32.xlu0 %v2786, 24
      %v3013 = vpop.permute.xlu0 %3012
      %3014 = vrot.lane.b32.xlu0 %v2787, 24
      %v3015 = vpop.permute.xlu0 %3014
      %3016 = vrot.lane.b32.xlu0 %v2788, 24
      %v3017 = vpop.permute.xlu0 %3016
      %3018 = vrot.lane.b32.xlu0 %v2789, 24
      %v3019 = vpop.permute.xlu0 %3018
      %3020 = vrot.lane.b32.xlu0 %v2790, 24
      %v3021 = vpop.permute.xlu0 %3020
      %3022 = vrot.lane.b32.xlu0 %v2791, 24
      %v3023 = vpop.permute.xlu0 %3022
      %3024 = vrot.lane.b32.xlu0 %v2792, 24
      %v3025 = vpop.permute.xlu0 %3024
      %3026 = vrot.lane.b32.xlu0 %v2793, 24
      %v3027 = vpop.permute.xlu0 %3026
      %3028 = vrot.lane.b32.xlu0 %v2794, 24
      %v3029 = vpop.permute.xlu0 %3028
      %3030 = vrot.lane.b32.xlu0 %v2795, 24
      %v3031 = vpop.permute.xlu0 %3030
      %3032 = vrot.lane.b32.xlu0 %v2796, 24
      %v3033 = vpop.permute.xlu0 %3032
      %3034 = vrot.lane.b32.xlu0 %v2797, 24
      %v3035 = vpop.permute.xlu0 %3034
      %3036 = vrot.lane.b32.xlu0 %v2798, 24
      %v3037 = vpop.permute.xlu0 %3036
      %3038 = vrot.lane.b32.xlu0 %v2799, 24
      %v3039 = vpop.permute.xlu0 %3038
      %3040 = vrot.lane.b32.xlu0 %v2800, 24
      %v3041 = vpop.permute.xlu0 %3040
      %3042 = vrot.lane.b32.xlu0 %v2801, 24
      %v3043 = vpop.permute.xlu0 %3042
      %3044 = vrot.lane.b32.xlu0 %v2802, 24
      %v3045 = vpop.permute.xlu0 %3044
      %3046 = vrot.lane.b32.xlu0 %v2803, 24
      %v3047 = vpop.permute.xlu0 %3046
      %3048 = vrot.lane.b32.xlu0 %v2804, 24
      %v3049 = vpop.permute.xlu0 %3048
      %3050 = vrot.lane.b32.xlu0 %v2805, 24
      %v3051 = vpop.permute.xlu0 %3050
      %3052 = vrot.lane.b32.xlu0 %v2806, 24
      %v3053 = vpop.permute.xlu0 %3052
      %3054 = vrot.lane.b32.xlu0 %v2807, 24
      %v3055 = vpop.permute.xlu0 %3054
      %3056 = vrot.lane.b32.xlu0 %v2808, 24
      %v3057 = vpop.permute.xlu0 %3056
      %3058 = vrot.lane.b32.xlu0 %v2809, 24
      %v3059 = vpop.permute.xlu0 %3058
      %3060 = vrot.lane.b32.xlu0 %v2810, 24
      %v3061 = vpop.permute.xlu0 %3060
      %3062 = vrot.lane.b32.xlu0 %v2811, 24
      %v3063 = vpop.permute.xlu0 %3062
      %3064 = vrot.lane.b32.xlu0 %v2812, 24
      %v3065 = vpop.permute.xlu0 %3064
      %3066 = vrot.lane.b32.xlu0 %v2813, 24
      %v3067 = vpop.permute.xlu0 %3066
      %3068 = vrot.lane.b32.xlu0 %v2814, 24
      %v3069 = vpop.permute.xlu0 %3068
      %3070 = vrot.lane.b32.xlu0 %v2815, 24
      %v3071 = vpop.permute.xlu0 %3070
      %3104 = vst.msk [vmem:[#allocation2] sm:$0xff] %vm1372, %v3009
      %3105 = vst.msk [vmem:[#allocation2 + $0x8] sm:$0xff] %vm1372, %v3011
      %3106 = vst.msk [vmem:[#allocation2 + $0x10] sm:$0xff] %vm1372, %v3013
      %3107 = vst.msk [vmem:[#allocation2 + $0x18] sm:$0xff] %vm1372, %v3015
      %3108 = vst.msk [vmem:[#allocation2 + $0x20] sm:$0xff] %vm1372, %v3017
      %3109 = vst.msk [vmem:[#allocation2 + $0x28] sm:$0xff] %vm1372, %v3019
      %3110 = vst.msk [vmem:[#allocation2 + $0x30] sm:$0xff] %vm1372, %v3021
      %3111 = vst.msk [vmem:[#allocation2 + $0x38] sm:$0xff] %vm1372, %v3023
      %3112 = vst.msk [vmem:[#allocation2 + $0x40] sm:$0xff] %vm1372, %v3025
      %3113 = vst.msk [vmem:[#allocation2 + $0x48] sm:$0xff] %vm1372, %v3027
      %3114 = vst.msk [vmem:[#allocation2 + $0x50] sm:$0xff] %vm1372, %v3029
      %3115 = vst.msk [vmem:[#allocation2 + $0x58] sm:$0xff] %vm1372, %v3031
      %3116 = vst.msk [vmem:[#allocation2 + $0x60] sm:$0xff] %vm1372, %v3033
      %3117 = vst.msk [vmem:[#allocation2 + $0x68] sm:$0xff] %vm1372, %v3035
      %3118 = vst.msk [vmem:[#allocation2 + $0x70] sm:$0xff] %vm1372, %v3037
      %3119 = vst.msk [vmem:[#allocation2 + $0x78] sm:$0xff] %vm1372, %v3039
      %3120 = vst.msk [vmem:[#allocation2 + $0x80] sm:$0xff] %vm1372, %v3041
      %3121 = vst.msk [vmem:[#allocation2 + $0x88] sm:$0xff] %vm1372, %v3043
      %3122 = vst.msk [vmem:[#allocation2 + $0x90] sm:$0xff] %vm1372, %v3045
      %3123 = vst.msk [vmem:[#allocation2 + $0x98] sm:$0xff] %vm1372, %v3047
      %3124 = vst.msk [vmem:[#allocation2 + $0xa0] sm:$0xff] %vm1372, %v3049
      %3125 = vst.msk [vmem:[#allocation2 + $0xa8] sm:$0xff] %vm1372, %v3051
      %3126 = vst.msk [vmem:[#allocation2 + $0xb0] sm:$0xff] %vm1372, %v3053
      %3127 = vst.msk [vmem:[#allocation2 + $0xb8] sm:$0xff] %vm1372, %v3055
      %3128 = vst.msk [vmem:[#allocation2 + $0xc0] sm:$0xff] %vm1372, %v3057
      %3129 = vst.msk [vmem:[#allocation2 + $0xc8] sm:$0xff] %vm1372, %v3059
      %3130 = vst.msk [vmem:[#allocation2 + $0xd0] sm:$0xff] %vm1372, %v3061
      %3131 = vst.msk [vmem:[#allocation2 + $0xd8] sm:$0xff] %vm1372, %v3063
      %3132 = vst.msk [vmem:[#allocation2 + $0xe0] sm:$0xff] %vm1372, %v3065
      %3133 = vst.msk [vmem:[#allocation2 + $0xe8] sm:$0xff] %vm1372, %v3067
      %3134 = vst.msk [vmem:[#allocation2 + $0xf0] sm:$0xff] %vm1372, %v3069
      %3135 = vst.msk [vmem:[#allocation2 + $0xf8] sm:$0xff] %vm1372, %v3071
      %3136 = vrot.lane.b32.xlu0 %v2786, 48
      %v3137 = vpop.permute.xlu0 %3136
      %3138 = vrot.lane.b32.xlu0 %v2787, 48
      %v3139 = vpop.permute.xlu0 %3138
      %3140 = vrot.lane.b32.xlu0 %v2788, 48
      %v3141 = vpop.permute.xlu0 %3140
      %3142 = vrot.lane.b32.xlu0 %v2789, 48
      %v3143 = vpop.permute.xlu0 %3142
      %3144 = vrot.lane.b32.xlu0 %v2790, 48
      %v3145 = vpop.permute.xlu0 %3144
      %3146 = vrot.lane.b32.xlu0 %v2791, 48
      %v3147 = vpop.permute.xlu0 %3146
      %3148 = vrot.lane.b32.xlu0 %v2792, 48
      %v3149 = vpop.permute.xlu0 %3148
      %3150 = vrot.lane.b32.xlu0 %v2793, 48
      %v3151 = vpop.permute.xlu0 %3150
      %3152 = vrot.lane.b32.xlu0 %v2794, 48
      %v3153 = vpop.permute.xlu0 %3152
      %3154 = vrot.lane.b32.xlu0 %v2795, 48
      %v3155 = vpop.permute.xlu0 %3154
      %3156 = vrot.lane.b32.xlu0 %v2796, 48
      %v3157 = vpop.permute.xlu0 %3156
      %3158 = vrot.lane.b32.xlu0 %v2797, 48
      %v3159 = vpop.permute.xlu0 %3158
      %3160 = vrot.lane.b32.xlu0 %v2798, 48
      %v3161 = vpop.permute.xlu0 %3160
      %3162 = vrot.lane.b32.xlu0 %v2799, 48
      %v3163 = vpop.permute.xlu0 %3162
      %3164 = vrot.lane.b32.xlu0 %v2800, 48
      %v3165 = vpop.permute.xlu0 %3164
      %3166 = vrot.lane.b32.xlu0 %v2801, 48
      %v3167 = vpop.permute.xlu0 %3166
      %3168 = vrot.lane.b32.xlu0 %v2802, 48
      %v3169 = vpop.permute.xlu0 %3168
      %3170 = vrot.lane.b32.xlu0 %v2803, 48
      %v3171 = vpop.permute.xlu0 %3170
      %3172 = vrot.lane.b32.xlu0 %v2804, 48
      %v3173 = vpop.permute.xlu0 %3172
      %3174 = vrot.lane.b32.xlu0 %v2805, 48
      %v3175 = vpop.permute.xlu0 %3174
      %3176 = vrot.lane.b32.xlu0 %v2806, 48
      %v3177 = vpop.permute.xlu0 %3176
      %3178 = vrot.lane.b32.xlu0 %v2807, 48
      %v3179 = vpop.permute.xlu0 %3178
      %3180 = vrot.lane.b32.xlu0 %v2808, 48
      %v3181 = vpop.permute.xlu0 %3180
      %3182 = vrot.lane.b32.xlu0 %v2809, 48
      %v3183 = vpop.permute.xlu0 %3182
      %3184 = vrot.lane.b32.xlu0 %v2810, 48
      %v3185 = vpop.permute.xlu0 %3184
      %3186 = vrot.lane.b32.xlu0 %v2811, 48
      %v3187 = vpop.permute.xlu0 %3186
      %3188 = vrot.lane.b32.xlu0 %v2812, 48
      %v3189 = vpop.permute.xlu0 %3188
      %3190 = vrot.lane.b32.xlu0 %v2813, 48
      %v3191 = vpop.permute.xlu0 %3190
      %3192 = vrot.lane.b32.xlu0 %v2814, 48
      %v3193 = vpop.permute.xlu0 %3192
      %3194 = vrot.lane.b32.xlu0 %v2815, 48
      %v3195 = vpop.permute.xlu0 %3194
      %3226 = vst.msk [vmem:[#allocation2] sm:$0xff] %vm1499, %v3137
      %3227 = vst.msk [vmem:[#allocation2 + $0x8] sm:$0xff] %vm1499, %v3139
      %3228 = vst.msk [vmem:[#allocation2 + $0x10] sm:$0xff] %vm1499, %v3141
      %3229 = vst.msk [vmem:[#allocation2 + $0x18] sm:$0xff] %vm1499, %v3143
      %3230 = vst.msk [vmem:[#allocation2 + $0x20] sm:$0xff] %vm1499, %v3145
      %3231 = vst.msk [vmem:[#allocation2 + $0x28] sm:$0xff] %vm1499, %v3147
      %3232 = vst.msk [vmem:[#allocation2 + $0x30] sm:$0xff] %vm1499, %v3149
      %3233 = vst.msk [vmem:[#allocation2 + $0x38] sm:$0xff] %vm1499, %v3151
      %3234 = vst.msk [vmem:[#allocation2 + $0x40] sm:$0xff] %vm1499, %v3153
      %3235 = vst.msk [vmem:[#allocation2 + $0x48] sm:$0xff] %vm1499, %v3155
      %3236 = vst.msk [vmem:[#allocation2 + $0x50] sm:$0xff] %vm1499, %v3157
      %3237 = vst.msk [vmem:[#allocation2 + $0x58] sm:$0xff] %vm1499, %v3159
      %3238 = vst.msk [vmem:[#allocation2 + $0x60] sm:$0xff] %vm1499, %v3161
      %3239 = vst.msk [vmem:[#allocation2 + $0x68] sm:$0xff] %vm1499, %v3163
      %3240 = vst.msk [vmem:[#allocation2 + $0x70] sm:$0xff] %vm1499, %v3165
      %3241 = vst.msk [vmem:[#allocation2 + $0x78] sm:$0xff] %vm1499, %v3167
      %3242 = vst.msk [vmem:[#allocation2 + $0x80] sm:$0xff] %vm1499, %v3169
      %3243 = vst.msk [vmem:[#allocation2 + $0x88] sm:$0xff] %vm1499, %v3171
      %3244 = vst.msk [vmem:[#allocation2 + $0x90] sm:$0xff] %vm1499, %v3173
      %3245 = vst.msk [vmem:[#allocation2 + $0x98] sm:$0xff] %vm1499, %v3175
      %3246 = vst.msk [vmem:[#allocation2 + $0xa0] sm:$0xff] %vm1499, %v3177
      %3247 = vst.msk [vmem:[#allocation2 + $0xa8] sm:$0xff] %vm1499, %v3179
      %3248 = vst.msk [vmem:[#allocation2 + $0xb0] sm:$0xff] %vm1499, %v3181
      %3249 = vst.msk [vmem:[#allocation2 + $0xb8] sm:$0xff] %vm1499, %v3183
      %3250 = vst.msk [vmem:[#allocation2 + $0xc0] sm:$0xff] %vm1499, %v3185
      %3251 = vst.msk [vmem:[#allocation2 + $0xc8] sm:$0xff] %vm1499, %v3187
      %3252 = vst.msk [vmem:[#allocation2 + $0xd0] sm:$0xff] %vm1499, %v3189
      %3253 = vst.msk [vmem:[#allocation2 + $0xd8] sm:$0xff] %vm1499, %v3191
      %3254 = vst.msk [vmem:[#allocation2 + $0xe0] sm:$0xff] %vm1499, %v3193
      %3255 = vst.msk [vmem:[#allocation2 + $0xe8] sm:$0xff] %vm1499, %v3195
      %3256 = vst.msk [vmem:[#allocation2 + $0xf0] sm:$0xff] %vm1499, %v1467
      %3257 = vst.msk [vmem:[#allocation2 + $0xf8] sm:$0xff] %vm1499, %v1467
      %3258 = vrot.lane.b32.xlu0 %v2624, 8
      %v3259 = vpop.permute.xlu0 %3258
      %3260 = vrot.lane.b32.xlu0 %v2625, 8
      %v3261 = vpop.permute.xlu0 %3260
      %3262 = vrot.lane.b32.xlu0 %v2626, 8
      %v3263 = vpop.permute.xlu0 %3262
      %3264 = vrot.lane.b32.xlu0 %v2627, 8
      %v3265 = vpop.permute.xlu0 %3264
      %3266 = vrot.lane.b32.xlu0 %v2628, 8
      %v3267 = vpop.permute.xlu0 %3266
      %3268 = vrot.lane.b32.xlu0 %v2629, 8
      %v3269 = vpop.permute.xlu0 %3268
      %3270 = vrot.lane.b32.xlu0 %v2630, 8
      %v3271 = vpop.permute.xlu0 %3270
      %3272 = vrot.lane.b32.xlu0 %v2631, 8
      %v3273 = vpop.permute.xlu0 %3272
      %3274 = vrot.lane.b32.xlu0 %v2632, 8
      %v3275 = vpop.permute.xlu0 %3274
      %3276 = vrot.lane.b32.xlu0 %v2633, 8
      %v3277 = vpop.permute.xlu0 %3276
      %3278 = vrot.lane.b32.xlu0 %v2634, 8
      %v3279 = vpop.permute.xlu0 %3278
      %3280 = vrot.lane.b32.xlu0 %v2635, 8
      %v3281 = vpop.permute.xlu0 %3280
      %3282 = vrot.lane.b32.xlu0 %v2636, 8
      %v3283 = vpop.permute.xlu0 %3282
      %3284 = vrot.lane.b32.xlu0 %v2637, 8
      %v3285 = vpop.permute.xlu0 %3284
      %3286 = vrot.lane.b32.xlu0 %v2638, 8
      %v3287 = vpop.permute.xlu0 %3286
      %3288 = vrot.lane.b32.xlu0 %v2639, 8
      %v3289 = vpop.permute.xlu0 %3288
      %3290 = vrot.lane.b32.xlu0 %v2640, 8
      %v3291 = vpop.permute.xlu0 %3290
      %3292 = vrot.lane.b32.xlu0 %v2641, 8
      %v3293 = vpop.permute.xlu0 %3292
      %3294 = vrot.lane.b32.xlu0 %v2642, 8
      %v3295 = vpop.permute.xlu0 %3294
      %3296 = vrot.lane.b32.xlu0 %v2643, 8
      %v3297 = vpop.permute.xlu0 %3296
      %3298 = vrot.lane.b32.xlu0 %v2644, 8
      %v3299 = vpop.permute.xlu0 %3298
      %3300 = vrot.lane.b32.xlu0 %v2645, 8
      %v3301 = vpop.permute.xlu0 %3300
      %3302 = vrot.lane.b32.xlu0 %v2646, 8
      %v3303 = vpop.permute.xlu0 %3302
      %3304 = vrot.lane.b32.xlu0 %v2647, 8
      %v3305 = vpop.permute.xlu0 %3304
      %3306 = vrot.lane.b32.xlu0 %v2648, 8
      %v3307 = vpop.permute.xlu0 %3306
      %3308 = vrot.lane.b32.xlu0 %v2649, 8
      %v3309 = vpop.permute.xlu0 %3308
      %3310 = vrot.lane.b32.xlu0 %v2650, 8
      %v3311 = vpop.permute.xlu0 %3310
      %3312 = vrot.lane.b32.xlu0 %v2651, 8
      %v3313 = vpop.permute.xlu0 %3312
      %3314 = vrot.lane.b32.xlu0 %v2652, 8
      %v3315 = vpop.permute.xlu0 %3314
      %3316 = vrot.lane.b32.xlu0 %v2653, 8
      %v3317 = vpop.permute.xlu0 %3316
      %3348 = vst.msk [vmem:[#allocation2] sm:$0xff] %vm1625, %v1533
      %3349 = vst.msk [vmem:[#allocation2 + $0x8] sm:$0xff] %vm1625, %v1533
      %3350 = vst.msk [vmem:[#allocation2 + $0x10] sm:$0xff] %vm1625, %v3259
      %3351 = vst.msk [vmem:[#allocation2 + $0x18] sm:$0xff] %vm1625, %v3261
      %3352 = vst.msk [vmem:[#allocation2 + $0x20] sm:$0xff] %vm1625, %v3263
      %3353 = vst.msk [vmem:[#allocation2 + $0x28] sm:$0xff] %vm1625, %v3265
      %3354 = vst.msk [vmem:[#allocation2 + $0x30] sm:$0xff] %vm1625, %v3267
      %3355 = vst.msk [vmem:[#allocation2 + $0x38] sm:$0xff] %vm1625, %v3269
      %3356 = vst.msk [vmem:[#allocation2 + $0x40] sm:$0xff] %vm1625, %v3271
      %3357 = vst.msk [vmem:[#allocation2 + $0x48] sm:$0xff] %vm1625, %v3273
      %3358 = vst.msk [vmem:[#allocation2 + $0x50] sm:$0xff] %vm1625, %v3275
      %3359 = vst.msk [vmem:[#allocation2 + $0x58] sm:$0xff] %vm1625, %v3277
      %3360 = vst.msk [vmem:[#allocation2 + $0x60] sm:$0xff] %vm1625, %v3279
      %3361 = vst.msk [vmem:[#allocation2 + $0x68] sm:$0xff] %vm1625, %v3281
      %3362 = vst.msk [vmem:[#allocation2 + $0x70] sm:$0xff] %vm1625, %v3283
      %3363 = vst.msk [vmem:[#allocation2 + $0x78] sm:$0xff] %vm1625, %v3285
      %3364 = vst.msk [vmem:[#allocation2 + $0x80] sm:$0xff] %vm1625, %v3287
      %3365 = vst.msk [vmem:[#allocation2 + $0x88] sm:$0xff] %vm1625, %v3289
      %3366 = vst.msk [vmem:[#allocation2 + $0x90] sm:$0xff] %vm1625, %v3291
      %3367 = vst.msk [vmem:[#allocation2 + $0x98] sm:$0xff] %vm1625, %v3293
      %3368 = vst.msk [vmem:[#allocation2 + $0xa0] sm:$0xff] %vm1625, %v3295
      %3369 = vst.msk [vmem:[#allocation2 + $0xa8] sm:$0xff] %vm1625, %v3297
      %3370 = vst.msk [vmem:[#allocation2 + $0xb0] sm:$0xff] %vm1625, %v3299
      %3371 = vst.msk [vmem:[#allocation2 + $0xb8] sm:$0xff] %vm1625, %v3301
      %3372 = vst.msk [vmem:[#allocation2 + $0xc0] sm:$0xff] %vm1625, %v3303
      %3373 = vst.msk [vmem:[#allocation2 + $0xc8] sm:$0xff] %vm1625, %v3305
      %3374 = vst.msk [vmem:[#allocation2 + $0xd0] sm:$0xff] %vm1625, %v3307
      %3375 = vst.msk [vmem:[#allocation2 + $0xd8] sm:$0xff] %vm1625, %v3309
      %3376 = vst.msk [vmem:[#allocation2 + $0xe0] sm:$0xff] %vm1625, %v3311
      %3377 = vst.msk [vmem:[#allocation2 + $0xe8] sm:$0xff] %vm1625, %v3313
      %3378 = vst.msk [vmem:[#allocation2 + $0xf0] sm:$0xff] %vm1625, %v3315
      %3379 = vst.msk [vmem:[#allocation2 + $0xf8] sm:$0xff] %vm1625, %v3317
      %3380 = vrot.lane.b32.xlu0 %v2624, 32
      %v3381 = vpop.permute.xlu0 %3380
      %3382 = vrot.lane.b32.xlu0 %v2625, 32
      %v3383 = vpop.permute.xlu0 %3382
      %3384 = vrot.lane.b32.xlu0 %v2626, 32
      %v3385 = vpop.permute.xlu0 %3384
      %3386 = vrot.lane.b32.xlu0 %v2627, 32
      %v3387 = vpop.permute.xlu0 %3386
      %3388 = vrot.lane.b32.xlu0 %v2628, 32
      %v3389 = vpop.permute.xlu0 %3388
      %3390 = vrot.lane.b32.xlu0 %v2629, 32
      %v3391 = vpop.permute.xlu0 %3390
      %3392 = vrot.lane.b32.xlu0 %v2630, 32
      %v3393 = vpop.permute.xlu0 %3392
      %3394 = vrot.lane.b32.xlu0 %v2631, 32
      %v3395 = vpop.permute.xlu0 %3394
      %3396 = vrot.lane.b32.xlu0 %v2632, 32
      %v3397 = vpop.permute.xlu0 %3396
      %3398 = vrot.lane.b32.xlu0 %v2633, 32
      %v3399 = vpop.permute.xlu0 %3398
      %3400 = vrot.lane.b32.xlu0 %v2634, 32
      %v3401 = vpop.permute.xlu0 %3400
      %3402 = vrot.lane.b32.xlu0 %v2635, 32
      %v3403 = vpop.permute.xlu0 %3402
      %3404 = vrot.lane.b32.xlu0 %v2636, 32
      %v3405 = vpop.permute.xlu0 %3404
      %3406 = vrot.lane.b32.xlu0 %v2637, 32
      %v3407 = vpop.permute.xlu0 %3406
      %3408 = vrot.lane.b32.xlu0 %v2638, 32
      %v3409 = vpop.permute.xlu0 %3408
      %3410 = vrot.lane.b32.xlu0 %v2639, 32
      %v3411 = vpop.permute.xlu0 %3410
      %3412 = vrot.lane.b32.xlu0 %v2640, 32
      %v3413 = vpop.permute.xlu0 %3412
      %3414 = vrot.lane.b32.xlu0 %v2641, 32
      %v3415 = vpop.permute.xlu0 %3414
      %3416 = vrot.lane.b32.xlu0 %v2642, 32
      %v3417 = vpop.permute.xlu0 %3416
      %3418 = vrot.lane.b32.xlu0 %v2643, 32
      %v3419 = vpop.permute.xlu0 %3418
      %3420 = vrot.lane.b32.xlu0 %v2644, 32
      %v3421 = vpop.permute.xlu0 %3420
      %3422 = vrot.lane.b32.xlu0 %v2645, 32
      %v3423 = vpop.permute.xlu0 %3422
      %3424 = vrot.lane.b32.xlu0 %v2646, 32
      %v3425 = vpop.permute.xlu0 %3424
      %3426 = vrot.lane.b32.xlu0 %v2647, 32
      %v3427 = vpop.permute.xlu0 %3426
      %3428 = vrot.lane.b32.xlu0 %v2648, 32
      %v3429 = vpop.permute.xlu0 %3428
      %3430 = vrot.lane.b32.xlu0 %v2649, 32
      %v3431 = vpop.permute.xlu0 %3430
      %3432 = vrot.lane.b32.xlu0 %v2650, 32
      %v3433 = vpop.permute.xlu0 %3432
      %3434 = vrot.lane.b32.xlu0 %v2651, 32
      %v3435 = vpop.permute.xlu0 %3434
      %3436 = vrot.lane.b32.xlu0 %v2652, 32
      %v3437 = vpop.permute.xlu0 %3436
      %3438 = vrot.lane.b32.xlu0 %v2653, 32
      %v3439 = vpop.permute.xlu0 %3438
      %3440 = vrot.lane.b32.xlu0 %v2654, 32
      %v3441 = vpop.permute.xlu0 %3440
      %3442 = vrot.lane.b32.xlu0 %v2655, 32
      %v3443 = vpop.permute.xlu0 %3442
      %3476 = vst.msk [vmem:[#allocation2] sm:$0xff] %vm1754, %v3381
      %3477 = vst.msk [vmem:[#allocation2 + $0x8] sm:$0xff] %vm1754, %v3383
      %3478 = vst.msk [vmem:[#allocation2 + $0x10] sm:$0xff] %vm1754, %v3385
      %3479 = vst.msk [vmem:[#allocation2 + $0x18] sm:$0xff] %vm1754, %v3387
      %3480 = vst.msk [vmem:[#allocation2 + $0x20] sm:$0xff] %vm1754, %v3389
      %3481 = vst.msk [vmem:[#allocation2 + $0x28] sm:$0xff] %vm1754, %v3391
      %3482 = vst.msk [vmem:[#allocation2 + $0x30] sm:$0xff] %vm1754, %v3393
      %3483 = vst.msk [vmem:[#allocation2 + $0x38] sm:$0xff] %vm1754, %v3395
      %3484 = vst.msk [vmem:[#allocation2 + $0x40] sm:$0xff] %vm1754, %v3397
      %3485 = vst.msk [vmem:[#allocation2 + $0x48] sm:$0xff] %vm1754, %v3399
      %3486 = vst.msk [vmem:[#allocation2 + $0x50] sm:$0xff] %vm1754, %v3401
      %3487 = vst.msk [vmem:[#allocation2 + $0x58] sm:$0xff] %vm1754, %v3403
      %3488 = vst.msk [vmem:[#allocation2 + $0x60] sm:$0xff] %vm1754, %v3405
      %3489 = vst.msk [vmem:[#allocation2 + $0x68] sm:$0xff] %vm1754, %v3407
      %3490 = vst.msk [vmem:[#allocation2 + $0x70] sm:$0xff] %vm1754, %v3409
      %3491 = vst.msk [vmem:[#allocation2 + $0x78] sm:$0xff] %vm1754, %v3411
      %3492 = vst.msk [vmem:[#allocation2 + $0x80] sm:$0xff] %vm1754, %v3413
      %3493 = vst.msk [vmem:[#allocation2 + $0x88] sm:$0xff] %vm1754, %v3415
      %3494 = vst.msk [vmem:[#allocation2 + $0x90] sm:$0xff] %vm1754, %v3417
      %3495 = vst.msk [vmem:[#allocation2 + $0x98] sm:$0xff] %vm1754, %v3419
      %3496 = vst.msk [vmem:[#allocation2 + $0xa0] sm:$0xff] %vm1754, %v3421
      %3497 = vst.msk [vmem:[#allocation2 + $0xa8] sm:$0xff] %vm1754, %v3423
      %3498 = vst.msk [vmem:[#allocation2 + $0xb0] sm:$0xff] %vm1754, %v3425
      %3499 = vst.msk [vmem:[#allocation2 + $0xb8] sm:$0xff] %vm1754, %v3427
      %3500 = vst.msk [vmem:[#allocation2 + $0xc0] sm:$0xff] %vm1754, %v3429
      %3501 = vst.msk [vmem:[#allocation2 + $0xc8] sm:$0xff] %vm1754, %v3431
      %3502 = vst.msk [vmem:[#allocation2 + $0xd0] sm:$0xff] %vm1754, %v3433
      %3503 = vst.msk [vmem:[#allocation2 + $0xd8] sm:$0xff] %vm1754, %v3435
      %3504 = vst.msk [vmem:[#allocation2 + $0xe0] sm:$0xff] %vm1754, %v3437
      %3505 = vst.msk [vmem:[#allocation2 + $0xe8] sm:$0xff] %vm1754, %v3439
      %3506 = vst.msk [vmem:[#allocation2 + $0xf0] sm:$0xff] %vm1754, %v3441
      %3507 = vst.msk [vmem:[#allocation2 + $0xf8] sm:$0xff] %vm1754, %v3443
      %3508 = vrot.lane.b32.xlu0 %v2626, 56
      %v3509 = vpop.permute.xlu0 %3508
      %3510 = vrot.lane.b32.xlu0 %v2627, 56
      %v3511 = vpop.permute.xlu0 %3510
      %3512 = vrot.lane.b32.xlu0 %v2628, 56
      %v3513 = vpop.permute.xlu0 %3512
      %3514 = vrot.lane.b32.xlu0 %v2629, 56
      %v3515 = vpop.permute.xlu0 %3514
      %3516 = vrot.lane.b32.xlu0 %v2630, 56
      %v3517 = vpop.permute.xlu0 %3516
      %3518 = vrot.lane.b32.xlu0 %v2631, 56
      %v3519 = vpop.permute.xlu0 %3518
      %3520 = vrot.lane.b32.xlu0 %v2632, 56
      %v3521 = vpop.permute.xlu0 %3520
      %3522 = vrot.lane.b32.xlu0 %v2633, 56
      %v3523 = vpop.permute.xlu0 %3522
      %3524 = vrot.lane.b32.xlu0 %v2634, 56
      %v3525 = vpop.permute.xlu0 %3524
      %3526 = vrot.lane.b32.xlu0 %v2635, 56
      %v3527 = vpop.permute.xlu0 %3526
      %3528 = vrot.lane.b32.xlu0 %v2636, 56
      %v3529 = vpop.permute.xlu0 %3528
      %3530 = vrot.lane.b32.xlu0 %v2637, 56
      %v3531 = vpop.permute.xlu0 %3530
      %3532 = vrot.lane.b32.xlu0 %v2638, 56
      %v3533 = vpop.permute.xlu0 %3532
      %3534 = vrot.lane.b32.xlu0 %v2639, 56
      %v3535 = vpop.permute.xlu0 %3534
      %3536 = vrot.lane.b32.xlu0 %v2640, 56
      %v3537 = vpop.permute.xlu0 %3536
      %3538 = vrot.lane.b32.xlu0 %v2641, 56
      %v3539 = vpop.permute.xlu0 %3538
      %3540 = vrot.lane.b32.xlu0 %v2642, 56
      %v3541 = vpop.permute.xlu0 %3540
      %3542 = vrot.lane.b32.xlu0 %v2643, 56
      %v3543 = vpop.permute.xlu0 %3542
      %3544 = vrot.lane.b32.xlu0 %v2644, 56
      %v3545 = vpop.permute.xlu0 %3544
      %3546 = vrot.lane.b32.xlu0 %v2645, 56
      %v3547 = vpop.permute.xlu0 %3546
      %3548 = vrot.lane.b32.xlu0 %v2646, 56
      %v3549 = vpop.permute.xlu0 %3548
      %3550 = vrot.lane.b32.xlu0 %v2647, 56
      %v3551 = vpop.permute.xlu0 %3550
      %3552 = vrot.lane.b32.xlu0 %v2648, 56
      %v3553 = vpop.permute.xlu0 %3552
      %3554 = vrot.lane.b32.xlu0 %v2649, 56
      %v3555 = vpop.permute.xlu0 %3554
      %3556 = vrot.lane.b32.xlu0 %v2650, 56
      %v3557 = vpop.permute.xlu0 %3556
      %3558 = vrot.lane.b32.xlu0 %v2651, 56
      %v3559 = vpop.permute.xlu0 %3558
      %3560 = vrot.lane.b32.xlu0 %v2652, 56
      %v3561 = vpop.permute.xlu0 %3560
      %3562 = vrot.lane.b32.xlu0 %v2653, 56
      %v3563 = vpop.permute.xlu0 %3562
      %3564 = vrot.lane.b32.xlu0 %v2654, 56
      %v3565 = vpop.permute.xlu0 %3564
      %3566 = vrot.lane.b32.xlu0 %v2655, 56
      %v3567 = vpop.permute.xlu0 %3566
      %3598 = vst.msk [vmem:[#allocation2] sm:$0xff] %vm1880, %v3509
      %3599 = vst.msk [vmem:[#allocation2 + $0x8] sm:$0xff] %vm1880, %v3511
      %3600 = vst.msk [vmem:[#allocation2 + $0x10] sm:$0xff] %vm1880, %v3513
      %3601 = vst.msk [vmem:[#allocation2 + $0x18] sm:$0xff] %vm1880, %v3515
      %3602 = vst.msk [vmem:[#allocation2 + $0x20] sm:$0xff] %vm1880, %v3517
      %3603 = vst.msk [vmem:[#allocation2 + $0x28] sm:$0xff] %vm1880, %v3519
      %3604 = vst.msk [vmem:[#allocation2 + $0x30] sm:$0xff] %vm1880, %v3521
      %3605 = vst.msk [vmem:[#allocation2 + $0x38] sm:$0xff] %vm1880, %v3523
      %3606 = vst.msk [vmem:[#allocation2 + $0x40] sm:$0xff] %vm1880, %v3525
      %3607 = vst.msk [vmem:[#allocation2 + $0x48] sm:$0xff] %vm1880, %v3527
      %3608 = vst.msk [vmem:[#allocation2 + $0x50] sm:$0xff] %vm1880, %v3529
      %3609 = vst.msk [vmem:[#allocation2 + $0x58] sm:$0xff] %vm1880, %v3531
      %3610 = vst.msk [vmem:[#allocation2 + $0x60] sm:$0xff] %vm1880, %v3533
      %3611 = vst.msk [vmem:[#allocation2 + $0x68] sm:$0xff] %vm1880, %v3535
      %3612 = vst.msk [vmem:[#allocation2 + $0x70] sm:$0xff] %vm1880, %v3537
      %3613 = vst.msk [vmem:[#allocation2 + $0x78] sm:$0xff] %vm1880, %v3539
      %3614 = vst.msk [vmem:[#allocation2 + $0x80] sm:$0xff] %vm1880, %v3541
      %3615 = vst.msk [vmem:[#allocation2 + $0x88] sm:$0xff] %vm1880, %v3543
      %3616 = vst.msk [vmem:[#allocation2 + $0x90] sm:$0xff] %vm1880, %v3545
      %3617 = vst.msk [vmem:[#allocation2 + $0x98] sm:$0xff] %vm1880, %v3547
      %3618 = vst.msk [vmem:[#allocation2 + $0xa0] sm:$0xff] %vm1880, %v3549
      %3619 = vst.msk [vmem:[#allocation2 + $0xa8] sm:$0xff] %vm1880, %v3551
      %3620 = vst.msk [vmem:[#allocation2 + $0xb0] sm:$0xff] %vm1880, %v3553
      %3621 = vst.msk [vmem:[#allocation2 + $0xb8] sm:$0xff] %vm1880, %v3555
      %3622 = vst.msk [vmem:[#allocation2 + $0xc0] sm:$0xff] %vm1880, %v3557
      %3623 = vst.msk [vmem:[#allocation2 + $0xc8] sm:$0xff] %vm1880, %v3559
      %3624 = vst.msk [vmem:[#allocation2 + $0xd0] sm:$0xff] %vm1880, %v3561
      %3625 = vst.msk [vmem:[#allocation2 + $0xd8] sm:$0xff] %vm1880, %v3563
      %3626 = vst.msk [vmem:[#allocation2 + $0xe0] sm:$0xff] %vm1880, %v3565
      %3627 = vst.msk [vmem:[#allocation2 + $0xe8] sm:$0xff] %vm1880, %v3567
      %3628 = vst.msk [vmem:[#allocation2 + $0xf0] sm:$0xff] %vm1880, %v1848
      %3629 = vst.msk [vmem:[#allocation2 + $0xf8] sm:$0xff] %vm1880, %v1848
      %3660 = vrot.lane.b32.xlu0 %v2912, 16
      %v3661 = vpop.permute.xlu0 %3660
      %3662 = vrot.lane.b32.xlu0 %v2913, 16
      %v3663 = vpop.permute.xlu0 %3662
      %3664 = vrot.lane.b32.xlu0 %v2914, 16
      %v3665 = vpop.permute.xlu0 %3664
      %3666 = vrot.lane.b32.xlu0 %v2915, 16
      %v3667 = vpop.permute.xlu0 %3666
      %3668 = vrot.lane.b32.xlu0 %v2916, 16
      %v3669 = vpop.permute.xlu0 %3668
      %3670 = vrot.lane.b32.xlu0 %v2917, 16
      %v3671 = vpop.permute.xlu0 %3670
      %3672 = vrot.lane.b32.xlu0 %v2918, 16
      %v3673 = vpop.permute.xlu0 %3672
      %3674 = vrot.lane.b32.xlu0 %v2919, 16
      %v3675 = vpop.permute.xlu0 %3674
      %3676 = vrot.lane.b32.xlu0 %v2920, 16
      %v3677 = vpop.permute.xlu0 %3676
      %3678 = vrot.lane.b32.xlu0 %v2921, 16
      %v3679 = vpop.permute.xlu0 %3678
      %3680 = vrot.lane.b32.xlu0 %v2922, 16
      %v3681 = vpop.permute.xlu0 %3680
      %3682 = vrot.lane.b32.xlu0 %v2923, 16
      %v3683 = vpop.permute.xlu0 %3682
      %3684 = vrot.lane.b32.xlu0 %v2924, 16
      %v3685 = vpop.permute.xlu0 %3684
      %3686 = vrot.lane.b32.xlu0 %v2925, 16
      %v3687 = vpop.permute.xlu0 %3686
      %3688 = vrot.lane.b32.xlu0 %v2926, 16
      %v3689 = vpop.permute.xlu0 %3688
      %3690 = vrot.lane.b32.xlu0 %v2927, 16
      %v3691 = vpop.permute.xlu0 %3690
      %3692 = vrot.lane.b32.xlu0 %v2928, 16
      %v3693 = vpop.permute.xlu0 %3692
      %3694 = vrot.lane.b32.xlu0 %v2929, 16
      %v3695 = vpop.permute.xlu0 %3694
      %3696 = vrot.lane.b32.xlu0 %v2930, 16
      %v3697 = vpop.permute.xlu0 %3696
      %3698 = vrot.lane.b32.xlu0 %v2931, 16
      %v3699 = vpop.permute.xlu0 %3698
      %3700 = vrot.lane.b32.xlu0 %v2932, 16
      %v3701 = vpop.permute.xlu0 %3700
      %3702 = vrot.lane.b32.xlu0 %v2933, 16
      %v3703 = vpop.permute.xlu0 %3702
      %3704 = vrot.lane.b32.xlu0 %v2934, 16
      %v3705 = vpop.permute.xlu0 %3704
      %3706 = vrot.lane.b32.xlu0 %v2935, 16
      %v3707 = vpop.permute.xlu0 %3706
      %3708 = vrot.lane.b32.xlu0 %v2936, 16
      %v3709 = vpop.permute.xlu0 %3708
      %3710 = vrot.lane.b32.xlu0 %v2937, 16
      %v3711 = vpop.permute.xlu0 %3710
      %3712 = vrot.lane.b32.xlu0 %v2938, 16
      %v3713 = vpop.permute.xlu0 %3712
      %3714 = vrot.lane.b32.xlu0 %v2939, 16
      %v3715 = vpop.permute.xlu0 %3714
      %3716 = vrot.lane.b32.xlu0 %v2940, 16
      %v3717 = vpop.permute.xlu0 %3716
      %3718 = vrot.lane.b32.xlu0 %v2941, 16
      %v3719 = vpop.permute.xlu0 %3718
      %3750 = vst.msk [vmem:[#allocation2] sm:$0xff] %vm2036, %v1944
      %3751 = vst.msk [vmem:[#allocation2 + $0x8] sm:$0xff] %vm2036, %v1944
      %3752 = vst.msk [vmem:[#allocation2 + $0x10] sm:$0xff] %vm2036, %v3661
      %3753 = vst.msk [vmem:[#allocation2 + $0x18] sm:$0xff] %vm2036, %v3663
      %3754 = vst.msk [vmem:[#allocation2 + $0x20] sm:$0xff] %vm2036, %v3665
      %3755 = vst.msk [vmem:[#allocation2 + $0x28] sm:$0xff] %vm2036, %v3667
      %3756 = vst.msk [vmem:[#allocation2 + $0x30] sm:$0xff] %vm2036, %v3669
      %3757 = vst.msk [vmem:[#allocation2 + $0x38] sm:$0xff] %vm2036, %v3671
      %3758 = vst.msk [vmem:[#allocation2 + $0x40] sm:$0xff] %vm2036, %v3673
      %3759 = vst.msk [vmem:[#allocation2 + $0x48] sm:$0xff] %vm2036, %v3675
      %3760 = vst.msk [vmem:[#allocation2 + $0x50] sm:$0xff] %vm2036, %v3677
      %3761 = vst.msk [vmem:[#allocation2 + $0x58] sm:$0xff] %vm2036, %v3679
      %3762 = vst.msk [vmem:[#allocation2 + $0x60] sm:$0xff] %vm2036, %v3681
      %3763 = vst.msk [vmem:[#allocation2 + $0x68] sm:$0xff] %vm2036, %v3683
      %3764 = vst.msk [vmem:[#allocation2 + $0x70] sm:$0xff] %vm2036, %v3685
      %3765 = vst.msk [vmem:[#allocation2 + $0x78] sm:$0xff] %vm2036, %v3687
      %3766 = vst.msk [vmem:[#allocation2 + $0x80] sm:$0xff] %vm2036, %v3689
      %3767 = vst.msk [vmem:[#allocation2 + $0x88] sm:$0xff] %vm2036, %v3691
      %3768 = vst.msk [vmem:[#allocation2 + $0x90] sm:$0xff] %vm2036, %v3693
      %3769 = vst.msk [vmem:[#allocation2 + $0x98] sm:$0xff] %vm2036, %v3695
      %3770 = vst.msk [vmem:[#allocation2 + $0xa0] sm:$0xff] %vm2036, %v3697
      %3771 = vst.msk [vmem:[#allocation2 + $0xa8] sm:$0xff] %vm2036, %v3699
      %3772 = vst.msk [vmem:[#allocation2 + $0xb0] sm:$0xff] %vm2036, %v3701
      %3773 = vst.msk [vmem:[#allocation2 + $0xb8] sm:$0xff] %vm2036, %v3703
      %3774 = vst.msk [vmem:[#allocation2 + $0xc0] sm:$0xff] %vm2036, %v3705
      %3775 = vst.msk [vmem:[#allocation2 + $0xc8] sm:$0xff] %vm2036, %v3707
      %3776 = vst.msk [vmem:[#allocation2 + $0xd0] sm:$0xff] %vm2036, %v3709
      %3777 = vst.msk [vmem:[#allocation2 + $0xd8] sm:$0xff] %vm2036, %v3711
      %3778 = vst.msk [vmem:[#allocation2 + $0xe0] sm:$0xff] %vm2036, %v3713
      %3779 = vst.msk [vmem:[#allocation2 + $0xe8] sm:$0xff] %vm2036, %v3715
      %3780 = vst.msk [vmem:[#allocation2 + $0xf0] sm:$0xff] %vm2036, %v3717
      %3781 = vst.msk [vmem:[#allocation2 + $0xf8] sm:$0xff] %vm2036, %v3719
      %3784 = vrot.lane.b32.xlu0 %v2912, 40
      %v3785 = vpop.permute.xlu0 %3784
      %3786 = vrot.lane.b32.xlu0 %v2913, 40
      %v3787 = vpop.permute.xlu0 %3786
      %3788 = vrot.lane.b32.xlu0 %v2914, 40
      %v3789 = vpop.permute.xlu0 %3788
      %3790 = vrot.lane.b32.xlu0 %v2915, 40
      %v3791 = vpop.permute.xlu0 %3790
      %3792 = vrot.lane.b32.xlu0 %v2916, 40
      %v3793 = vpop.permute.xlu0 %3792
      %3794 = vrot.lane.b32.xlu0 %v2917, 40
      %v3795 = vpop.permute.xlu0 %3794
      %3796 = vrot.lane.b32.xlu0 %v2918, 40
      %v3797 = vpop.permute.xlu0 %3796
      %3798 = vrot.lane.b32.xlu0 %v2919, 40
      %v3799 = vpop.permute.xlu0 %3798
      %3800 = vrot.lane.b32.xlu0 %v2920, 40
      %v3801 = vpop.permute.xlu0 %3800
      %3802 = vrot.lane.b32.xlu0 %v2921, 40
      %v3803 = vpop.permute.xlu0 %3802
      %3804 = vrot.lane.b32.xlu0 %v2922, 40
      %v3805 = vpop.permute.xlu0 %3804
      %3806 = vrot.lane.b32.xlu0 %v2923, 40
      %v3807 = vpop.permute.xlu0 %3806
      %3808 = vrot.lane.b32.xlu0 %v2924, 40
      %v3809 = vpop.permute.xlu0 %3808
      %3810 = vrot.lane.b32.xlu0 %v2925, 40
      %v3811 = vpop.permute.xlu0 %3810
      %3812 = vrot.lane.b32.xlu0 %v2926, 40
      %v3813 = vpop.permute.xlu0 %3812
      %3814 = vrot.lane.b32.xlu0 %v2927, 40
      %v3815 = vpop.permute.xlu0 %3814
      %3816 = vrot.lane.b32.xlu0 %v2928, 40
      %v3817 = vpop.permute.xlu0 %3816
      %3818 = vrot.lane.b32.xlu0 %v2929, 40
      %v3819 = vpop.permute.xlu0 %3818
      %3820 = vrot.lane.b32.xlu0 %v2930, 40
      %v3821 = vpop.permute.xlu0 %3820
      %3822 = vrot.lane.b32.xlu0 %v2931, 40
      %v3823 = vpop.permute.xlu0 %3822
      %3824 = vrot.lane.b32.xlu0 %v2932, 40
      %v3825 = vpop.permute.xlu0 %3824
      %3826 = vrot.lane.b32.xlu0 %v2933, 40
      %v3827 = vpop.permute.xlu0 %3826
      %3828 = vrot.lane.b32.xlu0 %v2934, 40
      %v3829 = vpop.permute.xlu0 %3828
      %3830 = vrot.lane.b32.xlu0 %v2935, 40
      %v3831 = vpop.permute.xlu0 %3830
      %3832 = vrot.lane.b32.xlu0 %v2936, 40
      %v3833 = vpop.permute.xlu0 %3832
      %3834 = vrot.lane.b32.xlu0 %v2937, 40
      %v3835 = vpop.permute.xlu0 %3834
      %3836 = vrot.lane.b32.xlu0 %v2938, 40
      %v3837 = vpop.permute.xlu0 %3836
      %3838 = vrot.lane.b32.xlu0 %v2939, 40
      %v3839 = vpop.permute.xlu0 %3838
      %3840 = vrot.lane.b32.xlu0 %v2940, 40
      %v3841 = vpop.permute.xlu0 %3840
      %3842 = vrot.lane.b32.xlu0 %v2941, 40
      %v3843 = vpop.permute.xlu0 %3842
      %3844 = vrot.lane.b32.xlu0 %v2942, 40
      %v3845 = vpop.permute.xlu0 %3844
      %3846 = vrot.lane.b32.xlu0 %v2943, 40
      %v3847 = vpop.permute.xlu0 %3846
      %3880 = vst.msk [vmem:[#allocation2] sm:$0xff] %vm2167, %v3785
      %3881 = vst.msk [vmem:[#allocation2 + $0x8] sm:$0xff] %vm2167, %v3787
      %3882 = vst.msk [vmem:[#allocation2 + $0x10] sm:$0xff] %vm2167, %v3789
      %3883 = vst.msk [vmem:[#allocation2 + $0x18] sm:$0xff] %vm2167, %v3791
      %3884 = vst.msk [vmem:[#allocation2 + $0x20] sm:$0xff] %vm2167, %v3793
      %3885 = vst.msk [vmem:[#allocation2 + $0x28] sm:$0xff] %vm2167, %v3795
      %3886 = vst.msk [vmem:[#allocation2 + $0x30] sm:$0xff] %vm2167, %v3797
      %3887 = vst.msk [vmem:[#allocation2 + $0x38] sm:$0xff] %vm2167, %v3799
      %3888 = vst.msk [vmem:[#allocation2 + $0x40] sm:$0xff] %vm2167, %v3801
      %3889 = vst.msk [vmem:[#allocation2 + $0x48] sm:$0xff] %vm2167, %v3803
      %3890 = vst.msk [vmem:[#allocation2 + $0x50] sm:$0xff] %vm2167, %v3805
      %3891 = vst.msk [vmem:[#allocation2 + $0x58] sm:$0xff] %vm2167, %v3807
      %3892 = vst.msk [vmem:[#allocation2 + $0x60] sm:$0xff] %vm2167, %v3809
      %3893 = vst.msk [vmem:[#allocation2 + $0x68] sm:$0xff] %vm2167, %v3811
      %3894 = vst.msk [vmem:[#allocation2 + $0x70] sm:$0xff] %vm2167, %v3813
      %3895 = vst.msk [vmem:[#allocation2 + $0x78] sm:$0xff] %vm2167, %v3815
      %3896 = vst.msk [vmem:[#allocation2 + $0x80] sm:$0xff] %vm2167, %v3817
      %3897 = vst.msk [vmem:[#allocation2 + $0x88] sm:$0xff] %vm2167, %v3819
      %3898 = vst.msk [vmem:[#allocation2 + $0x90] sm:$0xff] %vm2167, %v3821
      %3899 = vst.msk [vmem:[#allocation2 + $0x98] sm:$0xff] %vm2167, %v3823
      %3900 = vst.msk [vmem:[#allocation2 + $0xa0] sm:$0xff] %vm2167, %v3825
      %3901 = vst.msk [vmem:[#allocation2 + $0xa8] sm:$0xff] %vm2167, %v3827
      %3902 = vst.msk [vmem:[#allocation2 + $0xb0] sm:$0xff] %vm2167, %v3829
      %3903 = vst.msk [vmem:[#allocation2 + $0xb8] sm:$0xff] %vm2167, %v3831
      %3904 = vst.msk [vmem:[#allocation2 + $0xc0] sm:$0xff] %vm2167, %v3833
      %3905 = vst.msk [vmem:[#allocation2 + $0xc8] sm:$0xff] %vm2167, %v3835
      %3906 = vst.msk [vmem:[#allocation2 + $0xd0] sm:$0xff] %vm2167, %v3837
      %3907 = vst.msk [vmem:[#allocation2 + $0xd8] sm:$0xff] %vm2167, %v3839
      %3908 = vst.msk [vmem:[#allocation2 + $0xe0] sm:$0xff] %vm2167, %v3841
      %3909 = vst.msk [vmem:[#allocation2 + $0xe8] sm:$0xff] %vm2167, %v3843
      %3910 = vst.msk [vmem:[#allocation2 + $0xf0] sm:$0xff] %vm2167, %v3845
      %3911 = vst.msk [vmem:[#allocation2 + $0xf8] sm:$0xff] %vm2167, %v3847
      %3912 = vrot.lane.b32.xlu0 %v2914, 64
      %v3913 = vpop.permute.xlu0 %3912
      %3914 = vrot.lane.b32.xlu0 %v2915, 64
      %v3915 = vpop.permute.xlu0 %3914
      %3916 = vrot.lane.b32.xlu0 %v2916, 64
      %v3917 = vpop.permute.xlu0 %3916
      %3918 = vrot.lane.b32.xlu0 %v2917, 64
      %v3919 = vpop.permute.xlu0 %3918
      %3920 = vrot.lane.b32.xlu0 %v2918, 64
      %v3921 = vpop.permute.xlu0 %3920
      %3922 = vrot.lane.b32.xlu0 %v2919, 64
      %v3923 = vpop.permute.xlu0 %3922
      %3924 = vrot.lane.b32.xlu0 %v2920, 64
      %v3925 = vpop.permute.xlu0 %3924
      %3926 = vrot.lane.b32.xlu0 %v2921, 64
      %v3927 = vpop.permute.xlu0 %3926
      %3928 = vrot.lane.b32.xlu0 %v2922, 64
      %v3929 = vpop.permute.xlu0 %3928
      %3930 = vrot.lane.b32.xlu0 %v2923, 64
      %v3931 = vpop.permute.xlu0 %3930
      %3932 = vrot.lane.b32.xlu0 %v2924, 64
      %v3933 = vpop.permute.xlu0 %3932
      %3934 = vrot.lane.b32.xlu0 %v2925, 64
      %v3935 = vpop.permute.xlu0 %3934
      %3936 = vrot.lane.b32.xlu0 %v2926, 64
      %v3937 = vpop.permute.xlu0 %3936
      %3938 = vrot.lane.b32.xlu0 %v2927, 64
      %v3939 = vpop.permute.xlu0 %3938
      %3940 = vrot.lane.b32.xlu0 %v2928, 64
      %v3941 = vpop.permute.xlu0 %3940
      %3942 = vrot.lane.b32.xlu0 %v2929, 64
      %v3943 = vpop.permute.xlu0 %3942
      %3944 = vrot.lane.b32.xlu0 %v2930, 64
      %v3945 = vpop.permute.xlu0 %3944
      %3946 = vrot.lane.b32.xlu0 %v2931, 64
      %v3947 = vpop.permute.xlu0 %3946
      %3948 = vrot.lane.b32.xlu0 %v2932, 64
      %v3949 = vpop.permute.xlu0 %3948
      %3950 = vrot.lane.b32.xlu0 %v2933, 64
      %v3951 = vpop.permute.xlu0 %3950
      %3952 = vrot.lane.b32.xlu0 %v2934, 64
      %v3953 = vpop.permute.xlu0 %3952
      %3954 = vrot.lane.b32.xlu0 %v2935, 64
      %v3955 = vpop.permute.xlu0 %3954
      %3956 = vrot.lane.b32.xlu0 %v2936, 64
      %v3957 = vpop.permute.xlu0 %3956
      %3958 = vrot.lane.b32.xlu0 %v2937, 64
      %v3959 = vpop.permute.xlu0 %3958
      %3960 = vrot.lane.b32.xlu0 %v2938, 64
      %v3961 = vpop.permute.xlu0 %3960
      %3962 = vrot.lane.b32.xlu0 %v2939, 64
      %v3963 = vpop.permute.xlu0 %3962
      %3964 = vrot.lane.b32.xlu0 %v2940, 64
      %v3965 = vpop.permute.xlu0 %3964
      %3966 = vrot.lane.b32.xlu0 %v2941, 64
      %v3967 = vpop.permute.xlu0 %3966
      %3968 = vrot.lane.b32.xlu0 %v2942, 64
      %v3969 = vpop.permute.xlu0 %3968
      %3970 = vrot.lane.b32.xlu0 %v2943, 64
      %v3971 = vpop.permute.xlu0 %3970
      %4002 = vst.msk [vmem:[#allocation2] sm:$0xff] %vm2293, %v3913
      %4003 = vst.msk [vmem:[#allocation2 + $0x8] sm:$0xff] %vm2293, %v3915
      %4004 = vst.msk [vmem:[#allocation2 + $0x10] sm:$0xff] %vm2293, %v3917
      %4005 = vst.msk [vmem:[#allocation2 + $0x18] sm:$0xff] %vm2293, %v3919
      %4006 = vst.msk [vmem:[#allocation2 + $0x20] sm:$0xff] %vm2293, %v3921
      %4007 = vst.msk [vmem:[#allocation2 + $0x28] sm:$0xff] %vm2293, %v3923
      %4008 = vst.msk [vmem:[#allocation2 + $0x30] sm:$0xff] %vm2293, %v3925
      %4009 = vst.msk [vmem:[#allocation2 + $0x38] sm:$0xff] %vm2293, %v3927
      %4010 = vst.msk [vmem:[#allocation2 + $0x40] sm:$0xff] %vm2293, %v3929
      %4011 = vst.msk [vmem:[#allocation2 + $0x48] sm:$0xff] %vm2293, %v3931
      %4012 = vst.msk [vmem:[#allocation2 + $0x50] sm:$0xff] %vm2293, %v3933
      %4013 = vst.msk [vmem:[#allocation2 + $0x58] sm:$0xff] %vm2293, %v3935
      %4014 = vst.msk [vmem:[#allocation2 + $0x60] sm:$0xff] %vm2293, %v3937
      %4015 = vst.msk [vmem:[#allocation2 + $0x68] sm:$0xff] %vm2293, %v3939
      %4016 = vst.msk [vmem:[#allocation2 + $0x70] sm:$0xff] %vm2293, %v3941
      %4017 = vst.msk [vmem:[#allocation2 + $0x78] sm:$0xff] %vm2293, %v3943
      %4018 = vst.msk [vmem:[#allocation2 + $0x80] sm:$0xff] %vm2293, %v3945
      %4019 = vst.msk [vmem:[#allocation2 + $0x88] sm:$0xff] %vm2293, %v3947
      %4020 = vst.msk [vmem:[#allocation2 + $0x90] sm:$0xff] %vm2293, %v3949
      %4021 = vst.msk [vmem:[#allocation2 + $0x98] sm:$0xff] %vm2293, %v3951
      %4022 = vst.msk [vmem:[#allocation2 + $0xa0] sm:$0xff] %vm2293, %v3953
      %4023 = vst.msk [vmem:[#allocation2 + $0xa8] sm:$0xff] %vm2293, %v3955
      %4024 = vst.msk [vmem:[#allocation2 + $0xb0] sm:$0xff] %vm2293, %v3957
      %4025 = vst.msk [vmem:[#allocation2 + $0xb8] sm:$0xff] %vm2293, %v3959
      %4026 = vst.msk [vmem:[#allocation2 + $0xc0] sm:$0xff] %vm2293, %v3961
      %4027 = vst.msk [vmem:[#allocation2 + $0xc8] sm:$0xff] %vm2293, %v3963
      %4028 = vst.msk [vmem:[#allocation2 + $0xd0] sm:$0xff] %vm2293, %v3965
      %4029 = vst.msk [vmem:[#allocation2 + $0xd8] sm:$0xff] %vm2293, %v3967
      %4030 = vst.msk [vmem:[#allocation2 + $0xe0] sm:$0xff] %vm2293, %v3969
      %4031 = vst.msk [vmem:[#allocation2 + $0xe8] sm:$0xff] %vm2293, %v3971
      %4032 = vst.msk [vmem:[#allocation2 + $0xf0] sm:$0xff] %vm2293, %v2261
      %4033 = vst.msk [vmem:[#allocation2 + $0xf8] sm:$0xff] %vm2293, %v2261
      %v4034 = vld [vmem:[#allocation2] sm:$0xff]
      %v4035 = vld [vmem:[#allocation2 + $0x8] sm:$0xff]
      %v4036 = vld [vmem:[#allocation2 + $0x10] sm:$0xff]
      %v4037 = vld [vmem:[#allocation2 + $0x18] sm:$0xff]
      %v4038 = vld [vmem:[#allocation2 + $0x20] sm:$0xff]
      %v4039 = vld [vmem:[#allocation2 + $0x28] sm:$0xff]
      %v4040 = vld [vmem:[#allocation2 + $0x30] sm:$0xff]
      %v4041 = vld [vmem:[#allocation2 + $0x38] sm:$0xff]
      %v4042 = vld [vmem:[#allocation2 + $0x40] sm:$0xff]
      %v4043 = vld [vmem:[#allocation2 + $0x48] sm:$0xff]
      %v4044 = vld [vmem:[#allocation2 + $0x50] sm:$0xff]
      %v4045 = vld [vmem:[#allocation2 + $0x58] sm:$0xff]
      %v4046 = vld [vmem:[#allocation2 + $0x60] sm:$0xff]
      %v4047 = vld [vmem:[#allocation2 + $0x68] sm:$0xff]
      %v4048 = vld [vmem:[#allocation2 + $0x70] sm:$0xff]
      %v4049 = vld [vmem:[#allocation2 + $0x78] sm:$0xff]
      %v4050 = vld [vmem:[#allocation2 + $0x80] sm:$0xff]
      %v4051 = vld [vmem:[#allocation2 + $0x88] sm:$0xff]
      %v4052 = vld [vmem:[#allocation2 + $0x90] sm:$0xff]
      %v4053 = vld [vmem:[#allocation2 + $0x98] sm:$0xff]
      %v4054 = vld [vmem:[#allocation2 + $0xa0] sm:$0xff]
      %v4055 = vld [vmem:[#allocation2 + $0xa8] sm:$0xff]
      %v4056 = vld [vmem:[#allocation2 + $0xb0] sm:$0xff]
      %v4057 = vld [vmem:[#allocation2 + $0xb8] sm:$0xff]
      %v4058 = vld [vmem:[#allocation2 + $0xc0] sm:$0xff]
      %v4059 = vld [vmem:[#allocation2 + $0xc8] sm:$0xff]
      %v4060 = vld [vmem:[#allocation2 + $0xd0] sm:$0xff]
      %v4061 = vld [vmem:[#allocation2 + $0xd8] sm:$0xff]
      %v4062 = vld [vmem:[#allocation2 + $0xe0] sm:$0xff]
      %v4063 = vld [vmem:[#allocation2 + $0xe8] sm:$0xff]
      %v4064 = vld [vmem:[#allocation2 + $0xf0] sm:$0xff]
      %v4065 = vld [vmem:[#allocation2 + $0xf8] sm:$0xff]
      %v4066 = vpack.c.bf16 %v4035, %v4034
      %v4067 = vpack.c.bf16 %v4037, %v4036
      %v4068 = vpack.c.bf16 %v4039, %v4038
      %v4069 = vpack.c.bf16 %v4041, %v4040
      %v4070 = vpack.c.bf16 %v4043, %v4042
      %v4071 = vpack.c.bf16 %v4045, %v4044
      %v4072 = vpack.c.bf16 %v4047, %v4046
      %v4073 = vpack.c.bf16 %v4049, %v4048
      %v4074 = vpack.c.bf16 %v4051, %v4050
      %v4075 = vpack.c.bf16 %v4053, %v4052
      %v4076 = vpack.c.bf16 %v4055, %v4054
      %v4077 = vpack.c.bf16 %v4057, %v4056
      %v4078 = vpack.c.bf16 %v4059, %v4058
      %v4079 = vpack.c.bf16 %v4061, %v4060
      %v4080 = vpack.c.bf16 %v4063, %v4062
      %v4081 = vpack.c.bf16 %v4065, %v4064
      %v4082 = vld [vmem:[%s4] sm:$0xf]
      %v4083 = vld [vmem:[%s4 + $0x4] sm:$0xf]
      %v4084 = vld [vmem:[%s4 + $0x8] sm:$0xf]
      %v4085 = vld [vmem:[%s4 + $0xc] sm:$0xf]
      %v4086 = vld [vmem:[%s4 + $0x10] sm:$0xf]
      %v4087 = vld [vmem:[%s4 + $0x14] sm:$0xf]
      %v4088 = vld [vmem:[%s4 + $0x18] sm:$0xf]
      %v4089 = vld [vmem:[%s4 + $0x1c] sm:$0xf]
      %v4090 = vld [vmem:[%s4 + $0x20] sm:$0xf]
      %v4100 = vunpack.c.l.b16 %v4082
      %v4101 = vunpack.c.l.b16 %v4083
      %v4102 = vunpack.c.l.b16 %v4084
      %v4103 = vunpack.c.l.b16 %v4085
      %v4104 = vunpack.c.l.b16 %v4086
      %v4105 = vunpack.c.l.b16 %v4087
      %v4106 = vunpack.c.l.b16 %v4088
      %v4107 = vunpack.c.l.b16 %v4089
      %v4108 = vunpack.c.l.b16 %v4090
      %v4109 = vpack.c.b16 %v4101, %v4100
      %v4110 = vpack.c.b16 %v4103, %v4102
      %v4111 = vpack.c.b16 %v4105, %v4104
      %v4112 = vpack.c.b16 %v4107, %v4106
      %v4113 = vpack.c.b16 %v4108, %v4108
      %v4119 = vsel %vm2410, %v4066, 0
      %v4122 = vsel %vm2410, %v4067, 0
      %v4125 = vsel %vm2410, %v4068, 0
      %v4128 = vsel %vm2410, %v4069, 0
      %v4131 = vsel %vm2410, %v4070, 0
      %v4134 = vsel %vm2410, %v4071, 0
      %v4137 = vsel %vm2410, %v4072, 0
      %v4140 = vsel %vm2410, %v4073, 0
      %v4143 = vsel %vm2410, %v4074, 0
      %v4146 = vsel %vm2410, %v4075, 0
      %v4149 = vsel %vm2410, %v4076, 0
      %v4152 = vsel %vm2410, %v4077, 0
      %v4155 = vsel %vm2410, %v4078, 0
      %v4158 = vsel %vm2410, %v4079, 0
      %v4161 = vsel %vm2410, %v4080, 0
      %v4164 = vsel %vm2410, %v4081, 0
      %v4167 = vsel %vm2459, %v4113, 0
      %4169 = vmatpush.bf16.msra.mxu0 0
      %4170 = vmatpush.bf16.msra.mxu0 0
      %4171 = vmatpush.bf16.msra.mxu0 0
      %4172 = vmatpush.bf16.msra.mxu0 %v4167
      %4173 = vmatpush.bf16.msra.mxu0 %v4112
      %4174 = vmatpush.bf16.msra.mxu0 %v4111
      %4175 = vmatpush.bf16.msra.mxu0 %v4110
      %4176 = vmatpush.bf16.msra.mxu0 %v4109
      %4177 = vmatmul.bf16.gmra.mxu0 %v4119
      %v4178 = vpop.f32.mrf.mxu0
      %v4179 = vadd.f32 0.0, %v4178
      %v4180 = vpop.f32.mrf.mxu0
      %v4181 = vadd.f32 0.0, %v4180
      %4182 = vmatmul.bf16.gmra.mxu0 %v4122
      %v4183 = vpop.f32.mrf.mxu0
      %v4184 = vadd.f32 0.0, %v4183
      %v4185 = vpop.f32.mrf.mxu0
      %v4186 = vadd.f32 0.0, %v4185
      %4187 = vmatmul.bf16.gmra.mxu0 %v4125
      %v4188 = vpop.f32.mrf.mxu0
      %v4189 = vadd.f32 0.0, %v4188
      %v4190 = vpop.f32.mrf.mxu0
      %v4191 = vadd.f32 0.0, %v4190
      %4192 = vmatmul.bf16.gmra.mxu0 %v4128
      %v4193 = vpop.f32.mrf.mxu0
      %v4194 = vadd.f32 0.0, %v4193
      %v4195 = vpop.f32.mrf.mxu0
      %v4196 = vadd.f32 0.0, %v4195
      %4197 = vmatmul.bf16.gmra.mxu0 %v4131
      %v4198 = vpop.f32.mrf.mxu0
      %v4199 = vadd.f32 0.0, %v4198
      %v4200 = vpop.f32.mrf.mxu0
      %v4201 = vadd.f32 0.0, %v4200
      %4202 = vmatmul.bf16.gmra.mxu0 %v4134
      %v4203 = vpop.f32.mrf.mxu0
      %v4204 = vadd.f32 0.0, %v4203
      %v4205 = vpop.f32.mrf.mxu0
      %v4206 = vadd.f32 0.0, %v4205
      %4207 = vmatmul.bf16.gmra.mxu0 %v4137
      %v4208 = vpop.f32.mrf.mxu0
      %v4209 = vadd.f32 0.0, %v4208
      %v4210 = vpop.f32.mrf.mxu0
      %v4211 = vadd.f32 0.0, %v4210
      %4212 = vmatmul.bf16.gmra.mxu0 %v4140
      %v4213 = vpop.f32.mrf.mxu0
      %v4214 = vadd.f32 0.0, %v4213
      %v4215 = vpop.f32.mrf.mxu0
      %v4216 = vadd.f32 0.0, %v4215
      %4217 = vmatmul.bf16.gmra.mxu0 %v4143
      %v4218 = vpop.f32.mrf.mxu0
      %v4219 = vadd.f32 0.0, %v4218
      %v4220 = vpop.f32.mrf.mxu0
      %v4221 = vadd.f32 0.0, %v4220
      %4222 = vmatmul.bf16.gmra.mxu0 %v4146
      %v4223 = vpop.f32.mrf.mxu0
      %v4224 = vadd.f32 0.0, %v4223
      %v4225 = vpop.f32.mrf.mxu0
      %v4226 = vadd.f32 0.0, %v4225
      %4227 = vmatmul.bf16.gmra.mxu0 %v4149
      %v4228 = vpop.f32.mrf.mxu0
      %v4229 = vadd.f32 0.0, %v4228
      %v4230 = vpop.f32.mrf.mxu0
      %v4231 = vadd.f32 0.0, %v4230
      %4232 = vmatmul.bf16.gmra.mxu0 %v4152
      %v4233 = vpop.f32.mrf.mxu0
      %v4234 = vadd.f32 0.0, %v4233
      %v4235 = vpop.f32.mrf.mxu0
      %v4236 = vadd.f32 0.0, %v4235
      %4237 = vmatmul.bf16.gmra.mxu0 %v4155
      %v4238 = vpop.f32.mrf.mxu0
      %v4239 = vadd.f32 0.0, %v4238
      %v4240 = vpop.f32.mrf.mxu0
      %v4241 = vadd.f32 0.0, %v4240
      %4242 = vmatmul.bf16.gmra.mxu0 %v4158
      %v4243 = vpop.f32.mrf.mxu0
      %v4244 = vadd.f32 0.0, %v4243
      %v4245 = vpop.f32.mrf.mxu0
      %v4246 = vadd.f32 0.0, %v4245
      %4247 = vmatmul.bf16.gmra.mxu0 %v4161
      %v4248 = vpop.f32.mrf.mxu0
      %v4249 = vadd.f32 0.0, %v4248
      %v4250 = vpop.f32.mrf.mxu0
      %v4251 = vadd.f32 0.0, %v4250
      %4252 = vmatmul.bf16.gmra.mxu0 %v4164
      %v4253 = vpop.f32.mrf.mxu0
      %v4254 = vadd.f32 0.0, %v4253
      %v4255 = vpop.f32.mrf.mxu0
      %v4256 = vadd.f32 0.0, %v4255
      %4257 = vdwg.mxu0
      %v4258 = vld [vmem:[%s5] sm:$0x1]
      %v4260 = vperm.slane %v4258, 0
      %v4262 = vmul.f32 %v4179, %v4260
      %v4263 = vmul.f32 %v4181, %v4260
      %v4264 = vmul.f32 %v4184, %v4260
      %v4265 = vmul.f32 %v4186, %v4260
      %v4266 = vmul.f32 %v4189, %v4260
      %v4267 = vmul.f32 %v4191, %v4260
      %v4268 = vmul.f32 %v4194, %v4260
      %v4269 = vmul.f32 %v4196, %v4260
      %v4270 = vmul.f32 %v4199, %v4260
      %v4271 = vmul.f32 %v4201, %v4260
      %v4272 = vmul.f32 %v4204, %v4260
      %v4273 = vmul.f32 %v4206, %v4260
      %v4274 = vmul.f32 %v4209, %v4260
      %v4275 = vmul.f32 %v4211, %v4260
      %v4276 = vmul.f32 %v4214, %v4260
      %v4277 = vmul.f32 %v4216, %v4260
      %v4278 = vmul.f32 %v4219, %v4260
      %v4279 = vmul.f32 %v4221, %v4260
      %v4280 = vmul.f32 %v4224, %v4260
      %v4281 = vmul.f32 %v4226, %v4260
      %v4282 = vmul.f32 %v4229, %v4260
      %v4283 = vmul.f32 %v4231, %v4260
      %v4284 = vmul.f32 %v4234, %v4260
      %v4285 = vmul.f32 %v4236, %v4260
      %v4286 = vmul.f32 %v4239, %v4260
      %v4287 = vmul.f32 %v4241, %v4260
      %v4288 = vmul.f32 %v4244, %v4260
      %v4289 = vmul.f32 %v4246, %v4260
      %v4290 = vmul.f32 %v4249, %v4260
      %v4291 = vmul.f32 %v4251, %v4260
      %v4292 = vmul.f32 %v4254, %v4260
      %v4293 = vmul.f32 %v4256, %v4260
      %v4294 = vld [vmem:[%s6] sm:$0x1]
      %v4296 = vperm.slane %v4294, 0
      %v4298 = vadd.f32 %v4262, %v4296
      %v4299 = vadd.f32 %v4263, %v4296
      %v4300 = vadd.f32 %v4264, %v4296
      %v4301 = vadd.f32 %v4265, %v4296
      %v4302 = vadd.f32 %v4266, %v4296
      %v4303 = vadd.f32 %v4267, %v4296
      %v4304 = vadd.f32 %v4268, %v4296
      %v4305 = vadd.f32 %v4269, %v4296
      %v4306 = vadd.f32 %v4270, %v4296
      %v4307 = vadd.f32 %v4271, %v4296
      %v4308 = vadd.f32 %v4272, %v4296
      %v4309 = vadd.f32 %v4273, %v4296
      %v4310 = vadd.f32 %v4274, %v4296
      %v4311 = vadd.f32 %v4275, %v4296
      %v4312 = vadd.f32 %v4276, %v4296
      %v4313 = vadd.f32 %v4277, %v4296
      %v4314 = vadd.f32 %v4278, %v4296
      %v4315 = vadd.f32 %v4279, %v4296
      %v4316 = vadd.f32 %v4280, %v4296
      %v4317 = vadd.f32 %v4281, %v4296
      %v4318 = vadd.f32 %v4282, %v4296
      %v4319 = vadd.f32 %v4283, %v4296
      %v4320 = vadd.f32 %v4284, %v4296
      %v4321 = vadd.f32 %v4285, %v4296
      %v4322 = vadd.f32 %v4286, %v4296
      %v4323 = vadd.f32 %v4287, %v4296
      %v4324 = vadd.f32 %v4288, %v4296
      %v4325 = vadd.f32 %v4289, %v4296
      %v4326 = vadd.f32 %v4290, %v4296
      %v4327 = vadd.f32 %v4291, %v4296
      %v4328 = vadd.f32 %v4292, %v4296
      %v4329 = vadd.f32 %v4293, %v4296
      %v4330 = vadd.f32 %v4298, %v280
      %v4331 = vadd.f32 %v4299, %v281
      %v4332 = vadd.f32 %v4300, %v282
      %v4333 = vadd.f32 %v4301, %v283
      %v4334 = vadd.f32 %v4302, %v284
      %v4335 = vadd.f32 %v4303, %v285
      %v4336 = vadd.f32 %v4304, %v286
      %v4337 = vadd.f32 %v4305, %v287
      %v4338 = vadd.f32 %v4306, %v288
      %v4339 = vadd.f32 %v4307, %v289
      %v4340 = vadd.f32 %v4308, %v290
      %v4341 = vadd.f32 %v4309, %v291
      %v4342 = vadd.f32 %v4310, %v292
      %v4343 = vadd.f32 %v4311, %v293
      %v4344 = vadd.f32 %v4312, %v294
      %v4345 = vadd.f32 %v4313, %v295
      %v4346 = vadd.f32 %v4314, %v296
      %v4347 = vadd.f32 %v4315, %v297
      %v4348 = vadd.f32 %v4316, %v298
      %v4349 = vadd.f32 %v4317, %v299
      %v4350 = vadd.f32 %v4318, %v300
      %v4351 = vadd.f32 %v4319, %v301
      %v4352 = vadd.f32 %v4320, %v302
      %v4353 = vadd.f32 %v4321, %v303
      %v4354 = vadd.f32 %v4322, %v304
      %v4355 = vadd.f32 %v4323, %v305
      %v4356 = vadd.f32 %v4324, %v306
      %v4357 = vadd.f32 %v4325, %v307
      %v4358 = vadd.f32 %v4326, %v308
      %v4359 = vadd.f32 %v4327, %v309
      %v4360 = vadd.f32 %v4328, %v310
      %v4361 = vadd.f32 %v4329, %v311
      %v4362 = vmax.f32 %v4330, 0.0
      %v4363 = vmax.f32 %v4331, 0.0
      %v4364 = vmax.f32 %v4332, 0.0
      %v4365 = vmax.f32 %v4333, 0.0
      %v4366 = vmax.f32 %v4334, 0.0
      %v4367 = vmax.f32 %v4335, 0.0
      %v4368 = vmax.f32 %v4336, 0.0
      %v4369 = vmax.f32 %v4337, 0.0
      %v4370 = vmax.f32 %v4338, 0.0
      %v4371 = vmax.f32 %v4339, 0.0
      %v4372 = vmax.f32 %v4340, 0.0
      %v4373 = vmax.f32 %v4341, 0.0
      %v4374 = vmax.f32 %v4342, 0.0
      %v4375 = vmax.f32 %v4343, 0.0
      %v4376 = vmax.f32 %v4344, 0.0
      %v4377 = vmax.f32 %v4345, 0.0
      %v4378 = vmax.f32 %v4346, 0.0
      %v4379 = vmax.f32 %v4347, 0.0
      %v4380 = vmax.f32 %v4348, 0.0
      %v4381 = vmax.f32 %v4349, 0.0
      %v4382 = vmax.f32 %v4350, 0.0
      %v4383 = vmax.f32 %v4351, 0.0
      %v4384 = vmax.f32 %v4352, 0.0
      %v4385 = vmax.f32 %v4353, 0.0
      %v4386 = vmax.f32 %v4354, 0.0
      %v4387 = vmax.f32 %v4355, 0.0
      %v4388 = vmax.f32 %v4356, 0.0
      %v4389 = vmax.f32 %v4357, 0.0
      %v4390 = vmax.f32 %v4358, 0.0
      %v4391 = vmax.f32 %v4359, 0.0
      %v4392 = vmax.f32 %v4360, 0.0
      %v4393 = vmax.f32 %v4361, 0.0
      %4394 = vst.msk [vmem:[%s278] sm:$0xff] %vm1211, %v4362
      %4395 = vst.msk [vmem:[%s278 + $0x8] sm:$0xff] %vm1211, %v4363
      %4396 = vst.msk [vmem:[%s278 + $0x10] sm:$0xff] %vm1211, %v4364
      %4397 = vst.msk [vmem:[%s278 + $0x18] sm:$0xff] %vm1211, %v4365
      %4398 = vst.msk [vmem:[%s278 + $0x20] sm:$0xff] %vm1211, %v4366
      %4399 = vst.msk [vmem:[%s278 + $0x28] sm:$0xff] %vm1211, %v4367
      %4400 = vst.msk [vmem:[%s278 + $0x30] sm:$0xff] %vm1211, %v4368
      %4401 = vst.msk [vmem:[%s278 + $0x38] sm:$0xff] %vm1211, %v4369
      %4402 = vst.msk [vmem:[%s278 + $0x40] sm:$0xff] %vm1211, %v4370
      %4403 = vst.msk [vmem:[%s278 + $0x48] sm:$0xff] %vm1211, %v4371
      %4404 = vst.msk [vmem:[%s278 + $0x50] sm:$0xff] %vm1211, %v4372
      %4405 = vst.msk [vmem:[%s278 + $0x58] sm:$0xff] %vm1211, %v4373
      %4406 = vst.msk [vmem:[%s278 + $0x60] sm:$0xff] %vm1211, %v4374
      %4407 = vst.msk [vmem:[%s278 + $0x68] sm:$0xff] %vm1211, %v4375
      %4408 = vst.msk [vmem:[%s278 + $0x70] sm:$0xff] %vm1211, %v4376
      %4409 = vst.msk [vmem:[%s278 + $0x78] sm:$0xff] %vm1211, %v4377
      %4410 = vst.msk [vmem:[%s278 + $0x80] sm:$0xff] %vm1211, %v4378
      %4411 = vst.msk [vmem:[%s278 + $0x88] sm:$0xff] %vm1211, %v4379
      %4412 = vst.msk [vmem:[%s278 + $0x90] sm:$0xff] %vm1211, %v4380
      %4413 = vst.msk [vmem:[%s278 + $0x98] sm:$0xff] %vm1211, %v4381
      %4414 = vst.msk [vmem:[%s278 + $0xa0] sm:$0xff] %vm1211, %v4382
      %4415 = vst.msk [vmem:[%s278 + $0xa8] sm:$0xff] %vm1211, %v4383
      %4416 = vst.msk [vmem:[%s278 + $0xb0] sm:$0xff] %vm1211, %v4384
      %4417 = vst.msk [vmem:[%s278 + $0xb8] sm:$0xff] %vm1211, %v4385
      %4418 = vst.msk [vmem:[%s278 + $0xc0] sm:$0xff] %vm1211, %v4386
      %4419 = vst.msk [vmem:[%s278 + $0xc8] sm:$0xff] %vm1211, %v4387
      %4420 = vst.msk [vmem:[%s278 + $0xd0] sm:$0xff] %vm1211, %v4388
      %4421 = vst.msk [vmem:[%s278 + $0xd8] sm:$0xff] %vm1211, %v4389
      %4422 = vst.msk [vmem:[%s278 + $0xe0] sm:$0xff] %vm1211, %v4390
      %4423 = vst.msk [vmem:[%s278 + $0xe8] sm:$0xff] %vm1211, %v4391
      %4424 = vst.msk [vmem:[%s278 + $0xf0] sm:$0xff] %vm1211, %v4392
      %4425 = vst.msk [vmem:[%s278 + $0xf8] sm:$0xff] %vm1211, %v4393
      %p4426 = scmp.lt.s32.totalorder %s18, 1
      %s4427 = scalar_select %p4426, %s18, 1
      %s4428 = smul.addr %s4427, 32
      %s4429 = smul.addr %s4428, 8
      %s4430 = scalar_lea.vmem %s7, %s4429
      // Predicated region
      $region49: #{tpu_custom_call.1} parent=47 // pred_check
        %p4431 = pneg %p188
      $region50: #{tpu_custom_call.1} parent=47 // pred_check_branch
        %4433 = sbr.rel (%p4431) target = $region52
      $region51: #{tpu_custom_call.1} parent=47 // pred_region
        _
      $region52: #{tpu_custom_call.1} parent=47 // pred_fallthru
        _
    $region48: #{tpu_custom_call.1} parent=5 // pred_fallthru
      _
    %p4434 = scmp.le.s32.totalorder 2, %s13
    // Predicated region
    $region53: #{tpu_custom_call.1} parent=5 // pred_check
      %p4435 = pneg %p4434
    $region54: #{tpu_custom_call.1} parent=5 // pred_check_branch
      %4437 = sbr.rel (%p4435) target = $region56
    $region55: #{tpu_custom_call.1} parent=5 // pred_region
      %s4438 = ssub.s32 %s13, 2
      // Predicated region
      $region57: #{tpu_custom_call.1} parent=55 // pred_check
        %p4439 = pneg %p194
      $region58: #{tpu_custom_call.1} parent=55 // pred_check_branch
        %4441 = sbr.rel (%p4439) target = $region60
      $region59: #{tpu_custom_call.1} parent=55 // pred_region
        %p4442 = scmp.lt.s32.totalorder %s19, 1
        %s4443 = scalar_select %p4442, %s19, 1
        %s4444 = smul.addr %s4443, 32
        %s4445 = smul.addr %s4444, 8
        %s4446 = scalar_lea.vmem %s7, %s4445
      $region60: #{tpu_custom_call.1} parent=55 // pred_fallthru
        _
    $region56: #{tpu_custom_call.1} parent=5 // pred_fallthru
      _
  $region6: #{tpu_custom_call.1} parent=0 // loop_footer
    %s17 = sadd.s32 1, %s13
  $region7: #{tpu_custom_call.1} parent=0 // loop_footer_branch
    %12 = sbr.rel target = $region3
  $region8: #{tpu_custom_call.1} parent=0 // loop_exit
    _

</llo_original>
